<compile_context>
chip_gen: v7x
topology: tpu7x:2x2x1
jax: 0.10.0
libtpu: 0.0.40
codegen_flags: <defaults>
</compile_context>

<pallas_src>
import functools

import jax
import jax.numpy as jnp
from jax.experimental import pallas as pl
from jax.experimental.pallas import tpu as pltpu


def _round_up(x, m):
    return (x + m - 1) // m * m


def _apply_act(y, activation):
    if activation == "relu":
        return jnp.maximum(y, 0.0)
    if activation == "swish":
        return y * jax.nn.sigmoid(y)
    return y


# ----------------------------------------------------------------------------
# Pallas kernels
# ----------------------------------------------------------------------------
def _mm_kernel_1k(x_ref, w_ref, scale_ref, shift_ref, o_ref, *, activation):
    """Single-K-step matmul: no accumulator scratch, no init/finalize phases."""
    y = jnp.dot(x_ref[...], w_ref[...], preferred_element_type=jnp.float32)
    y = y * scale_ref[...] + shift_ref[...]
    y = _apply_act(y, activation)
    o_ref[...] = y.astype(o_ref.dtype)


def _mm_kernel_acc(x_ref, w_ref, scale_ref, shift_ref, o_ref, acc_ref, *, activation):
    """K-tiled fallback with f32 accumulator (only used for very large K)."""
    k = pl.program_id(2)

    @pl.when(k == 0)
    def _():
        acc_ref[...] = jnp.zeros_like(acc_ref)

    acc_ref[...] += jnp.dot(x_ref[...], w_ref[...], preferred_element_type=jnp.float32)

    @pl.when(k == pl.num_programs(2) - 1)
    def _():
        y = acc_ref[...] * scale_ref[...] + shift_ref[...]
        y = _apply_act(y, activation)
        o_ref[...] = y.astype(o_ref.dtype)


def _mm2_kernel(x_ref, w1_ref, s1_ref, h1_ref, w2_ref, s2_ref, h2_ref, o_ref, *, act1, act2):
    """Chained matmul: act1((x@w1)*s1+h1) stays resident, then (@w2)*s2+h2 -> act2."""
    y = jnp.dot(x_ref[...], w1_ref[...], preferred_element_type=jnp.float32)
    y = _apply_act(y * s1_ref[...] + h1_ref[...], act1)
    z = jnp.dot(y.astype(jnp.bfloat16), w2_ref[...], preferred_element_type=jnp.float32)
    z = _apply_act(z * s2_ref[...] + h2_ref[...], act2)
    o_ref[...] = z.astype(o_ref.dtype)


# ----------------------------------------------------------------------------
# Pallas matmul wrappers: y = act((x @ w) * scale + shift)
#   * bf16 MXU inputs, f32 accumulation and epilogue
#   * M padded only to x16 (if needed), K left unpadded (full-extent block),
#     N padded to a 128 multiple so output stores stay lane-dense
#   * 256-wide N tiles when possible (feeds the 256x256 MXU on v6e/v7x)
# ----------------------------------------------------------------------------
_MAX_SINGLE_K = 4096


def _pick_bm(mp):
    return mp if mp <= 512 else 512


def matmul_scale_shift_act(x, w, scale, shift, activation="none", out_dtype=jnp.bfloat16):
    M, K = x.shape
    _, N = w.shape
    x = x.astype(jnp.bfloat16)
    w = w.astype(jnp.bfloat16)
    scale = scale.astype(jnp.float32).reshape(1, N)
    shift = shift.astype(jnp.float32).reshape(1, N)

    Mp = _round_up(M, 16)
    if Mp != M:
        x = jnp.pad(x, ((0, Mp - M), (0, 0)))
    Np = _round_up(N, 128)
    if Np != N:
        w = jnp.pad(w, ((0, 0), (0, Np - N)))
        scale = jnp.pad(scale, ((0, 0), (0, Np - N)))
        shift = jnp.pad(shift, ((0, 0), (0, Np - N)))

    bm = _pick_bm(Mp)
    if Mp % bm:
        pad = _round_up(Mp, bm) - Mp
        x = jnp.pad(x, ((0, pad), (0, 0)))
        Mp += pad
    bn = 256 if Np % 256 == 0 else 128

    if K <= _MAX_SINGLE_K:
        grid = (Mp // bm, Np // bn)
        out = pl.pallas_call(
            functools.partial(_mm_kernel_1k, activation=activation),
            out_shape=jax.ShapeDtypeStruct((Mp, Np), out_dtype),
            grid_spec=pltpu.PrefetchScalarGridSpec(
                num_scalar_prefetch=0,
                grid=grid,
                in_specs=[
                    pl.BlockSpec((bm, K), lambda i, j: (i, 0)),
                    pl.BlockSpec((K, bn), lambda i, j: (0, j)),
                    pl.BlockSpec((1, bn), lambda i, j: (0, j)),
                    pl.BlockSpec((1, bn), lambda i, j: (0, j)),
                ],
                out_specs=pl.BlockSpec((bm, bn), lambda i, j: (i, j)),
            ),
            compiler_params=pltpu.CompilerParams(
                dimension_semantics=("parallel", "parallel")),
        )(x, w, scale, shift)
    else:
        bk = 1024
        Kp = _round_up(K, bk)
        x = jnp.pad(x, ((0, 0), (0, Kp - K)))
        w = jnp.pad(w, ((0, Kp - K), (0, 0)))
        grid = (Mp // bm, Np // bn, Kp // bk)
        out = pl.pallas_call(
            functools.partial(_mm_kernel_acc, activation=activation),
            out_shape=jax.ShapeDtypeStruct((Mp, Np), out_dtype),
            grid_spec=pltpu.PrefetchScalarGridSpec(
                num_scalar_prefetch=0,
                grid=grid,
                in_specs=[
                    pl.BlockSpec((bm, bk), lambda i, j, k: (i, k)),
                    pl.BlockSpec((bk, bn), lambda i, j, k: (k, j)),
                    pl.BlockSpec((1, bn), lambda i, j, k: (0, j)),
                    pl.BlockSpec((1, bn), lambda i, j, k: (0, j)),
                ],
                out_specs=pl.BlockSpec((bm, bn), lambda i, j, k: (i, j)),
                scratch_shapes=[pltpu.VMEM((bm, bn), jnp.float32)],
            ),
            compiler_params=pltpu.CompilerParams(
                dimension_semantics=("parallel", "parallel", "arbitrary")),
        )(x, w, scale, shift)
    return out[:M, :N]


def matmul2_scale_shift_act(x, p1, act1, p2, act2, out_dtype=jnp.bfloat16):
    """Two chained matmuls (conv + following 1x1 conv) in one pallas_call."""
    M, K = x.shape
    n1 = p1["w"].shape[-1]
    n2 = p2["w"].shape[-1]
    x = x.astype(jnp.bfloat16)
    w1 = p1["w"].reshape(-1, n1).astype(jnp.bfloat16)
    s1 = p1["scale"].astype(jnp.float32).reshape(1, n1)
    h1 = p1["shift"].astype(jnp.float32).reshape(1, n1)
    w2 = p2["w"].reshape(n1, n2).astype(jnp.bfloat16)
    s2 = p2["scale"].astype(jnp.float32).reshape(1, n2)
    h2 = p2["shift"].astype(jnp.float32).reshape(1, n2)

    Mp = _round_up(M, 16)
    if Mp != M:
        x = jnp.pad(x, ((0, Mp - M), (0, 0)))
    N1p = _round_up(n1, 128)
    if N1p != n1:
        w1 = jnp.pad(w1, ((0, 0), (0, N1p - n1)))
        s1 = jnp.pad(s1, ((0, 0), (0, N1p - n1)))
        h1 = jnp.pad(h1, ((0, 0), (0, N1p - n1)))
        w2 = jnp.pad(w2, ((0, N1p - n1), (0, 0)))
    N2p = _round_up(n2, 128)
    if N2p != n2:
        w2 = jnp.pad(w2, ((0, 0), (0, N2p - n2)))
        s2 = jnp.pad(s2, ((0, 0), (0, N2p - n2)))
        h2 = jnp.pad(h2, ((0, 0), (0, N2p - n2)))

    bm = _pick_bm(Mp)
    if Mp % bm:
        pad = _round_up(Mp, bm) - Mp
        x = jnp.pad(x, ((0, pad), (0, 0)))
        Mp += pad
    bn2 = 256 if N2p % 256 == 0 else 128
    grid = (Mp // bm, N2p // bn2)

    out = pl.pallas_call(
        functools.partial(_mm2_kernel, act1=act1, act2=act2),
        out_shape=jax.ShapeDtypeStruct((Mp, N2p), out_dtype),
        grid_spec=pltpu.PrefetchScalarGridSpec(
            num_scalar_prefetch=0,
            grid=grid,
            in_specs=[
                pl.BlockSpec((bm, K), lambda i, j: (i, 0)),
                pl.BlockSpec((K, N1p), lambda i, j: (0, 0)),
                pl.BlockSpec((1, N1p), lambda i, j: (0, 0)),
                pl.BlockSpec((1, N1p), lambda i, j: (0, 0)),
                pl.BlockSpec((N1p, bn2), lambda i, j: (0, j)),
                pl.BlockSpec((1, bn2), lambda i, j: (0, j)),
                pl.BlockSpec((1, bn2), lambda i, j: (0, j)),
            ],
            out_specs=pl.BlockSpec((bm, bn2), lambda i, j: (i, j)),
        ),
        compiler_params=pltpu.CompilerParams(
            dimension_semantics=("parallel", "parallel")),
    )(x, w1, s1, h1, w2, s2, h2)
    return out[:M, :n2]


# ----------------------------------------------------------------------------
# Conv wrappers (NHWC, weights (kh, kw, cin, cout)) built on the Pallas matmul.
# ----------------------------------------------------------------------------
def conv2d(x, p, *, stride=1, dilation=1, activation="none", out_dtype=jnp.bfloat16):
    w, scale, shift = p["w"], p["scale"], p["shift"]
    n, h, wd, cin = x.shape
    kh, kw, _, cout = w.shape
    # Dilated 3x3 on a feature map smaller than the dilation: every non-center
    # tap reads only zero padding -> exactly a 1x1 conv with the center slice.
    if stride == 1 and dilation > 1 and kh == 3 and kw == 3 and dilation >= h and dilation >= wd:
        w = w[1:2, 1:2]
        kh = kw = 1
        dilation = 1
    if kh == 1 and kw == 1 and stride == 1:
        cols = x.reshape(n * h * wd, cin)
        ho, wo = h, wd
    else:
        ph = dilation * (kh - 1) // 2
        pw = dilation * (kw - 1) // 2
        xp = jnp.pad(x, ((0, 0), (ph, ph), (pw, pw), (0, 0)))
        ho = (h + 2 * ph - dilation * (kh - 1) - 1) // stride + 1
        wo = (wd + 2 * pw - dilation * (kw - 1) - 1) // stride + 1
        cols = jnp.concatenate(
            [
                xp[:, i * dilation: i * dilation + stride * (ho - 1) + 1: stride,
                      j * dilation: j * dilation + stride * (wo - 1) + 1: stride, :]
                for i in range(kh) for j in range(kw)
            ],
            axis=-1,
        ).reshape(n * ho * wo, kh * kw * cin)
    y = matmul_scale_shift_act(cols, w.reshape(-1, cout), scale, shift, activation, out_dtype)
    return y.reshape(n, ho, wo, cout)


def conv2d_chain_3x3_1x1(x, p1, act1, p2, act2, out_dtype=jnp.bfloat16):
    """3x3 conv (p1, stride 1) immediately followed by a 1x1 conv (p2), one kernel."""
    n, h, wd, cin = x.shape
    kh, kw = p1["w"].shape[:2]
    ph, pw = (kh - 1) // 2, (kw - 1) // 2
    xp = jnp.pad(x, ((0, 0), (ph, ph), (pw, pw), (0, 0)))
    cols = jnp.concatenate(
        [xp[:, i:i + h, j:j + wd, :] for i in range(kh) for j in range(kw)],
        axis=-1,
    ).reshape(n * h * wd, kh * kw * cin)
    y = matmul2_scale_shift_act(cols, p1, act1, p2, act2, out_dtype)
    return y.reshape(n, h, wd, p2["w"].shape[-1])


# ----------------------------------------------------------------------------
# Synthetic backbone conv (XLA conv per perf review, see TODO(synk) at top).
# ----------------------------------------------------------------------------
def conv_bn_act_xla(x, p, *, stride=1, activation="swish"):
    y = jax.lax.conv_general_dilated(
        x.astype(jnp.bfloat16),
        p["w"].astype(jnp.bfloat16),
        window_strides=(stride, stride),
        padding=((1, 1), (1, 1)),
        dimension_numbers=("NHWC", "HWIO", "NHWC"),
        preferred_element_type=jnp.float32,
    )
    y = y * p["scale"] + p["shift"]
    return _apply_act(y, activation).astype(jnp.bfloat16)


# ----------------------------------------------------------------------------
# Parameter construction (deterministic, synthetic) + head weight fusion.
# ----------------------------------------------------------------------------
class KeyGen:
    def __init__(self, key):
        self.key = key

    def __call__(self):
        self.key, sub = jax.random.split(self.key)
        return sub


def _conv_bn(kg, kh, kw, cin, cout):
    w = jax.random.normal(kg(), (kh, kw, cin, cout), jnp.float32) * (2.0 / (kh * kw * cin)) ** 0.5
    gamma = 1.0 + 0.1 * jax.random.normal(kg(), (cout,), jnp.float32)
    beta = 0.1 * jax.random.normal(kg(), (cout,), jnp.float32)
    mean = 0.1 * jax.random.normal(kg(), (cout,), jnp.float32)
    var = 1.0 + 0.1 * jax.random.uniform(kg(), (cout,), jnp.float32)
    scale = gamma / jnp.sqrt(var + 1e-5)
    shift = beta - mean * scale
    return dict(w=w, scale=scale, shift=shift)


def _conv_bias(kg, kh, kw, cin, cout):
    w = jax.random.normal(kg(), (kh, kw, cin, cout), jnp.float32) * (2.0 / (kh * kw * cin)) ** 0.5
    b = 0.1 * jax.random.normal(kg(), (cout,), jnp.float32)
    return dict(w=w, scale=jnp.ones((cout,), jnp.float32), shift=b)


def _init_deeplab_head(kg, cin, cout, hidden=64):
    return dict(
        aspp_conv1=_conv_bn(kg, 1, 1, cin, hidden),
        aspp_r12=_conv_bn(kg, 3, 3, cin, hidden),
        aspp_r24=_conv_bn(kg, 3, 3, cin, hidden),
        aspp_r36=_conv_bn(kg, 3, 3, cin, hidden),
        aspp_pool=_conv_bn(kg, 1, 1, cin, hidden),
        aspp_project=_conv_bn(kg, 1, 1, 5 * hidden, hidden),
        head_conv=_conv_bn(kg, 3, 3, hidden, hidden),
        head_out=_conv_bias(kg, 1, 1, hidden, cout),
    )


def _init_upsampling_concat(kg, cin, cout):
    return dict(
        conv1=_conv_bn(kg, 3, 3, cin, cout),
        conv2=_conv_bn(kg, 3, 3, cout, cout),
    )


def init_encoder_params(key, cfg, D):
    C = cfg["OUT_CHANNELS"]
    use_depth = cfg["USE_DEPTH_DISTRIBUTION"]
    reduction_channel = [0, 16, 24, 40, 112, 320]   # efficientnet-b0
    index = 3                                       # downsample = 8
    c_in1 = reduction_channel[index + 1]            # 112
    c_in2 = reduction_channel[index]                # 40
    kg = KeyGen(key)
    params = dict(
        stem=_conv_bn(kg, 3, 3, 3, 32),
        b0=_conv_bn(kg, 3, 3, 32, 16),
        b1=_conv_bn(kg, 3, 3, 16, 24),
        b2=_conv_bn(kg, 3, 3, 24, 40),
        b3=_conv_bn(kg, 3, 3, 40, 80),
        b4=_conv_bn(kg, 3, 3, 80, 112),
        feature_layer_1=_init_deeplab_head(kg, c_in1, c_in1, hidden=64),
        feature_layer_2=_init_upsampling_concat(kg, c_in1 + c_in2, C),
    )
    if use_depth:
        params["depth_layer_1"] = _init_deeplab_head(kg, c_in1, c_in1, hidden=64)
        params["depth_layer_2"] = _init_upsampling_concat(kg, c_in1 + c_in2, D)
    return params


def _center_1x1(p):
    return dict(w=p["w"][1:2, 1:2], scale=p["scale"], shift=p["shift"])


def fuse_n(ps):
    """Same input feeds every conv: concatenate weights along output channels."""
    return dict(
        w=jnp.concatenate([p["w"] for p in ps], axis=3),
        scale=jnp.concatenate([p["scale"] for p in ps], axis=0),
        shift=jnp.concatenate([p["shift"] for p in ps], axis=0),
    )


def fuse_blockdiag(ps):
    """Per-path inputs are concatenated along channels: block-diagonal weights."""
    kh, kw = ps[0]["w"].shape[:2]
    cins = [p["w"].shape[2] for p in ps]
    couts = [p["w"].shape[3] for p in ps]
    w = jnp.zeros((kh, kw, sum(cins), sum(couts)), ps[0]["w"].dtype)
    ci = co = 0
    for p, a, b in zip(ps, cins, couts):
        w = w.at[:, :, ci:ci + a, co:co + b].set(p["w"])
        ci += a
        co += b
    return dict(
        w=w,
        scale=jnp.concatenate([p["scale"] for p in ps], axis=0),
        shift=jnp.concatenate([p["shift"] for p in ps], axis=0),
    )


def fuse_head_params(params, use_depth):
    """Pre-fuse feature/depth head weights once (outside jit): half the launches."""
    heads1 = [params["feature_layer_1"]] + ([params["depth_layer_1"]] if use_depth else [])
    heads2 = [params["feature_layer_2"]] + ([params["depth_layer_2"]] if use_depth else [])
    layer_1 = dict(
        # path-major [conv1, center(r12), center(r24), center(r36)] - used when
        # the dilated branches degenerate to 1x1 convs (feature map < dilation).
        branch_1x1=fuse_n([q for p in heads1
                           for q in (p["aspp_conv1"], _center_1x1(p["aspp_r12"]),
                                     _center_1x1(p["aspp_r24"]), _center_1x1(p["aspp_r36"]))]),
        # per-branch feature+depth fusion for the generic (non-degenerate) case.
        branch_dil=[fuse_n([p["aspp_conv1"] for p in heads1]),
                    fuse_n([p["aspp_r12"] for p in heads1]),
                    fuse_n([p["aspp_r24"] for p in heads1]),
                    fuse_n([p["aspp_r36"] for p in heads1])],
        pool=fuse_n([p["aspp_pool"] for p in heads1]),
        project=fuse_blockdiag([p["aspp_project"] for p in heads1]),
        head_conv=fuse_blockdiag([p["head_conv"] for p in heads1]),
        head_out=fuse_blockdiag([p["head_out"] for p in heads1]),
    )
    layer_2 = dict(
        conv1=fuse_blockdiag([p["conv1"] for p in heads2]),
        conv2=fuse_blockdiag([p["conv2"] for p in heads2]),
    )
    fused = {k: params[k] for k in ("stem", "b0", "b1", "b2", "b3", "b4")}
    fused["layer_1"] = layer_1
    fused["layer_2"] = layer_2
    return fused


# ----------------------------------------------------------------------------
# Forward pass pieces.
# ----------------------------------------------------------------------------
def backbone_features(params, x):
    """Returns (reduction_4: 112ch @ /16, reduction_3: 40ch @ /8)."""
    y = conv_bn_act_xla(x, params["stem"], stride=2)   # 32ch  /2
    y = conv_bn_act_xla(y, params["b0"], stride=1)     # 16ch  /2
    y = conv_bn_act_xla(y, params["b1"], stride=2)     # 24ch  /4
    y = conv_bn_act_xla(y, params["b2"], stride=2)     # 40ch  /8
    red3 = y
    y = conv_bn_act_xla(y, params["b3"], stride=2)     # 80ch  /16
    y = conv_bn_act_xla(y, params["b4"], stride=1)     # 112ch /16
    return y, red3


def deeplab_head_fused(p, x, num_paths):
    """Feature(+depth) DeepLabHead with fused weights. Output: [feat_out | depth_out]."""
    n, h, w, _ = x.shape
    hid = p["project"]["w"].shape[3] // num_paths
    degenerate = (h <= 12) and (w <= 12)   # smallest ASPP dilation
    if degenerate:
        # all four non-pool ASPP branches are 1x1 convs on the shared input:
        # one lane-dense matmul (M=N*H*W, N = num_paths*4*hid).
        yb = conv2d(x, p["branch_1x1"], activation="relu")
        path_branches = [yb[..., q * 4 * hid:(q + 1) * 4 * hid] for q in range(num_paths)]
    else:
        dils = [1, 12, 24, 36]
        bs = [conv2d(x, bp, dilation=d, activation="relu")
              for bp, d in zip(p["branch_dil"], dils)]
        path_branches = [jnp.concatenate([b[..., q * hid:(q + 1) * hid] for b in bs], axis=-1)
                         for q in range(num_paths)]
    # ASPP pooling branch: global avg pool -> 1x1 conv -> relu -> broadcast.
    # (N x Cin)@(Cin x P*hid) is far too small for a pallas_call -> plain JAX.
    pooled = jnp.mean(x.astype(jnp.float32), axis=(1, 2))              # (n, cin)
    pw = p["pool"]["w"][0, 0].astype(jnp.float32)
    py = jnp.maximum(pooled @ pw * p["pool"]["scale"] + p["pool"]["shift"], 0.0)
    py = py[:, None, None, :].astype(jnp.bfloat16)
    # path-major ASPP concat: [branches_p (4*hid), pool_p (hid)] per path.
    parts = []
    for q in range(num_paths):
        parts.append(path_branches[q])
        parts.append(jnp.broadcast_to(py[..., q * hid:(q + 1) * hid], (n, h, w, hid)))
    y = jnp.concatenate(parts, axis=-1)                                # (n,h,w, P*5*hid)
    y = conv2d(y, p["project"], activation="relu")                     # block-diag 1x1
    # Dropout(0.5) is identity in eval mode.
    y = conv2d_chain_3x3_1x1(y, p["head_conv"], "relu", p["head_out"], "none")
    return y                                                           # (n,h,w, P*c_out1)


def upsampling_concat_fused(p, x_heads, x_skip, num_paths):
    n, h, w, c = x_heads.shape
    per = c // num_paths
    up = jax.image.resize(x_heads.astype(jnp.float32), (n, 2 * h, 2 * w, c), method="bilinear")
    up = up.astype(jnp.bfloat16)
    parts = []
    for q in range(num_paths):
        parts.append(x_skip)                           # torch: cat([x_skip, upsampled], dim=C)
        parts.append(up[..., q * per:(q + 1) * per])
    y = jnp.concatenate(parts, axis=-1)
    y = conv2d(y, p["conv1"], activation="relu")       # block-diag 3x3
    y = conv2d(y, p["conv2"], activation="relu")       # block-diag 3x3
    return y                                           # channels [C_feat | D_depth]


def encoder_forward(params, x_nchw, *, use_depth, out_c, depth_c):
    num_paths = 2 if use_depth else 1
    x = jnp.transpose(x_nchw, (0, 2, 3, 1)).astype(jnp.bfloat16)       # NCHW -> NHWC
    input_1, input_2 = backbone_features(params, x)
    y = deeplab_head_fused(params["layer_1"], input_1, num_paths)
    y = upsampling_concat_fused(params["layer_2"], y, input_2, num_paths)
    feature = jnp.transpose(y[..., :out_c], (0, 3, 1, 2)).astype(jnp.float32)
    if use_depth:
        depth = jnp.transpose(y[..., out_c:out_c + depth_c], (0, 3, 1, 2)).astype(jnp.float32)
    else:
        depth = None
    return feature, depth


# ----------------------------------------------------------------------------
# Main
# ----------------------------------------------------------------------------
if __name__ == "__main__":
    cfg = dict(
        NAME="efficientnet-b0",
        OUT_CHANNELS=16,
        USE_DEPTH_DISTRIBUTION=True,
        DOWNSAMPLE=8,
    )
    D = 8

    root_key = jax.random.PRNGKey(0)
    param_key, data_key = jax.random.split(root_key)

    params = init_encoder_params(param_key, cfg, D)
    fused_params = fuse_head_params(params, use_depth=True)            # once, outside jit
    x = jax.random.normal(data_key, (2, 3, 64, 64), jnp.float32)       # NCHW like PyTorch

    fwd = jax.jit(functools.partial(
        encoder_forward, use_depth=True, out_c=cfg["OUT_CHANNELS"], depth_c=D))
    feature, depth = fwd(fused_params, x)
    feature = jax.block_until_ready(feature)
    depth = jax.block_until_ready(depth)

    assert feature.shape == (2, cfg["OUT_CHANNELS"], 8, 8), feature.shape
    assert depth.shape == (2, D, 8, 8), depth.shape
    assert bool(jnp.all(jnp.isfinite(feature))) and bool(jnp.all(jnp.isfinite(depth)))
    print("KERNEL_OK")
</pallas_src>

<mosaic_0001>
module attributes {stable_mosaic.version = 11 : i64} {
  func.func @_mm_kernel_1k(%arg0: i32, %arg1: i32, %arg2: memref<32x112xbf16, #tpu.memory_space<vmem>>, %arg3: memref<112x256xbf16, #tpu.memory_space<vmem>>, %arg4: memref<1x256xf32, #tpu.memory_space<vmem>>, %arg5: memref<1x256xf32, #tpu.memory_space<vmem>>, %arg6: memref<32x256xbf16, #tpu.memory_space<vmem>>) attributes {dimension_semantics = [#tpu.dimension_semantics<parallel>, #tpu.dimension_semantics<parallel>], iteration_bounds = array<i64: 1, 2>, scalar_prefetch = 0 : i64, scratch_operands = 0 : i64, tpu.core_type = #tpu.core_type<tc>, window_params = [{transform_indices = @transform_0, window_bounds = array<i64: 32, 112>}, {transform_indices = @transform_1, window_bounds = array<i64: 112, 256>}, {transform_indices = @transform_2, window_bounds = array<i64: 1, 256>}, {transform_indices = @transform_3, window_bounds = array<i64: 1, 256>}, {transform_indices = @transform_4, window_bounds = array<i64: 32, 256>}]} {
    %c0 = arith.constant 0 : index
    %c0_0 = arith.constant 0 : index
    %0 = vector.load %arg2[%c0, %c0_0] : memref<32x112xbf16, #tpu.memory_space<vmem>>, vector<32x112xbf16>
    %c0_1 = arith.constant 0 : index
    %c0_2 = arith.constant 0 : index
    %1 = vector.load %arg3[%c0_1, %c0_2] : memref<112x256xbf16, #tpu.memory_space<vmem>>, vector<112x256xbf16>
    %cst = arith.constant dense<0.000000e+00> : vector<32x256xf32>
    %2 = tpu.matmul %0, %1, %cst {dimension_numbers = #tpu.dot_dimension_numbers<[1], [0], [0], [1], [0, 0, 1, 1], [], []>} : vector<32x112xbf16>, vector<112x256xbf16>, vector<32x256xf32> -> vector<32x256xf32>
    %c0_3 = arith.constant 0 : index
    %c0_4 = arith.constant 0 : index
    %3 = vector.load %arg4[%c0_3, %c0_4] : memref<1x256xf32, #tpu.memory_space<vmem>>, vector<1x256xf32>
    %4 = vector.broadcast %3 : vector<1x256xf32> to vector<32x256xf32>
    %5 = arith.mulf %2, %4 : vector<32x256xf32>
    %c0_5 = arith.constant 0 : index
    %c0_6 = arith.constant 0 : index
    %6 = vector.load %arg5[%c0_5, %c0_6] : memref<1x256xf32, #tpu.memory_space<vmem>>, vector<1x256xf32>
    %7 = vector.broadcast %6 : vector<1x256xf32> to vector<32x256xf32>
    %8 = arith.addf %5, %7 : vector<32x256xf32>
    %cst_7 = arith.constant 0.000000e+00 : f32
    %9 = vector.broadcast %cst_7 : f32 to vector<32x256xf32>
    %10 = arith.maximumf %8, %9 : vector<32x256xf32>
    %11 = arith.truncf %10 : vector<32x256xf32> to vector<32x256xbf16>
    %c0_8 = arith.constant 0 : index
    %c0_9 = arith.constant 0 : index
    %12 = vector.load %arg6[%c0_8, %c0_9] : memref<32x256xbf16, #tpu.memory_space<vmem>>, vector<32x256xbf16>
    tpu.vector_store %arg6[%c0_8, %c0_9], %11 {strides = array<i32>} : memref<32x256xbf16, #tpu.memory_space<vmem>>, vector<32x256xbf16>,
    return
  }
  func.func @transform_0(%arg0: i32, %arg1: i32) -> (i32, i32) {
    %c0_i32 = arith.constant 0 : i32
    %c0_i32_0 = arith.constant 0 : i32
    return %arg0, %c0_i32 : i32, i32
  }
  func.func @transform_1(%arg0: i32, %arg1: i32) -> (i32, i32) {
    %c0_i32 = arith.constant 0 : i32
    %c0_i32_0 = arith.constant 0 : i32
    return %c0_i32, %arg1 : i32, i32
  }
  func.func @transform_2(%arg0: i32, %arg1: i32) -> (i32, i32) {
    %c0_i32 = arith.constant 0 : i32
    %c0_i32_0 = arith.constant 0 : i32
    return %c0_i32, %arg1 : i32, i32
  }
  func.func @transform_3(%arg0: i32, %arg1: i32) -> (i32, i32) {
    %c0_i32 = arith.constant 0 : i32
    %c0_i32_0 = arith.constant 0 : i32
    return %c0_i32, %arg1 : i32, i32
  }
  func.func @transform_4(%arg0: i32, %arg1: i32) -> (i32, i32) {
    %c0_i32 = arith.constant 0 : i32
    return %arg0, %arg1 : i32, i32
  }
}

module attributes {stable_mosaic.version = 11 : i64} {
  func.func @_mm_kernel_1k(%arg0: i32, %arg1: i32, %arg2: memref<32x640xbf16, #tpu.memory_space<vmem>>, %arg3: memref<640x128xbf16, #tpu.memory_space<vmem>>, %arg4: memref<1x128xf32, #tpu.memory_space<vmem>>, %arg5: memref<1x128xf32, #tpu.memory_space<vmem>>, %arg6: memref<32x128xbf16, #tpu.memory_space<vmem>>) attributes {dimension_semantics = [#tpu.dimension_semantics<parallel>, #tpu.dimension_semantics<parallel>], iteration_bounds = array<i64: 1, 1>, scalar_prefetch = 0 : i64, scratch_operands = 0 : i64, tpu.core_type = #tpu.core_type<tc>, window_params = [{transform_indices = @transform_0, window_bounds = array<i64: 32, 640>}, {transform_indices = @transform_1, window_bounds = array<i64: 640, 128>}, {transform_indices = @transform_2, window_bounds = array<i64: 1, 128>}, {transform_indices = @transform_3, window_bounds = array<i64: 1, 128>}, {transform_indices = @transform_4, window_bounds = array<i64: 32, 128>}]} {
    %c0 = arith.constant 0 : index
    %c0_0 = arith.constant 0 : index
    %0 = vector.load %arg2[%c0, %c0_0] : memref<32x640xbf16, #tpu.memory_space<vmem>>, vector<32x640xbf16>
    %c0_1 = arith.constant 0 : index
    %c0_2 = arith.constant 0 : index
    %1 = vector.load %arg3[%c0_1, %c0_2] : memref<640x128xbf16, #tpu.memory_space<vmem>>, vector<640x128xbf16>
    %cst = arith.constant dense<0.000000e+00> : vector<32x128xf32>
    %2 = tpu.matmul %0, %1, %cst {dimension_numbers = #tpu.dot_dimension_numbers<[1], [0], [0], [1], [0, 0, 1, 1], [], []>} : vector<32x640xbf16>, vector<640x128xbf16>, vector<32x128xf32> -> vector<32x128xf32>
    %c0_3 = arith.constant 0 : index
    %c0_4 = arith.constant 0 : index
    %3 = vector.load %arg4[%c0_3, %c0_4] : memref<1x128xf32, #tpu.memory_space<vmem>>, vector<1x128xf32>
    %4 = vector.broadcast %3 : vector<1x128xf32> to vector<32x128xf32>
    %5 = arith.mulf %2, %4 : vector<32x128xf32>
    %c0_5 = arith.constant 0 : index
    %c0_6 = arith.constant 0 : index
    %6 = vector.load %arg5[%c0_5, %c0_6] : memref<1x128xf32, #tpu.memory_space<vmem>>, vector<1x128xf32>
    %7 = vector.broadcast %6 : vector<1x128xf32> to vector<32x128xf32>
    %8 = arith.addf %5, %7 : vector<32x128xf32>
    %cst_7 = arith.constant 0.000000e+00 : f32
    %9 = vector.broadcast %cst_7 : f32 to vector<32x128xf32>
    %10 = arith.maximumf %8, %9 : vector<32x128xf32>
    %11 = arith.truncf %10 : vector<32x128xf32> to vector<32x128xbf16>
    %c0_8 = arith.constant 0 : index
    %c0_9 = arith.constant 0 : index
    %12 = vector.load %arg6[%c0_8, %c0_9] : memref<32x128xbf16, #tpu.memory_space<vmem>>, vector<32x128xbf16>
    tpu.vector_store %arg6[%c0_8, %c0_9], %11 {strides = array<i32>} : memref<32x128xbf16, #tpu.memory_space<vmem>>, vector<32x128xbf16>,
    return
  }
  func.func @transform_0(%arg0: i32, %arg1: i32) -> (i32, i32) {
    %c0_i32 = arith.constant 0 : i32
    %c0_i32_0 = arith.constant 0 : i32
    return %arg0, %c0_i32 : i32, i32
  }
  func.func @transform_1(%arg0: i32, %arg1: i32) -> (i32, i32) {
    %c0_i32 = arith.constant 0 : i32
    %c0_i32_0 = arith.constant 0 : i32
    return %c0_i32, %arg1 : i32, i32
  }
  func.func @transform_2(%arg0: i32, %arg1: i32) -> (i32, i32) {
    %c0_i32 = arith.constant 0 : i32
    %c0_i32_0 = arith.constant 0 : i32
    return %c0_i32, %arg1 : i32, i32
  }
  func.func @transform_3(%arg0: i32, %arg1: i32) -> (i32, i32) {
    %c0_i32 = arith.constant 0 : i32
    %c0_i32_0 = arith.constant 0 : i32
    return %c0_i32, %arg1 : i32, i32
  }
  func.func @transform_4(%arg0: i32, %arg1: i32) -> (i32, i32) {
    %c0_i32 = arith.constant 0 : i32
    return %arg0, %arg1 : i32, i32
  }
}

module attributes {stable_mosaic.version = 11 : i64} {
  func.func @_mm2_kernel(%arg0: i32, %arg1: i32, %arg2: memref<32x1152xbf16, #tpu.memory_space<vmem>>, %arg3: memref<1152x128xbf16, #tpu.memory_space<vmem>>, %arg4: memref<1x128xf32, #tpu.memory_space<vmem>>, %arg5: memref<1x128xf32, #tpu.memory_space<vmem>>, %arg6: memref<128x256xbf16, #tpu.memory_space<vmem>>, %arg7: memref<1x256xf32, #tpu.memory_space<vmem>>, %arg8: memref<1x256xf32, #tpu.memory_space<vmem>>, %arg9: memref<32x256xbf16, #tpu.memory_space<vmem>>) attributes {dimension_semantics = [#tpu.dimension_semantics<parallel>, #tpu.dimension_semantics<parallel>], iteration_bounds = array<i64: 1, 1>, scalar_prefetch = 0 : i64, scratch_operands = 0 : i64, tpu.core_type = #tpu.core_type<tc>, window_params = [{transform_indices = @transform_0, window_bounds = array<i64: 32, 1152>}, {pipeline_mode = #tpu.pipeline_mode<synchronous>, transform_indices = @transform_1, window_bounds = array<i64: 1152, 128>}, {pipeline_mode = #tpu.pipeline_mode<synchronous>, transform_indices = @transform_2, window_bounds = array<i64: 1, 128>}, {pipeline_mode = #tpu.pipeline_mode<synchronous>, transform_indices = @transform_3, window_bounds = array<i64: 1, 128>}, {transform_indices = @transform_4, window_bounds = array<i64: 128, 256>}, {transform_indices = @transform_5, window_bounds = array<i64: 1, 256>}, {transform_indices = @transform_6, window_bounds = array<i64: 1, 256>}, {transform_indices = @transform_7, window_bounds = array<i64: 32, 256>}]} {
    %c0 = arith.constant 0 : index
    %c0_0 = arith.constant 0 : index
    %0 = vector.load %arg2[%c0, %c0_0] : memref<32x1152xbf16, #tpu.memory_space<vmem>>, vector<32x1152xbf16>
    %c0_1 = arith.constant 0 : index
    %c0_2 = arith.constant 0 : index
    %1 = vector.load %arg3[%c0_1, %c0_2] : memref<1152x128xbf16, #tpu.memory_space<vmem>>, vector<1152x128xbf16>
    %cst = arith.constant dense<0.000000e+00> : vector<32x128xf32>
    %2 = tpu.matmul %0, %1, %cst {dimension_numbers = #tpu.dot_dimension_numbers<[1], [0], [0], [1], [0, 0, 1, 1], [], []>} : vector<32x1152xbf16>, vector<1152x128xbf16>, vector<32x128xf32> -> vector<32x128xf32>
    %c0_3 = arith.constant 0 : index
    %c0_4 = arith.constant 0 : index
    %3 = vector.load %arg4[%c0_3, %c0_4] : memref<1x128xf32, #tpu.memory_space<vmem>>, vector<1x128xf32>
    %4 = vector.broadcast %3 : vector<1x128xf32> to vector<32x128xf32>
    %5 = arith.mulf %2, %4 : vector<32x128xf32>
    %c0_5 = arith.constant 0 : index
    %c0_6 = arith.constant 0 : index
    %6 = vector.load %arg5[%c0_5, %c0_6] : memref<1x128xf32, #tpu.memory_space<vmem>>, vector<1x128xf32>
    %7 = vector.broadcast %6 : vector<1x128xf32> to vector<32x128xf32>
    %8 = arith.addf %5, %7 : vector<32x128xf32>
    %cst_7 = arith.constant 0.000000e+00 : f32
    %9 = vector.broadcast %cst_7 : f32 to vector<32x128xf32>
    %10 = arith.maximumf %8, %9 : vector<32x128xf32>
    %11 = arith.truncf %10 : vector<32x128xf32> to vector<32x128xbf16>
    %c0_8 = arith.constant 0 : index
    %c0_9 = arith.constant 0 : index
    %12 = vector.load %arg6[%c0_8, %c0_9] : memref<128x256xbf16, #tpu.memory_space<vmem>>, vector<128x256xbf16>
    %cst_10 = arith.constant dense<0.000000e+00> : vector<32x256xf32>
    %13 = tpu.matmul %11, %12, %cst_10 {dimension_numbers = #tpu.dot_dimension_numbers<[1], [0], [0], [1], [0, 0, 1, 1], [], []>} : vector<32x128xbf16>, vector<128x256xbf16>, vector<32x256xf32> -> vector<32x256xf32>
    %c0_11 = arith.constant 0 : index
    %c0_12 = arith.constant 0 : index
    %14 = vector.load %arg7[%c0_11, %c0_12] : memref<1x256xf32, #tpu.memory_space<vmem>>, vector<1x256xf32>
    %15 = vector.broadcast %14 : vector<1x256xf32> to vector<32x256xf32>
    %16 = arith.mulf %13, %15 : vector<32x256xf32>
    %c0_13 = arith.constant 0 : index
    %c0_14 = arith.constant 0 : index
    %17 = vector.load %arg8[%c0_13, %c0_14] : memref<1x256xf32, #tpu.memory_space<vmem>>, vector<1x256xf32>
    %18 = vector.broadcast %17 : vector<1x256xf32> to vector<32x256xf32>
    %19 = arith.addf %16, %18 : vector<32x256xf32>
    %20 = arith.truncf %19 : vector<32x256xf32> to vector<32x256xbf16>
    %c0_15 = arith.constant 0 : index
    %c0_16 = arith.constant 0 : index
    %21 = vector.load %arg9[%c0_15, %c0_16] : memref<32x256xbf16, #tpu.memory_space<vmem>>, vector<32x256xbf16>
    tpu.vector_store %arg9[%c0_15, %c0_16], %20 {strides = array<i32>} : memref<32x256xbf16, #tpu.memory_space<vmem>>, vector<32x256xbf16>,
    return
  }
  func.func @transform_0(%arg0: i32, %arg1: i32) -> (i32, i32) {
    %c0_i32 = arith.constant 0 : i32
    %c0_i32_0 = arith.constant 0 : i32
    return %arg0, %c0_i32 : i32, i32
  }
  func.func @transform_1(%arg0: i32, %arg1: i32) -> (i32, i32) {
    %c0_i32 = arith.constant 0 : i32
    %c0_i32_0 = arith.constant 0 : i32
    %c0_i32_1 = arith.constant 0 : i32
    return %c0_i32, %c0_i32_0 : i32, i32
  }
  func.func @transform_2(%arg0: i32, %arg1: i32) -> (i32, i32) {
    %c0_i32 = arith.constant 0 : i32
    %c0_i32_0 = arith.constant 0 : i32
    %c0_i32_1 = arith.constant 0 : i32
    return %c0_i32, %c0_i32_0 : i32, i32
  }
  func.func @transform_3(%arg0: i32, %arg1: i32) -> (i32, i32) {
    %c0_i32 = arith.constant 0 : i32
    %c0_i32_0 = arith.constant 0 : i32
    %c0_i32_1 = arith.constant 0 : i32
    return %c0_i32, %c0_i32_0 : i32, i32
  }
  func.func @transform_4(%arg0: i32, %arg1: i32) -> (i32, i32) {
    %c0_i32 = arith.constant 0 : i32
    %c0_i32_0 = arith.constant 0 : i32
    return %c0_i32, %arg1 : i32, i32
  }
  func.func @transform_5(%arg0: i32, %arg1: i32) -> (i32, i32) {
    %c0_i32 = arith.constant 0 : i32
    %c0_i32_0 = arith.constant 0 : i32
    return %c0_i32, %arg1 : i32, i32
  }
  func.func @transform_6(%arg0: i32, %arg1: i32) -> (i32, i32) {
    %c0_i32 = arith.constant 0 : i32
    %c0_i32_0 = arith.constant 0 : i32
    return %c0_i32, %arg1 : i32, i32
  }
  func.func @transform_7(%arg0: i32, %arg1: i32) -> (i32, i32) {
    %c0_i32 = arith.constant 0 : i32
    return %arg0, %arg1 : i32, i32
  }
}

module attributes {stable_mosaic.version = 11 : i64} {
  func.func @_mm_kernel_1k(%arg0: i32, %arg1: i32, %arg2: memref<128x2736xbf16, #tpu.memory_space<vmem>>, %arg3: memref<2736x128xbf16, #tpu.memory_space<vmem>>, %arg4: memref<1x128xf32, #tpu.memory_space<vmem>>, %arg5: memref<1x128xf32, #tpu.memory_space<vmem>>, %arg6: memref<128x128xbf16, #tpu.memory_space<vmem>>) attributes {dimension_semantics = [#tpu.dimension_semantics<parallel>, #tpu.dimension_semantics<parallel>], iteration_bounds = array<i64: 1, 1>, scalar_prefetch = 0 : i64, scratch_operands = 0 : i64, tpu.core_type = #tpu.core_type<tc>, window_params = [{transform_indices = @transform_0, window_bounds = array<i64: 128, 2736>}, {transform_indices = @transform_1, window_bounds = array<i64: 2736, 128>}, {transform_indices = @transform_2, window_bounds = array<i64: 1, 128>}, {transform_indices = @transform_3, window_bounds = array<i64: 1, 128>}, {transform_indices = @transform_4, window_bounds = array<i64: 128, 128>}]} {
    %c0 = arith.constant 0 : index
    %c0_0 = arith.constant 0 : index
    %0 = vector.load %arg2[%c0, %c0_0] : memref<128x2736xbf16, #tpu.memory_space<vmem>>, vector<128x2736xbf16>
    %c0_1 = arith.constant 0 : index
    %c0_2 = arith.constant 0 : index
    %1 = vector.load %arg3[%c0_1, %c0_2] : memref<2736x128xbf16, #tpu.memory_space<vmem>>, vector<2736x128xbf16>
    %cst = arith.constant dense<0.000000e+00> : vector<128x128xf32>
    %2 = tpu.matmul %0, %1, %cst {dimension_numbers = #tpu.dot_dimension_numbers<[1], [0], [0], [1], [0, 0, 1, 1], [], []>} : vector<128x2736xbf16>, vector<2736x128xbf16>, vector<128x128xf32> -> vector<128x128xf32>
    %c0_3 = arith.constant 0 : index
    %c0_4 = arith.constant 0 : index
    %3 = vector.load %arg4[%c0_3, %c0_4] : memref<1x128xf32, #tpu.memory_space<vmem>>, vector<1x128xf32>
    %4 = vector.broadcast %3 : vector<1x128xf32> to vector<128x128xf32>
    %5 = arith.mulf %2, %4 : vector<128x128xf32>
    %c0_5 = arith.constant 0 : index
    %c0_6 = arith.constant 0 : index
    %6 = vector.load %arg5[%c0_5, %c0_6] : memref<1x128xf32, #tpu.memory_space<vmem>>, vector<1x128xf32>
    %7 = vector.broadcast %6 : vector<1x128xf32> to vector<128x128xf32>
    %8 = arith.addf %5, %7 : vector<128x128xf32>
    %cst_7 = arith.constant 0.000000e+00 : f32
    %9 = vector.broadcast %cst_7 : f32 to vector<128x128xf32>
    %10 = arith.maximumf %8, %9 : vector<128x128xf32>
    %11 = arith.truncf %10 : vector<128x128xf32> to vector<128x128xbf16>
    %c0_8 = arith.constant 0 : index
    %c0_9 = arith.constant 0 : index
    %12 = vector.load %arg6[%c0_8, %c0_9] : memref<128x128xbf16, #tpu.memory_space<vmem>>, vector<128x128xbf16>
    tpu.vector_store %arg6[%c0_8, %c0_9], %11 {strides = array<i32>} : memref<128x128xbf16, #tpu.memory_space<vmem>>, vector<128x128xbf16>,
    return
  }
  func.func @transform_0(%arg0: i32, %arg1: i32) -> (i32, i32) {
    %c0_i32 = arith.constant 0 : i32
    %c0_i32_0 = arith.constant 0 : i32
    return %arg0, %c0_i32 : i32, i32
  }
  func.func @transform_1(%arg0: i32, %arg1: i32) -> (i32, i32) {
    %c0_i32 = arith.constant 0 : i32
    %c0_i32_0 = arith.constant 0 : i32
    return %c0_i32, %arg1 : i32, i32
  }
  func.func @transform_2(%arg0: i32, %arg1: i32) -> (i32, i32) {
    %c0_i32 = arith.constant 0 : i32
    %c0_i32_0 = arith.constant 0 : i32
    return %c0_i32, %arg1 : i32, i32
  }
  func.func @transform_3(%arg0: i32, %arg1: i32) -> (i32, i32) {
    %c0_i32 = arith.constant 0 : i32
    %c0_i32_0 = arith.constant 0 : i32
    return %c0_i32, %arg1 : i32, i32
  }
  func.func @transform_4(%arg0: i32, %arg1: i32) -> (i32, i32) {
    %c0_i32 = arith.constant 0 : i32
    return %arg0, %arg1 : i32, i32
  }
}

module attributes {stable_mosaic.version = 11 : i64} {
  func.func @_mm_kernel_1k(%arg0: i32, %arg1: i32, %arg2: memref<128x216xbf16, #tpu.memory_space<vmem>>, %arg3: memref<216x128xbf16, #tpu.memory_space<vmem>>, %arg4: memref<1x128xf32, #tpu.memory_space<vmem>>, %arg5: memref<1x128xf32, #tpu.memory_space<vmem>>, %arg6: memref<128x128xbf16, #tpu.memory_space<vmem>>) attributes {dimension_semantics = [#tpu.dimension_semantics<parallel>, #tpu.dimension_semantics<parallel>], iteration_bounds = array<i64: 1, 1>, scalar_prefetch = 0 : i64, scratch_operands = 0 : i64, tpu.core_type = #tpu.core_type<tc>, window_params = [{transform_indices = @transform_0, window_bounds = array<i64: 128, 216>}, {transform_indices = @transform_1, window_bounds = array<i64: 216, 128>}, {transform_indices = @transform_2, window_bounds = array<i64: 1, 128>}, {transform_indices = @transform_3, window_bounds = array<i64: 1, 128>}, {transform_indices = @transform_4, window_bounds = array<i64: 128, 128>}]} {
    %c0 = arith.constant 0 : index
    %c0_0 = arith.constant 0 : index
    %0 = vector.load %arg2[%c0, %c0_0] : memref<128x216xbf16, #tpu.memory_space<vmem>>, vector<128x216xbf16>
    %c0_1 = arith.constant 0 : index
    %c0_2 = arith.constant 0 : index
    %1 = vector.load %arg3[%c0_1, %c0_2] : memref<216x128xbf16, #tpu.memory_space<vmem>>, vector<216x128xbf16>
    %cst = arith.constant dense<0.000000e+00> : vector<128x128xf32>
    %2 = tpu.matmul %0, %1, %cst {dimension_numbers = #tpu.dot_dimension_numbers<[1], [0], [0], [1], [0, 0, 1, 1], [], []>} : vector<128x216xbf16>, vector<216x128xbf16>, vector<128x128xf32> -> vector<128x128xf32>
    %c0_3 = arith.constant 0 : index
    %c0_4 = arith.constant 0 : index
    %3 = vector.load %arg4[%c0_3, %c0_4] : memref<1x128xf32, #tpu.memory_space<vmem>>, vector<1x128xf32>
    %4 = vector.broadcast %3 : vector<1x128xf32> to vector<128x128xf32>
    %5 = arith.mulf %2, %4 : vector<128x128xf32>
    %c0_5 = arith.constant 0 : index
    %c0_6 = arith.constant 0 : index
    %6 = vector.load %arg5[%c0_5, %c0_6] : memref<1x128xf32, #tpu.memory_space<vmem>>, vector<1x128xf32>
    %7 = vector.broadcast %6 : vector<1x128xf32> to vector<128x128xf32>
    %8 = arith.addf %5, %7 : vector<128x128xf32>
    %cst_7 = arith.constant 0.000000e+00 : f32
    %9 = vector.broadcast %cst_7 : f32 to vector<128x128xf32>
    %10 = arith.maximumf %8, %9 : vector<128x128xf32>
    %11 = arith.truncf %10 : vector<128x128xf32> to vector<128x128xbf16>
    %c0_8 = arith.constant 0 : index
    %c0_9 = arith.constant 0 : index
    %12 = vector.load %arg6[%c0_8, %c0_9] : memref<128x128xbf16, #tpu.memory_space<vmem>>, vector<128x128xbf16>
    tpu.vector_store %arg6[%c0_8, %c0_9], %11 {strides = array<i32>} : memref<128x128xbf16, #tpu.memory_space<vmem>>, vector<128x128xbf16>,
    return
  }
  func.func @transform_0(%arg0: i32, %arg1: i32) -> (i32, i32) {
    %c0_i32 = arith.constant 0 : i32
    %c0_i32_0 = arith.constant 0 : i32
    return %arg0, %c0_i32 : i32, i32
  }
  func.func @transform_1(%arg0: i32, %arg1: i32) -> (i32, i32) {
    %c0_i32 = arith.constant 0 : i32
    %c0_i32_0 = arith.constant 0 : i32
    return %c0_i32, %arg1 : i32, i32
  }
  func.func @transform_2(%arg0: i32, %arg1: i32) -> (i32, i32) {
    %c0_i32 = arith.constant 0 : i32
    %c0_i32_0 = arith.constant 0 : i32
    return %c0_i32, %arg1 : i32, i32
  }
  func.func @transform_3(%arg0: i32, %arg1: i32) -> (i32, i32) {
    %c0_i32 = arith.constant 0 : i32
    %c0_i32_0 = arith.constant 0 : i32
    return %c0_i32, %arg1 : i32, i32
  }
  func.func @transform_4(%arg0: i32, %arg1: i32) -> (i32, i32) {
    %c0_i32 = arith.constant 0 : i32
    return %arg0, %arg1 : i32, i32
  }
}

</mosaic_0001>

<llo_original>
// kernel: encoder_forward.5
$region0: #{encoder_forward.5}
  #allocation0 [shape = 'u32[]', space=smem, size = 0x4, offset = 0x4, fixed_abs, tag = 'smem constant byte address 0x4 - core index']
  #allocation1 [shape = 'u32[144,128]{1,0:T(1,128)}', space=vmem, size = 0x12000, scoped, tag = 'internal scratch']
  %s0 = inlined_call_operand.vmem [shape: bf16[32,112], index: 0, kind: input, shape index: {}]
  %s1 = inlined_call_operand.vmem [shape: bf16[112,512], index: 1, kind: input, shape index: {}]
  %s2 = inlined_call_operand.vmem [shape: f32[1,512], index: 2, kind: input, shape index: {}]
  %s3 = inlined_call_operand.vmem [shape: f32[1,512], index: 3, kind: input, shape index: {}]
  %s4 = inlined_call_operand.vmem [shape: bf16[32,512], index: 4, kind: output, shape index: {}]
  %s5 = sld [smem:[#allocation0]]
  $region121: #{encoder_forward.5} parent=0
    _
  %s7 = ssub.s32 1, %s5
  %s8 = scalar_select 0, %s7, %s5
  $region1: #{encoder_forward.5} parent=0
    #allocation2 [shape = 'u8[114688]{0}', space=vmem, size = 0x1c000, scoped, tag = 'input window, operand 1']
    #allocation3 [shape = 'u8[32768]{0}', space=vmem, size = 0x8000, scoped, tag = 'output window, operand 0']
    loop: start=0, step=1, limit=4
    $region2: #{encoder_forward.5} parent=1 // loop_pre_header
      _
    $region3: #{encoder_forward.5} parent=1 // loop_header
      %s10 = sphi 0, %s14
      %p11 = scmp.ge.s32.totalorder %s10, 4
      %s17 = sphi 0, %s29
      %s18 = sphi 0, %s25
      %s19 = sphi 0, %s17
      %s20 = sphi 0, %s18
      %s21 = sphi 0, %s19
      %s22 = sphi 0, %s20
      %s32 = sphi 0, %s34
      %s35 = sphi 0, %s32
      %s36 = sphi 0, %s35
      %s52 = sphi 0, %s36
      %s58 = sphi 0, %s60
      %s61 = sphi 0, %s58
      %s62 = sphi 0, %s61
      %s78 = sphi 0, %s62
      %s84 = sphi 0, %s86
      %s87 = sphi 0, %s84
      %s88 = sphi 0, %s87
      %s104 = sphi 0, %s88
      %s110 = sphi 0, %s112
      %s113 = sphi 0, %s110
      %s114 = sphi 0, %s113
      %s130 = sphi 0, %s114
      %s138 = sphi 0, %s140
      %s141 = sphi 0, %s138
      %s142 = sphi 0, %s141
      %s158 = sphi 0, %s142
    $region4: #{encoder_forward.5} parent=1 // loop_header_branch
      %13 = sbr.rel (%p11) target = $region8
    $region5: #{encoder_forward.5} parent=1 // loop_body
      %s15 = ssub.s32 %s10, 1
      %s16 = ssub.s32 %s10, 2
      %s23 = sadd.s32 1, %s18
      %p24 = scmp.ge.s32.totalorder %s23, 2
      %s25 = scalar_select %p24, 0, %s23
      %s26 = sadd.s32 1, %s17
      %s27 = scalar_select %p24, %s26, %s17
      %p28 = scmp.ge.s32.totalorder %s27, 1
      %s29 = scalar_select %p28, 0, %s27
      %s30 = ssub.s32 %s17, %s29
      %p31 = scmp.eq.s32.totalorder %s30, 0
      %s33 = sadd.s32 %s32, 1
      %s34 = scalar_select %p31, %s32, %s33
      %p37 = pneg %p31
      %p38 = scmp.eq.s32.totalorder %s10, 1
      %p39 = por %p37, %p38
      %p40 = scmp.ne.s32.totalorder %s32, %s35
      %p41 = scmp.eq.s32.totalorder %s10, 0
      %p42 = por %p40, %p41
      %p43 = scmp.ne.s32.totalorder %s32, %s35
      %p44 = scmp.eq.s32.totalorder %s15, 1
      %p45 = por %p43, %p44
      %p46 = scmp.ne.s32.totalorder %s35, %s36
      %p47 = scmp.eq.s32.totalorder %s15, 0
      %p48 = por %p46, %p47
      %p49 = scmp.ne.s32.totalorder %s35, %s36
      %p50 = scmp.eq.s32.totalorder %s16, 1
      %p51 = por %p49, %p50
      %p53 = scmp.ne.s32.totalorder %s36, %s52
      %p54 = scmp.eq.s32.totalorder %s16, 0
      %p55 = por %p53, %p54
      %s56 = ssub.s32 %s18, %s25
      %p57 = scmp.eq.s32.totalorder %s56, 0
      %s59 = sadd.s32 %s58, 1
      %s60 = scalar_select %p57, %s58, %s59
      %p63 = pneg %p57
      %p64 = scmp.eq.s32.totalorder %s10, 1
      %p65 = por %p63, %p64
      %p66 = scmp.ne.s32.totalorder %s58, %s61
      %p67 = scmp.eq.s32.totalorder %s10, 0
      %p68 = por %p66, %p67
      %p69 = scmp.ne.s32.totalorder %s58, %s61
      %p70 = scmp.eq.s32.totalorder %s15, 1
      %p71 = por %p69, %p70
      %p72 = scmp.ne.s32.totalorder %s61, %s62
      %p73 = scmp.eq.s32.totalorder %s15, 0
      %p74 = por %p72, %p73
      %p75 = scmp.ne.s32.totalorder %s61, %s62
      %p76 = scmp.eq.s32.totalorder %s16, 1
      %p77 = por %p75, %p76
      %p79 = scmp.ne.s32.totalorder %s62, %s78
      %p80 = scmp.eq.s32.totalorder %s16, 0
      %p81 = por %p79, %p80
      %s82 = ssub.s32 %s18, %s25
      %p83 = scmp.eq.s32.totalorder %s82, 0
      %s85 = sadd.s32 %s84, 1
      %s86 = scalar_select %p83, %s84, %s85
      %p89 = pneg %p83
      %p90 = scmp.eq.s32.totalorder %s10, 1
      %p91 = por %p89, %p90
      %p92 = scmp.ne.s32.totalorder %s84, %s87
      %p93 = scmp.eq.s32.totalorder %s10, 0
      %p94 = por %p92, %p93
      %p95 = scmp.ne.s32.totalorder %s84, %s87
      %p96 = scmp.eq.s32.totalorder %s15, 1
      %p97 = por %p95, %p96
      %p98 = scmp.ne.s32.totalorder %s87, %s88
      %p99 = scmp.eq.s32.totalorder %s15, 0
      %p100 = por %p98, %p99
      %p101 = scmp.ne.s32.totalorder %s87, %s88
      %p102 = scmp.eq.s32.totalorder %s16, 1
      %p103 = por %p101, %p102
      %p105 = scmp.ne.s32.totalorder %s88, %s104
      %p106 = scmp.eq.s32.totalorder %s16, 0
      %p107 = por %p105, %p106
      %s108 = ssub.s32 %s18, %s25
      %p109 = scmp.eq.s32.totalorder %s108, 0
      %s111 = sadd.s32 %s110, 1
      %s112 = scalar_select %p109, %s110, %s111
      %p115 = pneg %p109
      %p116 = scmp.eq.s32.totalorder %s10, 1
      %p117 = por %p115, %p116
      %p118 = scmp.ne.s32.totalorder %s110, %s113
      %p119 = scmp.eq.s32.totalorder %s10, 0
      %p120 = por %p118, %p119
      %p121 = scmp.ne.s32.totalorder %s110, %s113
      %p122 = scmp.eq.s32.totalorder %s15, 1
      %p123 = por %p121, %p122
      %p124 = scmp.ne.s32.totalorder %s113, %s114
      %p125 = scmp.eq.s32.totalorder %s15, 0
      %p126 = por %p124, %p125
      %p127 = scmp.ne.s32.totalorder %s113, %s114
      %p128 = scmp.eq.s32.totalorder %s16, 1
      %p129 = por %p127, %p128
      %p131 = scmp.ne.s32.totalorder %s114, %s130
      %p132 = scmp.eq.s32.totalorder %s16, 0
      %p133 = por %p131, %p132
      %s134 = ssub.s32 %s17, %s29
      %s135 = ssub.s32 %s18, %s25
      %s136 = sor.u32 %s134, %s135
      %p137 = scmp.eq.s32.totalorder %s136, 0
      %s139 = sadd.s32 %s138, 1
      %s140 = scalar_select %p137, %s138, %s139
      %p143 = pneg %p137
      %p144 = scmp.eq.s32.totalorder %s10, 1
      %p145 = por %p143, %p144
      %p146 = scmp.ne.s32.totalorder %s138, %s141
      %p147 = scmp.eq.s32.totalorder %s10, 0
      %p148 = por %p146, %p147
      %p149 = scmp.ne.s32.totalorder %s138, %s141
      %p150 = scmp.eq.s32.totalorder %s15, 1
      %p151 = por %p149, %p150
      %p152 = scmp.ne.s32.totalorder %s141, %s142
      %p153 = scmp.eq.s32.totalorder %s15, 0
      %p154 = por %p152, %p153
      %p155 = scmp.ne.s32.totalorder %s141, %s142
      %p156 = scmp.eq.s32.totalorder %s16, 1
      %p157 = por %p155, %p156
      %p159 = scmp.ne.s32.totalorder %s142, %s158
      %p160 = scmp.eq.s32.totalorder %s16, 0
      %p161 = por %p159, %p160
      %p162 = scmp.le.s32.totalorder 1, %s10
      %p163 = scmp.lt.s32.totalorder %s10, 3
      %p164 = pnand %p162, %p163
      %p165 = pneg %p164
      // Predicated region
      $region9: #{encoder_forward.5} parent=5 // pred_check
        _
      $region10: #{encoder_forward.5} parent=5 // pred_check_branch
        %167 = sbr.rel (%p164) target = $region12
      $region11: #{encoder_forward.5} parent=5 // pred_region
        %s168 = ssub.s32 %s10, 1
        // Predicated region
        $region13: #{encoder_forward.5} parent=11 // pred_check
          %p169 = pneg %p48
        $region14: #{encoder_forward.5} parent=11 // pred_check_branch
          %171 = sbr.rel (%p169) target = $region16
        $region15: #{encoder_forward.5} parent=11 // pred_region
          %s172 = smul.u32 4, %s19
          %p173 = scmp.lt.s32.totalorder %s172, 3
          %s174 = scalar_select %p173, %s172, 3
          %s175 = smul.addr %s174, 4
          %s176 = scalar_lea.vmem %s0, %s175
          %s177 = smul.u32 4, %s19
        $region16: #{encoder_forward.5} parent=11 // pred_fallthru
          _
      $region12: #{encoder_forward.5} parent=5 // pred_fallthru
        _
      %p178 = scmp.lt.s32.totalorder %s10, 2
      // Predicated region
      $region17: #{encoder_forward.5} parent=5 // pred_check
        %p179 = pneg %p178
      $region18: #{encoder_forward.5} parent=5 // pred_check_branch
        %181 = sbr.rel (%p179) target = $region20
      $region19: #{encoder_forward.5} parent=5 // pred_region
        // Predicated region
        $region21: #{encoder_forward.5} parent=19 // pred_check
          %p182 = pneg %p68
        $region22: #{encoder_forward.5} parent=19 // pred_check_branch
          %184 = sbr.rel (%p182) target = $region24
        $region23: #{encoder_forward.5} parent=19 // pred_region
          %s185 = sand.u32 %s58, 1
          %s186 = sand.u32 %s58, 1
          %s187 = smul.addr %s186, 112
          %s188 = scalar_lea.vmem [#allocation2], %s187
          %s189 = smul.u32 2, %s18
          %s190 = smul.addr %s189, 4
          %s191 = scalar_lea.vmem %s1, %s190
          // Predicated region
          $region25: #{encoder_forward.5} parent=23 // pred_check
            _
          $region26: #{encoder_forward.5} parent=23 // pred_check_branch
            %193 = sbr.rel (0) target = $region28
          $region27: #{encoder_forward.5} parent=23 // pred_region
            // Predicated region
            $region29: #{encoder_forward.5} parent=27 // pred_check
              _
            $region30: #{encoder_forward.5} parent=27 // pred_check_branch
              %195 = sbr.rel (0) target = $region32
            $region31: #{encoder_forward.5} parent=27 // pred_region
              // Predicated region
              $region44: #{encoder_forward.5} parent=31 // pred_check
                _
              $region45: #{encoder_forward.5} parent=31 // pred_check_branch
                %236 = sbr.rel (0) target = $region47
              $region46: #{encoder_forward.5} parent=31 // pred_region
                loop: start=0, step=1, limit=1
                $region48: #{encoder_forward.5} parent=46 // loop_pre_header
                  _
                $region49: #{encoder_forward.5} parent=46 // loop_header
                  %s238 = sphi 0, %s242
                  %p239 = scmp.ge.s32.totalorder %s238, 1
                  %s243 = sphi %s191, %s191
                  %s244 = sphi %s188, %s188
                $region50: #{encoder_forward.5} parent=46 // loop_header_branch
                  %241 = sbr.rel (%p239) target = $region54
                $region51: #{encoder_forward.5} parent=46 // loop_body
                  %v245 = vld [vmem:[%s243] sm:$0xff]
                  %246 = vst [vmem:[%s244] sm:$0xff] %v245
                  %v247 = vld [vmem:[%s243 + $0x10] sm:$0xff]
                  %248 = vst [vmem:[%s244 + $0x8] sm:$0xff] %v247
                  %v249 = vld [vmem:[%s243 + $0x20] sm:$0xff]
                  %250 = vst [vmem:[%s244 + $0x10] sm:$0xff] %v249
                  %v251 = vld [vmem:[%s243 + $0x30] sm:$0xff]
                  %252 = vst [vmem:[%s244 + $0x18] sm:$0xff] %v251
                  %v253 = vld [vmem:[%s243 + $0x40] sm:$0xff]
                  %254 = vst [vmem:[%s244 + $0x20] sm:$0xff] %v253
                  %v255 = vld [vmem:[%s243 + $0x50] sm:$0xff]
                  %256 = vst [vmem:[%s244 + $0x28] sm:$0xff] %v255
                  %v257 = vld [vmem:[%s243 + $0x60] sm:$0xff]
                  %258 = vst [vmem:[%s244 + $0x30] sm:$0xff] %v257
                  %v259 = vld [vmem:[%s243 + $0x70] sm:$0xff]
                  %260 = vst [vmem:[%s244 + $0x38] sm:$0xff] %v259
                  %v261 = vld [vmem:[%s243 + $0x80] sm:$0xff]
                  %262 = vst [vmem:[%s244 + $0x40] sm:$0xff] %v261
                  %v263 = vld [vmem:[%s243 + $0x90] sm:$0xff]
                  %264 = vst [vmem:[%s244 + $0x48] sm:$0xff] %v263
                  %v265 = vld [vmem:[%s243 + $0xa0] sm:$0xff]
                  %266 = vst [vmem:[%s244 + $0x50] sm:$0xff] %v265
                  %v267 = vld [vmem:[%s243 + $0xb0] sm:$0xff]
                  %268 = vst [vmem:[%s244 + $0x58] sm:$0xff] %v267
                  %v269 = vld [vmem:[%s243 + $0xc0] sm:$0xff]
                  %270 = vst [vmem:[%s244 + $0x60] sm:$0xff] %v269
                  %v271 = vld [vmem:[%s243 + $0xd0] sm:$0xff]
                  %272 = vst [vmem:[%s244 + $0x68] sm:$0xff] %v271
                $region52: #{encoder_forward.5} parent=46 // loop_footer
                  %s242 = sadd.s32 1, %s238
                $region53: #{encoder_forward.5} parent=46 // loop_footer_branch
                  %237 = sbr.rel target = $region49
                $region54: #{encoder_forward.5} parent=46 // loop_exit
                  _
              $region47: #{encoder_forward.5} parent=31 // pred_fallthru
                _
              // Predicated region
              $region55: #{encoder_forward.5} parent=31 // pred_check
                _
              $region56: #{encoder_forward.5} parent=31 // pred_check_branch
                %274 = sbr.rel target = $region58
              $region57: #{encoder_forward.5} parent=31 // pred_region
                _
              $region58: #{encoder_forward.5} parent=31 // pred_fallthru
                _
            $region32: #{encoder_forward.5} parent=27 // pred_fallthru
              _
            // Predicated region
            $region33: #{encoder_forward.5} parent=27 // pred_check
              _
            $region34: #{encoder_forward.5} parent=27 // pred_check_branch
              %197 = sbr.rel target = $region36
            $region35: #{encoder_forward.5} parent=27 // pred_region
              loop: start=0, step=1, limit=1
              $region37: #{encoder_forward.5} parent=35 // loop_pre_header
                _
              $region38: #{encoder_forward.5} parent=35 // loop_header
                %s200 = sphi 0, %s204
                %p201 = scmp.ge.s32.totalorder %s200, 1
                %s205 = sphi %s191, %s191
                %s206 = sphi %s188, %s188
              $region39: #{encoder_forward.5} parent=35 // loop_header_branch
                %203 = sbr.rel (%p201) target = $region43
              $region40: #{encoder_forward.5} parent=35 // loop_body
                %v207 = vld [vmem:[%s205] sm:$0xff]
                %208 = vst [vmem:[%s206] sm:$0xff] %v207
                %v209 = vld [vmem:[%s205 + $0x10] sm:$0xff]
                %210 = vst [vmem:[%s206 + $0x8] sm:$0xff] %v209
                %v211 = vld [vmem:[%s205 + $0x20] sm:$0xff]
                %212 = vst [vmem:[%s206 + $0x10] sm:$0xff] %v211
                %v213 = vld [vmem:[%s205 + $0x30] sm:$0xff]
                %214 = vst [vmem:[%s206 + $0x18] sm:$0xff] %v213
                %v215 = vld [vmem:[%s205 + $0x40] sm:$0xff]
                %216 = vst [vmem:[%s206 + $0x20] sm:$0xff] %v215
                %v217 = vld [vmem:[%s205 + $0x50] sm:$0xff]
                %218 = vst [vmem:[%s206 + $0x28] sm:$0xff] %v217
                %v219 = vld [vmem:[%s205 + $0x60] sm:$0xff]
                %220 = vst [vmem:[%s206 + $0x30] sm:$0xff] %v219
                %v221 = vld [vmem:[%s205 + $0x70] sm:$0xff]
                %222 = vst [vmem:[%s206 + $0x38] sm:$0xff] %v221
                %v223 = vld [vmem:[%s205 + $0x80] sm:$0xff]
                %224 = vst [vmem:[%s206 + $0x40] sm:$0xff] %v223
                %v225 = vld [vmem:[%s205 + $0x90] sm:$0xff]
                %226 = vst [vmem:[%s206 + $0x48] sm:$0xff] %v225
                %v227 = vld [vmem:[%s205 + $0xa0] sm:$0xff]
                %228 = vst [vmem:[%s206 + $0x50] sm:$0xff] %v227
                %v229 = vld [vmem:[%s205 + $0xb0] sm:$0xff]
                %230 = vst [vmem:[%s206 + $0x58] sm:$0xff] %v229
                %v231 = vld [vmem:[%s205 + $0xc0] sm:$0xff]
                %232 = vst [vmem:[%s206 + $0x60] sm:$0xff] %v231
                %v233 = vld [vmem:[%s205 + $0xd0] sm:$0xff]
                %234 = vst [vmem:[%s206 + $0x68] sm:$0xff] %v233
              $region41: #{encoder_forward.5} parent=35 // loop_footer
                %s204 = sadd.s32 1, %s200
              $region42: #{encoder_forward.5} parent=35 // loop_footer_branch
                %199 = sbr.rel target = $region38
              $region43: #{encoder_forward.5} parent=35 // loop_exit
                _
            $region36: #{encoder_forward.5} parent=27 // pred_fallthru
              _
          $region28: #{encoder_forward.5} parent=23 // pred_fallthru
            _
          %275 = vnop
        $region24: #{encoder_forward.5} parent=19 // pred_fallthru
          _
        // Predicated region
        $region59: #{encoder_forward.5} parent=19 // pred_check
          %p276 = pneg %p94
        $region60: #{encoder_forward.5} parent=19 // pred_check_branch
          %278 = sbr.rel (%p276) target = $region62
        $region61: #{encoder_forward.5} parent=19 // pred_region
          %s279 = smul.u32 2, %s18
          %p280 = scmp.lt.s32.totalorder %s279, 3
          %s281 = scalar_select %p280, %s279, 3
          %s282 = scalar_lea.vmem %s2, %s281
          %s283 = smul.u32 2, %s18
        $region62: #{encoder_forward.5} parent=19 // pred_fallthru
          _
        // Predicated region
        $region63: #{encoder_forward.5} parent=19 // pred_check
          %p284 = pneg %p120
        $region64: #{encoder_forward.5} parent=19 // pred_check_branch
          %286 = sbr.rel (%p284) target = $region66
        $region65: #{encoder_forward.5} parent=19 // pred_region
          %s287 = smul.u32 2, %s18
          %p288 = scmp.lt.s32.totalorder %s287, 3
          %s289 = scalar_select %p288, %s287, 3
          %s290 = scalar_lea.vmem %s3, %s289
          %s291 = smul.u32 2, %s18
        $region66: #{encoder_forward.5} parent=19 // pred_fallthru
          _
      $region20: #{encoder_forward.5} parent=5 // pred_fallthru
        _
      %p292 = scmp.le.s32.totalorder 1, %s10
      %p293 = scmp.lt.s32.totalorder %s10, 3
      %p294 = pnand %p292, %p293
      %p295 = pneg %p294
      // Predicated region
      $region67: #{encoder_forward.5} parent=5 // pred_check
        _
      $region68: #{encoder_forward.5} parent=5 // pred_check_branch
        %297 = sbr.rel (%p294) target = $region70
      $region69: #{encoder_forward.5} parent=5 // pred_region
        %s298 = ssub.s32 %s10, 1
        %s299 = sand.u32 %s61, 1
        %s300 = sand.u32 %s61, 1
        %s301 = smul.addr %s300, 112
        %s302 = scalar_lea.vmem [#allocation2], %s301
        // Predicated region
        $region71: #{encoder_forward.5} parent=69 // pred_check
          %p303 = pneg %p74
        $region72: #{encoder_forward.5} parent=69 // pred_check_branch
          %305 = sbr.rel (%p303) target = $region74
        $region73: #{encoder_forward.5} parent=69 // pred_region
          _
        $region74: #{encoder_forward.5} parent=69 // pred_fallthru
          _
        %s306 = smul.u32 4, %s19
        %p307 = scmp.lt.s32.totalorder %s306, 3
        %s308 = scalar_select %p307, %s306, 3
        %s309 = smul.addr %s308, 4
        %s310 = scalar_lea.vmem %s0, %s309
        %p311 = pneg %p48
        %p312 = pneg %p45
        %s313 = sand.u32 %s61, 1
        %s314 = sand.u32 %s61, 1
        %s315 = smul.addr %s314, 112
        %s316 = scalar_lea.vmem [#allocation2], %s315
        %p317 = pneg %p74
        %p318 = pneg %p71
        %s319 = smul.u32 2, %s20
        %p320 = scmp.lt.s32.totalorder %s319, 3
        %s321 = scalar_select %p320, %s319, 3
        %s322 = scalar_lea.vmem %s2, %s321
        %p323 = pneg %p100
        %p324 = pneg %p97
        %s325 = smul.u32 2, %s20
        %p326 = scmp.lt.s32.totalorder %s325, 3
        %s327 = scalar_select %p326, %s325, 3
        %s328 = scalar_lea.vmem %s3, %s327
        %p329 = pneg %p126
        %p330 = pneg %p123
        %p331 = pneg %p154
        %p332 = pneg %p151
        %s333 = sand.u32 %s141, 1
        %s334 = sand.u32 %s141, 1
        %s335 = smul.addr %s334, 32
        %s336 = scalar_lea.vmem [#allocation3], %s335
        %s337 = smul.u32 4, %s19
        %p338 = scmp.lt.s32.totalorder %s337, 3
        %s339 = scalar_select %p338, %s337, 3
        %s340 = smul.addr %s339, 4
        %s341 = scalar_lea.vmem %s0, %s340
        %s342 = smul.u32 4, %s19
        %s343 = smul.u32 2, %s20
        %s344 = smul.u32 2, %s20
        %p345 = scmp.lt.s32.totalorder %s344, 3
        %s346 = scalar_select %p345, %s344, 3
        %s347 = scalar_lea.vmem %s2, %s346
        %s348 = smul.u32 2, %s20
        %s349 = smul.u32 2, %s20
        %p350 = scmp.lt.s32.totalorder %s349, 3
        %s351 = scalar_select %p350, %s349, 3
        %s352 = scalar_lea.vmem %s3, %s351
        %s353 = smul.u32 2, %s20
        %s354 = smul.u32 4, %s19
        %s355 = smul.u32 2, %s20
        %v357 = vld [vmem:[%s341] sm:$0xf]
        %v358 = vld [vmem:[%s341 + $0x4] sm:$0xf]
        %v359 = vld [vmem:[%s341 + $0x8] sm:$0xf]
        %v360 = vld [vmem:[%s341 + $0xc] sm:$0xf]
        %v361 = vld [vmem:[%s302] sm:$0xff]
        %v362 = vld [vmem:[%s302 + $0x8] sm:$0xff]
        %v363 = vld [vmem:[%s302 + $0x10] sm:$0xff]
        %v364 = vld [vmem:[%s302 + $0x18] sm:$0xff]
        %v365 = vld [vmem:[%s302 + $0x20] sm:$0xff]
        %v366 = vld [vmem:[%s302 + $0x28] sm:$0xff]
        %v367 = vld [vmem:[%s302 + $0x30] sm:$0xff]
        %v368 = vld [vmem:[%s302 + $0x38] sm:$0xff]
        %v369 = vld [vmem:[%s302 + $0x40] sm:$0xff]
        %v370 = vld [vmem:[%s302 + $0x48] sm:$0xff]
        %v371 = vld [vmem:[%s302 + $0x50] sm:$0xff]
        %v372 = vld [vmem:[%s302 + $0x58] sm:$0xff]
        %v373 = vld [vmem:[%s302 + $0x60] sm:$0xff]
        %v374 = vld [vmem:[%s302 + $0x68] sm:$0xff]
        %v379 = vunpack.c.l.b16 %v357
        %v380 = vunpack.c.l.b16 %v358
        %v381 = vunpack.c.l.b16 %v359
        %v382 = vunpack.c.l.b16 %v360
        %v383 = vpack.c.b16 %v380, %v379
        %v384 = vpack.c.b16 %v382, %v381
        %v399 = vunpack.c.l.b16 %v361
        %v400 = vunpack.c.h.b16 %v361
        %v401 = vunpack.c.l.b16 %v362
        %v402 = vunpack.c.h.b16 %v362
        %v403 = vunpack.c.l.b16 %v363
        %v404 = vunpack.c.h.b16 %v363
        %v405 = vunpack.c.l.b16 %v364
        %v406 = vunpack.c.h.b16 %v364
        %v407 = vunpack.c.l.b16 %v365
        %v408 = vunpack.c.h.b16 %v365
        %v409 = vunpack.c.l.b16 %v366
        %v410 = vunpack.c.h.b16 %v366
        %v411 = vunpack.c.l.b16 %v367
        %v412 = vunpack.c.h.b16 %v367
        %v413 = vunpack.c.l.b16 %v368
        %v414 = vunpack.c.h.b16 %v368
        %v415 = vunpack.c.l.b16 %v369
        %v416 = vunpack.c.h.b16 %v369
        %v417 = vunpack.c.l.b16 %v370
        %v418 = vunpack.c.h.b16 %v370
        %v419 = vunpack.c.l.b16 %v371
        %v420 = vunpack.c.h.b16 %v371
        %v421 = vunpack.c.l.b16 %v372
        %v422 = vunpack.c.h.b16 %v372
        %v423 = vunpack.c.l.b16 %v373
        %v424 = vunpack.c.h.b16 %v373
        %v425 = vunpack.c.l.b16 %v374
        %v426 = vunpack.c.h.b16 %v374
        %v427 = vpack.c.b16 %v401, %v399
        %v428 = vpack.c.b16 %v402, %v400
        %v429 = vpack.c.b16 %v405, %v403
        %v430 = vpack.c.b16 %v406, %v404
        %v431 = vpack.c.b16 %v409, %v407
        %v432 = vpack.c.b16 %v410, %v408
        %v433 = vpack.c.b16 %v413, %v411
        %v434 = vpack.c.b16 %v414, %v412
        %v435 = vpack.c.b16 %v417, %v415
        %v436 = vpack.c.b16 %v418, %v416
        %v437 = vpack.c.b16 %v421, %v419
        %v438 = vpack.c.b16 %v422, %v420
        %v439 = vpack.c.b16 %v425, %v423
        %v440 = vpack.c.b16 %v426, %v424
        %vm455 = vcmask 916480
        %v457 = vsel %vm455, %v383, 0
        %v460 = vsel %vm455, %v384, 0
        %462 = vmatprep.subr.bf16.mxu0 %v428
        %463 = vmatpush1.bf16.msra.mxu0 %v427
        %464 = vmatprep.subr.bf16.mxu0 %v430
        %465 = vmatpush1.bf16.msra.mxu0 %v429
        %466 = vmatprep.subr.bf16.mxu0 %v432
        %467 = vmatpush1.bf16.msra.mxu0 %v431
        %468 = vmatprep.subr.bf16.mxu0 %v434
        %469 = vmatpush1.bf16.msra.mxu0 %v433
        %470 = vmatprep.subr.bf16.mxu0 %v436
        %471 = vmatpush1.bf16.msra.mxu0 %v435
        %472 = vmatprep.subr.bf16.mxu0 %v438
        %473 = vmatpush1.bf16.msra.mxu0 %v437
        %474 = vmatprep.subr.bf16.mxu0 %v440
        %475 = vmatpush1.bf16.msra.mxu0 %v439
        %476 = vmatprep.subr.bf16.mxu0 0
        %477 = vmatpush1.bf16.msra.mxu0 0
        %478 = vmatprep.subr.bf16.mxu0 0
        %479 = vmatpush1.bf16.msra.mxu0 0
        %480 = vmatprep.subr.bf16.mxu0 0
        %481 = vmatpush1.bf16.msra.mxu0 0
        %482 = vmatprep.subr.bf16.mxu0 0
        %483 = vmatpush1.bf16.msra.mxu0 0
        %484 = vmatprep.subr.bf16.mxu0 0
        %485 = vmatpush1.bf16.msra.mxu0 0
        %486 = vmatprep.subr.bf16.mxu0 0
        %487 = vmatpush1.bf16.msra.mxu0 0
        %488 = vmatprep.subr.bf16.mxu0 0
        %489 = vmatpush1.bf16.msra.mxu0 0
        %490 = vmatprep.subr.bf16.mxu0 0
        %491 = vmatpush1.bf16.msra.mxu0 0
        %492 = vmatprep.subr.bf16.mxu0 0
        %493 = vmatpush1.bf16.msra.mxu0 0
        %494 = vmatprep.mubr.bf16.mxu0 0
        %495 = vmatmul.mubr.bf16.gmra.mrb[0].mxu0 %v457
        %v496 = vpop.f32.mrb[0].mxu0
        %v497 = vadd.f32 0.0, %v496
        %v498 = vpop.f32.mrb[0].mxu0
        %v499 = vadd.f32 0.0, %v498
        %v500 = vpop.f32.mrb[0].mxu0
        %v501 = vadd.f32 0.0, %v500
        %v502 = vpop.f32.mrb[0].mxu0
        %v503 = vadd.f32 0.0, %v502
        %504 = vmatprep.mubr.bf16.mxu0 0
        %505 = vmatmul.mubr.bf16.gmra.mrb[0].mxu0 %v460
        %v506 = vpop.f32.mrb[0].mxu0
        %v507 = vadd.f32 0.0, %v506
        %v508 = vpop.f32.mrb[0].mxu0
        %v509 = vadd.f32 0.0, %v508
        %v510 = vpop.f32.mrb[0].mxu0
        %v511 = vadd.f32 0.0, %v510
        %v512 = vpop.f32.mrb[0].mxu0
        %v513 = vadd.f32 0.0, %v512
        %514 = vdwg.mxu0
        %v515 = vld [vmem:[%s347] sm:$0x3]
        %v517 = vlaneseq
        %v518 = vshrl.u32 %v517, 7
        %v519 = vsub.s32 0, %v518
        %v520 = vrot.slane %v515, %v519
        %v521 = vlaneseq
        %v522 = vshrl.u32 %v521, 7
        %v523 = vsub.s32 1, %v522
        %v524 = vrot.slane %v515, %v523
        %v527 = vmul.f32 %v497, %v520
        %v528 = vmul.f32 %v499, %v524
        %v529 = vmul.f32 %v501, %v520
        %v530 = vmul.f32 %v503, %v524
        %v531 = vmul.f32 %v507, %v520
        %v532 = vmul.f32 %v509, %v524
        %v533 = vmul.f32 %v511, %v520
        %v534 = vmul.f32 %v513, %v524
        %v535 = vld [vmem:[%s352] sm:$0x3]
        %v537 = vlaneseq
        %v538 = vshrl.u32 %v537, 7
        %v539 = vsub.s32 0, %v538
        %v540 = vrot.slane %v535, %v539
        %v541 = vlaneseq
        %v542 = vshrl.u32 %v541, 7
        %v543 = vsub.s32 1, %v542
        %v544 = vrot.slane %v535, %v543
        %v547 = vadd.f32 %v527, %v540
        %v548 = vadd.f32 %v528, %v544
        %v549 = vadd.f32 %v529, %v540
        %v550 = vadd.f32 %v530, %v544
        %v551 = vadd.f32 %v531, %v540
        %v552 = vadd.f32 %v532, %v544
        %v553 = vadd.f32 %v533, %v540
        %v554 = vadd.f32 %v534, %v544
        %v555 = vmax.f32 %v547, 0.0
        %v556 = vmax.f32 %v548, 0.0
        %v557 = vmax.f32 %v549, 0.0
        %v558 = vmax.f32 %v550, 0.0
        %v559 = vmax.f32 %v551, 0.0
        %v560 = vmax.f32 %v552, 0.0
        %v561 = vmax.f32 %v553, 0.0
        %v562 = vmax.f32 %v554, 0.0
        %v563 = vpack.c.bf16 %v557, %v555
        %v564 = vpack.c.bf16 %v558, %v556
        %v565 = vpack.c.bf16 %v561, %v559
        %v566 = vpack.c.bf16 %v562, %v560
        %v571 = vunpack.c.l.b16 %v563
        %v572 = vunpack.c.l.b16 %v564
        %v573 = vunpack.c.h.b16 %v563
        %v574 = vunpack.c.h.b16 %v564
        %v575 = vunpack.c.l.b16 %v565
        %v576 = vunpack.c.l.b16 %v566
        %v577 = vunpack.c.h.b16 %v565
        %v578 = vunpack.c.h.b16 %v566
        %v579 = vpack.c.b16 %v572, %v571
        %v580 = vpack.c.b16 %v574, %v573
        %v581 = vpack.c.b16 %v576, %v575
        %v582 = vpack.c.b16 %v578, %v577
        %587 = vst [vmem:[%s336] sm:$0xff] %v579
        %588 = vst [vmem:[%s336 + $0x8] sm:$0xff] %v580
        %589 = vst [vmem:[%s336 + $0x10] sm:$0xff] %v581
        %590 = vst [vmem:[%s336 + $0x18] sm:$0xff] %v582
        %s591 = sand.u32 %s141, 1
        %s592 = sand.u32 %s141, 1
        %s593 = smul.addr %s592, 32
        %s594 = scalar_lea.vmem [#allocation3], %s593
        // Predicated region
        $region75: #{encoder_forward.5} parent=69 // pred_check
          %p595 = pneg %p151
        $region76: #{encoder_forward.5} parent=69 // pred_check_branch
          %597 = sbr.rel (%p595) target = $region78
        $region77: #{encoder_forward.5} parent=69 // pred_region
          %s598 = smul.u32 4, %s19
          %s599 = smul.u32 2, %s20
          %s600 = smul.addr %s598, 4
          %s601 = sadd.s32 %s599, %s600
          %s602 = smul.addr %s601, 4
          %s603 = scalar_lea.vmem %s4, %s602
          // Predicated region
          $region79: #{encoder_forward.5} parent=77 // pred_check
            _
          $region80: #{encoder_forward.5} parent=77 // pred_check_branch
            %605 = sbr.rel (0) target = $region82
          $region81: #{encoder_forward.5} parent=77 // pred_region
            // Predicated region
            $region83: #{encoder_forward.5} parent=81 // pred_check
              _
            $region84: #{encoder_forward.5} parent=81 // pred_check_branch
              %607 = sbr.rel (0) target = $region86
            $region85: #{encoder_forward.5} parent=81 // pred_region
              // Predicated region
              $region98: #{encoder_forward.5} parent=85 // pred_check
                _
              $region99: #{encoder_forward.5} parent=85 // pred_check_branch
                %628 = sbr.rel (0) target = $region101
              $region100: #{encoder_forward.5} parent=85 // pred_region
                loop: start=0, step=1, limit=1
                $region102: #{encoder_forward.5} parent=100 // loop_pre_header
                  _
                $region103: #{encoder_forward.5} parent=100 // loop_header
                  %s630 = sphi 0, %s634
                  %p631 = scmp.ge.s32.totalorder %s630, 1
                  %s635 = sphi %s594, %s594
                  %s636 = sphi %s603, %s603
                $region104: #{encoder_forward.5} parent=100 // loop_header_branch
                  %633 = sbr.rel (%p631) target = $region108
                $region105: #{encoder_forward.5} parent=100 // loop_body
                  %v637 = vld [vmem:[%s635] sm:$0xff]
                  %638 = vst [vmem:[%s636] sm:$0xff] %v637
                  %v639 = vld [vmem:[%s635 + $0x8] sm:$0xff]
                  %640 = vst [vmem:[%s636 + $0x10] sm:$0xff] %v639
                  %v641 = vld [vmem:[%s635 + $0x10] sm:$0xff]
                  %642 = vst [vmem:[%s636 + $0x20] sm:$0xff] %v641
                  %v643 = vld [vmem:[%s635 + $0x18] sm:$0xff]
                  %644 = vst [vmem:[%s636 + $0x30] sm:$0xff] %v643
                $region106: #{encoder_forward.5} parent=100 // loop_footer
                  %s634 = sadd.s32 1, %s630
                $region107: #{encoder_forward.5} parent=100 // loop_footer_branch
                  %629 = sbr.rel target = $region103
                $region108: #{encoder_forward.5} parent=100 // loop_exit
                  _
              $region101: #{encoder_forward.5} parent=85 // pred_fallthru
                _
              // Predicated region
              $region109: #{encoder_forward.5} parent=85 // pred_check
                _
              $region110: #{encoder_forward.5} parent=85 // pred_check_branch
                %646 = sbr.rel target = $region112
              $region111: #{encoder_forward.5} parent=85 // pred_region
                _
              $region112: #{encoder_forward.5} parent=85 // pred_fallthru
                _
            $region86: #{encoder_forward.5} parent=81 // pred_fallthru
              _
            // Predicated region
            $region87: #{encoder_forward.5} parent=81 // pred_check
              _
            $region88: #{encoder_forward.5} parent=81 // pred_check_branch
              %609 = sbr.rel target = $region90
            $region89: #{encoder_forward.5} parent=81 // pred_region
              loop: start=0, step=1, limit=1
              $region91: #{encoder_forward.5} parent=89 // loop_pre_header
                _
              $region92: #{encoder_forward.5} parent=89 // loop_header
                %s612 = sphi 0, %s616
                %p613 = scmp.ge.s32.totalorder %s612, 1
                %s617 = sphi %s594, %s594
                %s618 = sphi %s603, %s603
              $region93: #{encoder_forward.5} parent=89 // loop_header_branch
                %615 = sbr.rel (%p613) target = $region97
              $region94: #{encoder_forward.5} parent=89 // loop_body
                %v619 = vld [vmem:[%s617] sm:$0xff]
                %620 = vst [vmem:[%s618] sm:$0xff] %v619
                %v621 = vld [vmem:[%s617 + $0x8] sm:$0xff]
                %622 = vst [vmem:[%s618 + $0x10] sm:$0xff] %v621
                %v623 = vld [vmem:[%s617 + $0x10] sm:$0xff]
                %624 = vst [vmem:[%s618 + $0x20] sm:$0xff] %v623
                %v625 = vld [vmem:[%s617 + $0x18] sm:$0xff]
                %626 = vst [vmem:[%s618 + $0x30] sm:$0xff] %v625
              $region95: #{encoder_forward.5} parent=89 // loop_footer
                %s616 = sadd.s32 1, %s612
              $region96: #{encoder_forward.5} parent=89 // loop_footer_branch
                %611 = sbr.rel target = $region92
              $region97: #{encoder_forward.5} parent=89 // loop_exit
                _
            $region90: #{encoder_forward.5} parent=81 // pred_fallthru
              _
          $region82: #{encoder_forward.5} parent=77 // pred_fallthru
            _
          %647 = vnop
        $region78: #{encoder_forward.5} parent=69 // pred_fallthru
          _
      $region70: #{encoder_forward.5} parent=5 // pred_fallthru
        _
      %p648 = scmp.le.s32.totalorder 2, %s10
      // Predicated region
      $region113: #{encoder_forward.5} parent=5 // pred_check
        %p649 = pneg %p648
      $region114: #{encoder_forward.5} parent=5 // pred_check_branch
        %651 = sbr.rel (%p649) target = $region116
      $region115: #{encoder_forward.5} parent=5 // pred_region
        %s652 = ssub.s32 %s10, 2
        // Predicated region
        $region117: #{encoder_forward.5} parent=115 // pred_check
          %p653 = pneg %p157
        $region118: #{encoder_forward.5} parent=115 // pred_check_branch
          %655 = sbr.rel (%p653) target = $region120
        $region119: #{encoder_forward.5} parent=115 // pred_region
          %s656 = sand.u32 %s142, 1
          %s657 = sand.u32 %s142, 1
          %s658 = smul.addr %s657, 32
          %s659 = scalar_lea.vmem [#allocation3], %s658
        $region120: #{encoder_forward.5} parent=115 // pred_fallthru
          _
      $region116: #{encoder_forward.5} parent=5 // pred_fallthru
        _
    $region6: #{encoder_forward.5} parent=1 // loop_footer
      %s14 = sadd.s32 1, %s10
    $region7: #{encoder_forward.5} parent=1 // loop_footer_branch
      %9 = sbr.rel target = $region3
    $region8: #{encoder_forward.5} parent=1 // loop_exit
      _

// kernel: encoder_forward.6
$region0: #{encoder_forward.6}
  #allocation0 [shape = 'u32[]', space=smem, size = 0x4, offset = 0x4, fixed_abs, tag = 'smem constant byte address 0x4 - core index']
  #allocation1 [shape = 'u32[144,128]{1,0:T(1,128)}', space=vmem, size = 0x12000, scoped, tag = 'internal scratch']
  %s0 = inlined_call_operand.vmem [shape: bf16[32,640], index: 0, kind: input, shape index: {}]
  %s1 = inlined_call_operand.vmem [shape: bf16[640,128], index: 1, kind: input, shape index: {}]
  %s2 = inlined_call_operand.vmem [shape: f32[1,128], index: 2, kind: input, shape index: {}]
  %s3 = inlined_call_operand.vmem [shape: f32[1,128], index: 3, kind: input, shape index: {}]
  %s4 = inlined_call_operand.vmem [shape: bf16[32,128], index: 4, kind: output, shape index: {}]
  %s5 = sld [smem:[#allocation0]]
  $region26: #{encoder_forward.6} parent=0
    _
  %s7 = ssub.s32 1, %s5
  %s8 = scalar_select 0, %s7, %s5
  // Predicated region
  $region2: #{encoder_forward.6} parent=0 // pred_check
    _
  $region3: #{encoder_forward.6} parent=0 // pred_check_branch
    %10 = sbr.rel (0) target = $region5
  $region4: #{encoder_forward.6} parent=0 // pred_region
    _
  $region5: #{encoder_forward.6} parent=0 // pred_fallthru
    _
  // Predicated region
  $region6: #{encoder_forward.6} parent=0 // pred_check
    _
  $region7: #{encoder_forward.6} parent=0 // pred_check_branch
    %12 = sbr.rel (0) target = $region9
  $region8: #{encoder_forward.6} parent=0 // pred_region
    _
  $region9: #{encoder_forward.6} parent=0 // pred_fallthru
    _
  // Predicated region
  $region10: #{encoder_forward.6} parent=0 // pred_check
    _
  $region11: #{encoder_forward.6} parent=0 // pred_check_branch
    %14 = sbr.rel (0) target = $region13
  $region12: #{encoder_forward.6} parent=0 // pred_region
    _
  $region13: #{encoder_forward.6} parent=0 // pred_fallthru
    _
  // Predicated region
  $region14: #{encoder_forward.6} parent=0 // pred_check
    _
  $region15: #{encoder_forward.6} parent=0 // pred_check_branch
    %16 = sbr.rel (0) target = $region17
  $region16: #{encoder_forward.6} parent=0 // pred_region
    _
  $region17: #{encoder_forward.6} parent=0 // pred_fallthru
    _
  %v18 = vld [vmem:[%s0] sm:$0xff]
  %v19 = vld [vmem:[%s0 + $0x8] sm:$0xff]
  %v20 = vld [vmem:[%s0 + $0x10] sm:$0xf]
  %v21 = vld [vmem:[%s0 + $0x14] sm:$0xff]
  %v22 = vld [vmem:[%s0 + $0x1c] sm:$0xff]
  %v23 = vld [vmem:[%s0 + $0x24] sm:$0xf]
  %v24 = vld [vmem:[%s0 + $0x28] sm:$0xff]
  %v25 = vld [vmem:[%s0 + $0x30] sm:$0xff]
  %v26 = vld [vmem:[%s0 + $0x38] sm:$0xf]
  %v27 = vld [vmem:[%s0 + $0x3c] sm:$0xff]
  %v28 = vld [vmem:[%s0 + $0x44] sm:$0xff]
  %v29 = vld [vmem:[%s0 + $0x4c] sm:$0xf]
  %v30 = vld [vmem:[%s1] sm:$0xf]
  %v31 = vld [vmem:[%s1 + $0x4] sm:$0xf]
  %v32 = vld [vmem:[%s1 + $0x8] sm:$0xf]
  %v33 = vld [vmem:[%s1 + $0xc] sm:$0xf]
  %v34 = vld [vmem:[%s1 + $0x10] sm:$0xf]
  %v35 = vld [vmem:[%s1 + $0x14] sm:$0xf]
  %v36 = vld [vmem:[%s1 + $0x18] sm:$0xf]
  %v37 = vld [vmem:[%s1 + $0x1c] sm:$0xf]
  %v38 = vld [vmem:[%s1 + $0x20] sm:$0xf]
  %v39 = vld [vmem:[%s1 + $0x24] sm:$0xf]
  %v40 = vld [vmem:[%s1 + $0x28] sm:$0xf]
  %v41 = vld [vmem:[%s1 + $0x2c] sm:$0xf]
  %v42 = vld [vmem:[%s1 + $0x30] sm:$0xf]
  %v43 = vld [vmem:[%s1 + $0x34] sm:$0xf]
  %v44 = vld [vmem:[%s1 + $0x38] sm:$0xf]
  %v45 = vld [vmem:[%s1 + $0x3c] sm:$0xf]
  %v46 = vld [vmem:[%s1 + $0x40] sm:$0xf]
  %v47 = vld [vmem:[%s1 + $0x44] sm:$0xf]
  %v48 = vld [vmem:[%s1 + $0x48] sm:$0xf]
  %v49 = vld [vmem:[%s1 + $0x4c] sm:$0xf]
  %v50 = vld [vmem:[%s1 + $0x50] sm:$0xf]
  %v51 = vld [vmem:[%s1 + $0x54] sm:$0xf]
  %v52 = vld [vmem:[%s1 + $0x58] sm:$0xf]
  %v53 = vld [vmem:[%s1 + $0x5c] sm:$0xf]
  %v54 = vld [vmem:[%s1 + $0x60] sm:$0xf]
  %v55 = vld [vmem:[%s1 + $0x64] sm:$0xf]
  %v56 = vld [vmem:[%s1 + $0x68] sm:$0xf]
  %v57 = vld [vmem:[%s1 + $0x6c] sm:$0xf]
  %v58 = vld [vmem:[%s1 + $0x70] sm:$0xf]
  %v59 = vld [vmem:[%s1 + $0x74] sm:$0xf]
  %v60 = vld [vmem:[%s1 + $0x78] sm:$0xf]
  %v61 = vld [vmem:[%s1 + $0x7c] sm:$0xf]
  %v62 = vld [vmem:[%s1 + $0x80] sm:$0xf]
  %v63 = vld [vmem:[%s1 + $0x84] sm:$0xf]
  %v64 = vld [vmem:[%s1 + $0x88] sm:$0xf]
  %v65 = vld [vmem:[%s1 + $0x8c] sm:$0xf]
  %v66 = vld [vmem:[%s1 + $0x90] sm:$0xf]
  %v67 = vld [vmem:[%s1 + $0x94] sm:$0xf]
  %v68 = vld [vmem:[%s1 + $0x98] sm:$0xf]
  %v69 = vld [vmem:[%s1 + $0x9c] sm:$0xf]
  %v70 = vld [vmem:[%s1 + $0xa0] sm:$0xf]
  %v71 = vld [vmem:[%s1 + $0xa4] sm:$0xf]
  %v72 = vld [vmem:[%s1 + $0xa8] sm:$0xf]
  %v73 = vld [vmem:[%s1 + $0xac] sm:$0xf]
  %v74 = vld [vmem:[%s1 + $0xb0] sm:$0xf]
  %v75 = vld [vmem:[%s1 + $0xb4] sm:$0xf]
  %v76 = vld [vmem:[%s1 + $0xb8] sm:$0xf]
  %v77 = vld [vmem:[%s1 + $0xbc] sm:$0xf]
  %v78 = vld [vmem:[%s1 + $0xc0] sm:$0xf]
  %v79 = vld [vmem:[%s1 + $0xc4] sm:$0xf]
  %v80 = vld [vmem:[%s1 + $0xc8] sm:$0xf]
  %v81 = vld [vmem:[%s1 + $0xcc] sm:$0xf]
  %v82 = vld [vmem:[%s1 + $0xd0] sm:$0xf]
  %v83 = vld [vmem:[%s1 + $0xd4] sm:$0xf]
  %v84 = vld [vmem:[%s1 + $0xd8] sm:$0xf]
  %v85 = vld [vmem:[%s1 + $0xdc] sm:$0xf]
  %v86 = vld [vmem:[%s1 + $0xe0] sm:$0xf]
  %v87 = vld [vmem:[%s1 + $0xe4] sm:$0xf]
  %v88 = vld [vmem:[%s1 + $0xe8] sm:$0xf]
  %v89 = vld [vmem:[%s1 + $0xec] sm:$0xf]
  %v90 = vld [vmem:[%s1 + $0xf0] sm:$0xf]
  %v91 = vld [vmem:[%s1 + $0xf4] sm:$0xf]
  %v92 = vld [vmem:[%s1 + $0xf8] sm:$0xf]
  %v93 = vld [vmem:[%s1 + $0xfc] sm:$0xf]
  %v94 = vld [vmem:[%s1 + $0x100] sm:$0xf]
  %v95 = vld [vmem:[%s1 + $0x104] sm:$0xf]
  %v96 = vld [vmem:[%s1 + $0x108] sm:$0xf]
  %v97 = vld [vmem:[%s1 + $0x10c] sm:$0xf]
  %v98 = vld [vmem:[%s1 + $0x110] sm:$0xf]
  %v99 = vld [vmem:[%s1 + $0x114] sm:$0xf]
  %v100 = vld [vmem:[%s1 + $0x118] sm:$0xf]
  %v101 = vld [vmem:[%s1 + $0x11c] sm:$0xf]
  %v102 = vld [vmem:[%s1 + $0x120] sm:$0xf]
  %v103 = vld [vmem:[%s1 + $0x124] sm:$0xf]
  %v104 = vld [vmem:[%s1 + $0x128] sm:$0xf]
  %v105 = vld [vmem:[%s1 + $0x12c] sm:$0xf]
  %v106 = vld [vmem:[%s1 + $0x130] sm:$0xf]
  %v107 = vld [vmem:[%s1 + $0x134] sm:$0xf]
  %v108 = vld [vmem:[%s1 + $0x138] sm:$0xf]
  %v109 = vld [vmem:[%s1 + $0x13c] sm:$0xf]
  %v122 = vunpack.c.l.b16 %v18
  %v123 = vunpack.c.h.b16 %v18
  %v124 = vunpack.c.l.b16 %v19
  %v125 = vunpack.c.h.b16 %v19
  %v126 = vunpack.c.l.b16 %v20
  %v127 = vunpack.c.l.b16 %v21
  %v128 = vunpack.c.h.b16 %v21
  %v129 = vunpack.c.l.b16 %v22
  %v130 = vunpack.c.h.b16 %v22
  %v131 = vunpack.c.l.b16 %v23
  %v132 = vunpack.c.l.b16 %v24
  %v133 = vunpack.c.h.b16 %v24
  %v134 = vunpack.c.l.b16 %v25
  %v135 = vunpack.c.h.b16 %v25
  %v136 = vunpack.c.l.b16 %v26
  %v137 = vunpack.c.l.b16 %v27
  %v138 = vunpack.c.h.b16 %v27
  %v139 = vunpack.c.l.b16 %v28
  %v140 = vunpack.c.h.b16 %v28
  %v141 = vunpack.c.l.b16 %v29
  %v142 = vpack.c.b16 %v127, %v122
  %v143 = vpack.c.b16 %v128, %v123
  %v144 = vpack.c.b16 %v129, %v124
  %v145 = vpack.c.b16 %v130, %v125
  %v146 = vpack.c.b16 %v131, %v126
  %v147 = vpack.c.b16 %v137, %v132
  %v148 = vpack.c.b16 %v138, %v133
  %v149 = vpack.c.b16 %v139, %v134
  %v150 = vpack.c.b16 %v140, %v135
  %v151 = vpack.c.b16 %v141, %v136
  %v242 = vunpack.c.l.b16 %v30
  %v243 = vunpack.c.l.b16 %v31
  %v244 = vunpack.c.l.b16 %v32
  %v245 = vunpack.c.l.b16 %v33
  %v246 = vunpack.c.l.b16 %v34
  %v247 = vunpack.c.l.b16 %v35
  %v248 = vunpack.c.l.b16 %v36
  %v249 = vunpack.c.l.b16 %v37
  %v250 = vunpack.c.l.b16 %v38
  %v251 = vunpack.c.l.b16 %v39
  %v252 = vunpack.c.l.b16 %v40
  %v253 = vunpack.c.l.b16 %v41
  %v254 = vunpack.c.l.b16 %v42
  %v255 = vunpack.c.l.b16 %v43
  %v256 = vunpack.c.l.b16 %v44
  %v257 = vunpack.c.l.b16 %v45
  %v258 = vunpack.c.l.b16 %v46
  %v259 = vunpack.c.l.b16 %v47
  %v260 = vunpack.c.l.b16 %v48
  %v261 = vunpack.c.l.b16 %v49
  %v262 = vunpack.c.l.b16 %v50
  %v263 = vunpack.c.l.b16 %v51
  %v264 = vunpack.c.l.b16 %v52
  %v265 = vunpack.c.l.b16 %v53
  %v266 = vunpack.c.l.b16 %v54
  %v267 = vunpack.c.l.b16 %v55
  %v268 = vunpack.c.l.b16 %v56
  %v269 = vunpack.c.l.b16 %v57
  %v270 = vunpack.c.l.b16 %v58
  %v271 = vunpack.c.l.b16 %v59
  %v272 = vunpack.c.l.b16 %v60
  %v273 = vunpack.c.l.b16 %v61
  %v274 = vunpack.c.l.b16 %v62
  %v275 = vunpack.c.l.b16 %v63
  %v276 = vunpack.c.l.b16 %v64
  %v277 = vunpack.c.l.b16 %v65
  %v278 = vunpack.c.l.b16 %v66
  %v279 = vunpack.c.l.b16 %v67
  %v280 = vunpack.c.l.b16 %v68
  %v281 = vunpack.c.l.b16 %v69
  %v282 = vunpack.c.l.b16 %v70
  %v283 = vunpack.c.l.b16 %v71
  %v284 = vunpack.c.l.b16 %v72
  %v285 = vunpack.c.l.b16 %v73
  %v286 = vunpack.c.l.b16 %v74
  %v287 = vunpack.c.l.b16 %v75
  %v288 = vunpack.c.l.b16 %v76
  %v289 = vunpack.c.l.b16 %v77
  %v290 = vunpack.c.l.b16 %v78
  %v291 = vunpack.c.l.b16 %v79
  %v292 = vunpack.c.l.b16 %v80
  %v293 = vunpack.c.l.b16 %v81
  %v294 = vunpack.c.l.b16 %v82
  %v295 = vunpack.c.l.b16 %v83
  %v296 = vunpack.c.l.b16 %v84
  %v297 = vunpack.c.l.b16 %v85
  %v298 = vunpack.c.l.b16 %v86
  %v299 = vunpack.c.l.b16 %v87
  %v300 = vunpack.c.l.b16 %v88
  %v301 = vunpack.c.l.b16 %v89
  %v302 = vunpack.c.l.b16 %v90
  %v303 = vunpack.c.l.b16 %v91
  %v304 = vunpack.c.l.b16 %v92
  %v305 = vunpack.c.l.b16 %v93
  %v306 = vunpack.c.l.b16 %v94
  %v307 = vunpack.c.l.b16 %v95
  %v308 = vunpack.c.l.b16 %v96
  %v309 = vunpack.c.l.b16 %v97
  %v310 = vunpack.c.l.b16 %v98
  %v311 = vunpack.c.l.b16 %v99
  %v312 = vunpack.c.l.b16 %v100
  %v313 = vunpack.c.l.b16 %v101
  %v314 = vunpack.c.l.b16 %v102
  %v315 = vunpack.c.l.b16 %v103
  %v316 = vunpack.c.l.b16 %v104
  %v317 = vunpack.c.l.b16 %v105
  %v318 = vunpack.c.l.b16 %v106
  %v319 = vunpack.c.l.b16 %v107
  %v320 = vunpack.c.l.b16 %v108
  %v321 = vunpack.c.l.b16 %v109
  %v322 = vpack.c.b16 %v243, %v242
  %v323 = vpack.c.b16 %v245, %v244
  %v324 = vpack.c.b16 %v247, %v246
  %v325 = vpack.c.b16 %v249, %v248
  %v326 = vpack.c.b16 %v251, %v250
  %v327 = vpack.c.b16 %v253, %v252
  %v328 = vpack.c.b16 %v255, %v254
  %v329 = vpack.c.b16 %v257, %v256
  %v330 = vpack.c.b16 %v259, %v258
  %v331 = vpack.c.b16 %v261, %v260
  %v332 = vpack.c.b16 %v263, %v262
  %v333 = vpack.c.b16 %v265, %v264
  %v334 = vpack.c.b16 %v267, %v266
  %v335 = vpack.c.b16 %v269, %v268
  %v336 = vpack.c.b16 %v271, %v270
  %v337 = vpack.c.b16 %v273, %v272
  %v338 = vpack.c.b16 %v275, %v274
  %v339 = vpack.c.b16 %v277, %v276
  %v340 = vpack.c.b16 %v279, %v278
  %v341 = vpack.c.b16 %v281, %v280
  %v342 = vpack.c.b16 %v283, %v282
  %v343 = vpack.c.b16 %v285, %v284
  %v344 = vpack.c.b16 %v287, %v286
  %v345 = vpack.c.b16 %v289, %v288
  %v346 = vpack.c.b16 %v291, %v290
  %v347 = vpack.c.b16 %v293, %v292
  %v348 = vpack.c.b16 %v295, %v294
  %v349 = vpack.c.b16 %v297, %v296
  %v350 = vpack.c.b16 %v299, %v298
  %v351 = vpack.c.b16 %v301, %v300
  %v352 = vpack.c.b16 %v303, %v302
  %v353 = vpack.c.b16 %v305, %v304
  %v354 = vpack.c.b16 %v307, %v306
  %v355 = vpack.c.b16 %v309, %v308
  %v356 = vpack.c.b16 %v311, %v310
  %v357 = vpack.c.b16 %v313, %v312
  %v358 = vpack.c.b16 %v315, %v314
  %v359 = vpack.c.b16 %v317, %v316
  %v360 = vpack.c.b16 %v319, %v318
  %v361 = vpack.c.b16 %v321, %v320
  %402 = vmatprep.subr.bf16.mxu0 0
  %403 = vmatpush1.bf16.msra.mxu0 %v322
  %404 = vmatprep.subr.bf16.mxu0 0
  %405 = vmatpush1.bf16.msra.mxu0 %v323
  %406 = vmatprep.subr.bf16.mxu0 0
  %407 = vmatpush1.bf16.msra.mxu0 %v324
  %408 = vmatprep.subr.bf16.mxu0 0
  %409 = vmatpush1.bf16.msra.mxu0 %v325
  %410 = vmatprep.subr.bf16.mxu0 0
  %411 = vmatpush1.bf16.msra.mxu0 %v326
  %412 = vmatprep.subr.bf16.mxu0 0
  %413 = vmatpush1.bf16.msra.mxu0 %v327
  %414 = vmatprep.subr.bf16.mxu0 0
  %415 = vmatpush1.bf16.msra.mxu0 %v328
  %416 = vmatprep.subr.bf16.mxu0 0
  %417 = vmatpush1.bf16.msra.mxu0 %v329
  %418 = vmatprep.subr.bf16.mxu0 0
  %419 = vmatpush1.bf16.msra.mxu0 %v330
  %420 = vmatprep.subr.bf16.mxu0 0
  %421 = vmatpush1.bf16.msra.mxu0 %v331
  %422 = vmatprep.subr.bf16.mxu0 0
  %423 = vmatpush1.bf16.msra.mxu0 %v332
  %424 = vmatprep.subr.bf16.mxu0 0
  %425 = vmatpush1.bf16.msra.mxu0 %v333
  %426 = vmatprep.subr.bf16.mxu0 0
  %427 = vmatpush1.bf16.msra.mxu0 %v334
  %428 = vmatprep.subr.bf16.mxu0 0
  %429 = vmatpush1.bf16.msra.mxu0 %v335
  %430 = vmatprep.subr.bf16.mxu0 0
  %431 = vmatpush1.bf16.msra.mxu0 %v336
  %432 = vmatprep.subr.bf16.mxu0 0
  %433 = vmatpush1.bf16.msra.mxu0 %v337
  %434 = vmatprep.mubr.bf16.mxu0 %v143
  %435 = vmatmul.mubr.bf16.gmra.mrb[0].mxu0 %v142
  %v436 = vpop.f32.mrb[0].mxu0
  %v437 = vadd.f32 0.0, %v436
  %v438 = vpop.f32.mrb[0].mxu0
  %v439 = vpop.f32.mrb[0].mxu0
  %v440 = vadd.f32 0.0, %v439
  %v441 = vpop.f32.mrb[0].mxu0
  %442 = vmatprep.mubr.bf16.mxu0 %v148
  %443 = vmatmul.mubr.bf16.gmra.mrb[0].mxu0 %v147
  %v444 = vpop.f32.mrb[0].mxu0
  %v445 = vadd.f32 0.0, %v444
  %v446 = vpop.f32.mrb[0].mxu0
  %v447 = vpop.f32.mrb[0].mxu0
  %v448 = vadd.f32 0.0, %v447
  %v449 = vpop.f32.mrb[0].mxu0
  %450 = vdwg.mxu0
  %451 = vmatprep.subr.bf16.mxu0 0
  %452 = vmatpush1.bf16.msra.mxu0 %v338
  %453 = vmatprep.subr.bf16.mxu0 0
  %454 = vmatpush1.bf16.msra.mxu0 %v339
  %455 = vmatprep.subr.bf16.mxu0 0
  %456 = vmatpush1.bf16.msra.mxu0 %v340
  %457 = vmatprep.subr.bf16.mxu0 0
  %458 = vmatpush1.bf16.msra.mxu0 %v341
  %459 = vmatprep.subr.bf16.mxu0 0
  %460 = vmatpush1.bf16.msra.mxu0 %v342
  %461 = vmatprep.subr.bf16.mxu0 0
  %462 = vmatpush1.bf16.msra.mxu0 %v343
  %463 = vmatprep.subr.bf16.mxu0 0
  %464 = vmatpush1.bf16.msra.mxu0 %v344
  %465 = vmatprep.subr.bf16.mxu0 0
  %466 = vmatpush1.bf16.msra.mxu0 %v345
  %467 = vmatprep.subr.bf16.mxu0 0
  %468 = vmatpush1.bf16.msra.mxu0 %v346
  %469 = vmatprep.subr.bf16.mxu0 0
  %470 = vmatpush1.bf16.msra.mxu0 %v347
  %471 = vmatprep.subr.bf16.mxu0 0
  %472 = vmatpush1.bf16.msra.mxu0 %v348
  %473 = vmatprep.subr.bf16.mxu0 0
  %474 = vmatpush1.bf16.msra.mxu0 %v349
  %475 = vmatprep.subr.bf16.mxu0 0
  %476 = vmatpush1.bf16.msra.mxu0 %v350
  %477 = vmatprep.subr.bf16.mxu0 0
  %478 = vmatpush1.bf16.msra.mxu0 %v351
  %479 = vmatprep.subr.bf16.mxu0 0
  %480 = vmatpush1.bf16.msra.mxu0 %v352
  %481 = vmatprep.subr.bf16.mxu0 0
  %482 = vmatpush1.bf16.msra.mxu0 %v353
  %483 = vmatprep.mubr.bf16.mxu0 %v145
  %484 = vmatmul.mubr.bf16.gmra.mrb[0].mxu0 %v144
  %v485 = vpop.f32.mrb[0].mxu0
  %v486 = vadd.f32 %v437, %v485
  %v487 = vpop.f32.mrb[0].mxu0
  %v488 = vpop.f32.mrb[0].mxu0
  %v489 = vadd.f32 %v440, %v488
  %v490 = vpop.f32.mrb[0].mxu0
  %491 = vmatprep.mubr.bf16.mxu0 %v150
  %492 = vmatmul.mubr.bf16.gmra.mrb[0].mxu0 %v149
  %v493 = vpop.f32.mrb[0].mxu0
  %v494 = vadd.f32 %v445, %v493
  %v495 = vpop.f32.mrb[0].mxu0
  %v496 = vpop.f32.mrb[0].mxu0
  %v497 = vadd.f32 %v448, %v496
  %v498 = vpop.f32.mrb[0].mxu0
  %499 = vdwg.mxu0
  %500 = vmatprep.subr.bf16.mxu0 0
  %501 = vmatpush1.bf16.msra.mxu0 %v354
  %502 = vmatprep.subr.bf16.mxu0 0
  %503 = vmatpush1.bf16.msra.mxu0 %v355
  %504 = vmatprep.subr.bf16.mxu0 0
  %505 = vmatpush1.bf16.msra.mxu0 %v356
  %506 = vmatprep.subr.bf16.mxu0 0
  %507 = vmatpush1.bf16.msra.mxu0 %v357
  %508 = vmatprep.subr.bf16.mxu0 0
  %509 = vmatpush1.bf16.msra.mxu0 %v358
  %510 = vmatprep.subr.bf16.mxu0 0
  %511 = vmatpush1.bf16.msra.mxu0 %v359
  %512 = vmatprep.subr.bf16.mxu0 0
  %513 = vmatpush1.bf16.msra.mxu0 %v360
  %514 = vmatprep.subr.bf16.mxu0 0
  %515 = vmatpush1.bf16.msra.mxu0 %v361
  %516 = vmatprep.subr.bf16.mxu0 0
  %517 = vmatpush1.bf16.msra.mxu0 0
  %518 = vmatprep.subr.bf16.mxu0 0
  %519 = vmatpush1.bf16.msra.mxu0 0
  %520 = vmatprep.subr.bf16.mxu0 0
  %521 = vmatpush1.bf16.msra.mxu0 0
  %522 = vmatprep.subr.bf16.mxu0 0
  %523 = vmatpush1.bf16.msra.mxu0 0
  %524 = vmatprep.subr.bf16.mxu0 0
  %525 = vmatpush1.bf16.msra.mxu0 0
  %526 = vmatprep.subr.bf16.mxu0 0
  %527 = vmatpush1.bf16.msra.mxu0 0
  %528 = vmatprep.subr.bf16.mxu0 0
  %529 = vmatpush1.bf16.msra.mxu0 0
  %530 = vmatprep.subr.bf16.mxu0 0
  %531 = vmatpush1.bf16.msra.mxu0 0
  %532 = vmatprep.mubr.bf16.mxu0 0
  %533 = vmatmul.mubr.bf16.gmra.mrb[0].mxu0 %v146
  %v534 = vpop.f32.mrb[0].mxu0
  %v535 = vadd.f32 %v486, %v534
  %v536 = vpop.f32.mrb[0].mxu0
  %v537 = vpop.f32.mrb[0].mxu0
  %v538 = vadd.f32 %v489, %v537
  %v539 = vpop.f32.mrb[0].mxu0
  %540 = vmatprep.mubr.bf16.mxu0 0
  %541 = vmatmul.mubr.bf16.gmra.mrb[0].mxu0 %v151
  %v542 = vpop.f32.mrb[0].mxu0
  %v543 = vadd.f32 %v494, %v542
  %v544 = vpop.f32.mrb[0].mxu0
  %v545 = vpop.f32.mrb[0].mxu0
  %v546 = vadd.f32 %v497, %v545
  %v547 = vpop.f32.mrb[0].mxu0
  %548 = vdwg.mxu0
  %v549 = vld [vmem:[%s2] sm:$0x1]
  %v551 = vlaneseq
  %v552 = vshrl.u32 %v551, 7
  %v553 = vsub.s32 0, %v552
  %v554 = vrot.slane %v549, %v553
  %v556 = vmul.f32 %v535, %v554
  %v557 = vmul.f32 %v538, %v554
  %v558 = vmul.f32 %v543, %v554
  %v559 = vmul.f32 %v546, %v554
  %v560 = vld [vmem:[%s3] sm:$0x1]
  %v562 = vlaneseq
  %v563 = vshrl.u32 %v562, 7
  %v564 = vsub.s32 0, %v563
  %v565 = vrot.slane %v560, %v564
  %v567 = vadd.f32 %v556, %v565
  %v568 = vadd.f32 %v557, %v565
  %v569 = vadd.f32 %v558, %v565
  %v570 = vadd.f32 %v559, %v565
  %v571 = vmax.f32 %v567, 0.0
  %v572 = vmax.f32 %v568, 0.0
  %v573 = vmax.f32 %v569, 0.0
  %v574 = vmax.f32 %v570, 0.0
  %v575 = vpack.c.bf16 %v572, %v571
  %v576 = vpack.c.bf16 %v574, %v573
  %v579 = vunpack.c.l.b16 %v575
  %v580 = vunpack.c.h.b16 %v575
  %v581 = vunpack.c.l.b16 %v576
  %v582 = vunpack.c.h.b16 %v576
  %v583 = vpack.c.b16 %v579, %v579
  %v584 = vpack.c.b16 %v580, %v580
  %v585 = vpack.c.b16 %v581, %v581
  %v586 = vpack.c.b16 %v582, %v582
  %591 = vst [vmem:[%s4] sm:$0xf] %v583
  %592 = vst [vmem:[%s4 + $0x4] sm:$0xf] %v584
  %593 = vst [vmem:[%s4 + $0x8] sm:$0xf] %v585
  %594 = vst [vmem:[%s4 + $0xc] sm:$0xf] %v586
  // Predicated region
  $region18: #{encoder_forward.6} parent=0 // pred_check
    _
  $region19: #{encoder_forward.6} parent=0 // pred_check_branch
    %596 = sbr.rel (0) target = $region21
  $region20: #{encoder_forward.6} parent=0 // pred_region
    _
  $region21: #{encoder_forward.6} parent=0 // pred_fallthru
    _
  // Predicated region
  $region22: #{encoder_forward.6} parent=0 // pred_check
    _
  $region23: #{encoder_forward.6} parent=0 // pred_check_branch
    %598 = sbr.rel (0) target = $region25
  $region24: #{encoder_forward.6} parent=0 // pred_region
    _
  $region25: #{encoder_forward.6} parent=0 // pred_fallthru
    _

// kernel: encoder_forward.7
$region0: #{encoder_forward.7}
  #allocation0 [shape = 'u32[]', space=smem, size = 0x4, offset = 0x4, fixed_abs, tag = 'smem constant byte address 0x4 - core index']
  #allocation1 [shape = 'u32[144,128]{1,0:T(1,128)}', space=vmem, size = 0x12000, scoped, tag = 'internal scratch']
  %s0 = inlined_call_operand.vmem [shape: bf16[32,1152], index: 0, kind: input, shape index: {}]
  %s1 = inlined_call_operand.vmem [shape: bf16[1152,128], index: 1, kind: input, shape index: {}]
  %s2 = inlined_call_operand.vmem [shape: f32[1,128], index: 2, kind: input, shape index: {}]
  %s3 = inlined_call_operand.vmem [shape: f32[1,128], index: 3, kind: input, shape index: {}]
  %s4 = inlined_call_operand.vmem [shape: bf16[128,256], index: 4, kind: input, shape index: {}]
  %s5 = inlined_call_operand.vmem [shape: f32[1,256], index: 5, kind: input, shape index: {}]
  %s6 = inlined_call_operand.vmem [shape: f32[1,256], index: 6, kind: input, shape index: {}]
  %s7 = inlined_call_operand.vmem [shape: bf16[32,256], index: 7, kind: output, shape index: {}]
  %s8 = sld [smem:[#allocation0]]
  $region38: #{encoder_forward.7} parent=0
    _
  %s10 = ssub.s32 1, %s8
  %s11 = scalar_select 0, %s10, %s8
  // Predicated region
  $region2: #{encoder_forward.7} parent=0 // pred_check
    _
  $region3: #{encoder_forward.7} parent=0 // pred_check_branch
    %13 = sbr.rel (0) target = $region5
  $region4: #{encoder_forward.7} parent=0 // pred_region
    _
  $region5: #{encoder_forward.7} parent=0 // pred_fallthru
    _
  // Predicated region
  $region6: #{encoder_forward.7} parent=0 // pred_check
    _
  $region7: #{encoder_forward.7} parent=0 // pred_check_branch
    %15 = sbr.rel (0) target = $region9
  $region8: #{encoder_forward.7} parent=0 // pred_region
    _
  $region9: #{encoder_forward.7} parent=0 // pred_fallthru
    _
  // Predicated region
  $region10: #{encoder_forward.7} parent=0 // pred_check
    _
  $region11: #{encoder_forward.7} parent=0 // pred_check_branch
    %17 = sbr.rel (0) target = $region13
  $region12: #{encoder_forward.7} parent=0 // pred_region
    _
  $region13: #{encoder_forward.7} parent=0 // pred_fallthru
    _
  // Predicated region
  $region14: #{encoder_forward.7} parent=0 // pred_check
    _
  $region15: #{encoder_forward.7} parent=0 // pred_check_branch
    %19 = sbr.rel (0) target = $region17
  $region16: #{encoder_forward.7} parent=0 // pred_region
    _
  $region17: #{encoder_forward.7} parent=0 // pred_fallthru
    _
  // Predicated region
  $region18: #{encoder_forward.7} parent=0 // pred_check
    _
  $region19: #{encoder_forward.7} parent=0 // pred_check_branch
    %21 = sbr.rel (0) target = $region21
  $region20: #{encoder_forward.7} parent=0 // pred_region
    _
  $region21: #{encoder_forward.7} parent=0 // pred_fallthru
    _
  // Predicated region
  $region22: #{encoder_forward.7} parent=0 // pred_check
    _
  $region23: #{encoder_forward.7} parent=0 // pred_check_branch
    %23 = sbr.rel (0) target = $region25
  $region24: #{encoder_forward.7} parent=0 // pred_region
    _
  $region25: #{encoder_forward.7} parent=0 // pred_fallthru
    _
  // Predicated region
  $region26: #{encoder_forward.7} parent=0 // pred_check
    _
  $region27: #{encoder_forward.7} parent=0 // pred_check_branch
    %25 = sbr.rel (0) target = $region29
  $region28: #{encoder_forward.7} parent=0 // pred_region
    _
  $region29: #{encoder_forward.7} parent=0 // pred_fallthru
    _
  %v27 = vld [vmem:[%s0] sm:$0xff]
  %v28 = vld [vmem:[%s0 + $0x8] sm:$0xff]
  %v29 = vld [vmem:[%s0 + $0x10] sm:$0xff]
  %v30 = vld [vmem:[%s0 + $0x18] sm:$0xff]
  %v31 = vld [vmem:[%s0 + $0x20] sm:$0xf]
  %v32 = vld [vmem:[%s0 + $0x24] sm:$0xff]
  %v33 = vld [vmem:[%s0 + $0x2c] sm:$0xff]
  %v34 = vld [vmem:[%s0 + $0x34] sm:$0xff]
  %v35 = vld [vmem:[%s0 + $0x3c] sm:$0xff]
  %v36 = vld [vmem:[%s0 + $0x44] sm:$0xf]
  %v37 = vld [vmem:[%s0 + $0x48] sm:$0xff]
  %v38 = vld [vmem:[%s0 + $0x50] sm:$0xff]
  %v39 = vld [vmem:[%s0 + $0x58] sm:$0xff]
  %v40 = vld [vmem:[%s0 + $0x60] sm:$0xff]
  %v41 = vld [vmem:[%s0 + $0x68] sm:$0xf]
  %v42 = vld [vmem:[%s0 + $0x6c] sm:$0xff]
  %v43 = vld [vmem:[%s0 + $0x74] sm:$0xff]
  %v44 = vld [vmem:[%s0 + $0x7c] sm:$0xff]
  %v45 = vld [vmem:[%s0 + $0x84] sm:$0xff]
  %v46 = vld [vmem:[%s0 + $0x8c] sm:$0xf]
  %v47 = vld [vmem:[%s1] sm:$0xf]
  %v48 = vld [vmem:[%s1 + $0x4] sm:$0xf]
  %v49 = vld [vmem:[%s1 + $0x8] sm:$0xf]
  %v50 = vld [vmem:[%s1 + $0xc] sm:$0xf]
  %v51 = vld [vmem:[%s1 + $0x10] sm:$0xf]
  %v52 = vld [vmem:[%s1 + $0x14] sm:$0xf]
  %v53 = vld [vmem:[%s1 + $0x18] sm:$0xf]
  %v54 = vld [vmem:[%s1 + $0x1c] sm:$0xf]
  %v55 = vld [vmem:[%s1 + $0x20] sm:$0xf]
  %v56 = vld [vmem:[%s1 + $0x24] sm:$0xf]
  %v57 = vld [vmem:[%s1 + $0x28] sm:$0xf]
  %v58 = vld [vmem:[%s1 + $0x2c] sm:$0xf]
  %v59 = vld [vmem:[%s1 + $0x30] sm:$0xf]
  %v60 = vld [vmem:[%s1 + $0x34] sm:$0xf]
  %v61 = vld [vmem:[%s1 + $0x38] sm:$0xf]
  %v62 = vld [vmem:[%s1 + $0x3c] sm:$0xf]
  %v63 = vld [vmem:[%s1 + $0x40] sm:$0xf]
  %v64 = vld [vmem:[%s1 + $0x44] sm:$0xf]
  %v65 = vld [vmem:[%s1 + $0x48] sm:$0xf]
  %v66 = vld [vmem:[%s1 + $0x4c] sm:$0xf]
  %v67 = vld [vmem:[%s1 + $0x50] sm:$0xf]
  %v68 = vld [vmem:[%s1 + $0x54] sm:$0xf]
  %v69 = vld [vmem:[%s1 + $0x58] sm:$0xf]
  %v70 = vld [vmem:[%s1 + $0x5c] sm:$0xf]
  %v71 = vld [vmem:[%s1 + $0x60] sm:$0xf]
  %v72 = vld [vmem:[%s1 + $0x64] sm:$0xf]
  %v73 = vld [vmem:[%s1 + $0x68] sm:$0xf]
  %v74 = vld [vmem:[%s1 + $0x6c] sm:$0xf]
  %v75 = vld [vmem:[%s1 + $0x70] sm:$0xf]
  %v76 = vld [vmem:[%s1 + $0x74] sm:$0xf]
  %v77 = vld [vmem:[%s1 + $0x78] sm:$0xf]
  %v78 = vld [vmem:[%s1 + $0x7c] sm:$0xf]
  %v79 = vld [vmem:[%s1 + $0x80] sm:$0xf]
  %v80 = vld [vmem:[%s1 + $0x84] sm:$0xf]
  %v81 = vld [vmem:[%s1 + $0x88] sm:$0xf]
  %v82 = vld [vmem:[%s1 + $0x8c] sm:$0xf]
  %v83 = vld [vmem:[%s1 + $0x90] sm:$0xf]
  %v84 = vld [vmem:[%s1 + $0x94] sm:$0xf]
  %v85 = vld [vmem:[%s1 + $0x98] sm:$0xf]
  %v86 = vld [vmem:[%s1 + $0x9c] sm:$0xf]
  %v87 = vld [vmem:[%s1 + $0xa0] sm:$0xf]
  %v88 = vld [vmem:[%s1 + $0xa4] sm:$0xf]
  %v89 = vld [vmem:[%s1 + $0xa8] sm:$0xf]
  %v90 = vld [vmem:[%s1 + $0xac] sm:$0xf]
  %v91 = vld [vmem:[%s1 + $0xb0] sm:$0xf]
  %v92 = vld [vmem:[%s1 + $0xb4] sm:$0xf]
  %v93 = vld [vmem:[%s1 + $0xb8] sm:$0xf]
  %v94 = vld [vmem:[%s1 + $0xbc] sm:$0xf]
  %v95 = vld [vmem:[%s1 + $0xc0] sm:$0xf]
  %v96 = vld [vmem:[%s1 + $0xc4] sm:$0xf]
  %v97 = vld [vmem:[%s1 + $0xc8] sm:$0xf]
  %v98 = vld [vmem:[%s1 + $0xcc] sm:$0xf]
  %v99 = vld [vmem:[%s1 + $0xd0] sm:$0xf]
  %v100 = vld [vmem:[%s1 + $0xd4] sm:$0xf]
  %v101 = vld [vmem:[%s1 + $0xd8] sm:$0xf]
  %v102 = vld [vmem:[%s1 + $0xdc] sm:$0xf]
  %v103 = vld [vmem:[%s1 + $0xe0] sm:$0xf]
  %v104 = vld [vmem:[%s1 + $0xe4] sm:$0xf]
  %v105 = vld [vmem:[%s1 + $0xe8] sm:$0xf]
  %v106 = vld [vmem:[%s1 + $0xec] sm:$0xf]
  %v107 = vld [vmem:[%s1 + $0xf0] sm:$0xf]
  %v108 = vld [vmem:[%s1 + $0xf4] sm:$0xf]
  %v109 = vld [vmem:[%s1 + $0xf8] sm:$0xf]
  %v110 = vld [vmem:[%s1 + $0xfc] sm:$0xf]
  %v111 = vld [vmem:[%s1 + $0x100] sm:$0xf]
  %v112 = vld [vmem:[%s1 + $0x104] sm:$0xf]
  %v113 = vld [vmem:[%s1 + $0x108] sm:$0xf]
  %v114 = vld [vmem:[%s1 + $0x10c] sm:$0xf]
  %v115 = vld [vmem:[%s1 + $0x110] sm:$0xf]
  %v116 = vld [vmem:[%s1 + $0x114] sm:$0xf]
  %v117 = vld [vmem:[%s1 + $0x118] sm:$0xf]
  %v118 = vld [vmem:[%s1 + $0x11c] sm:$0xf]
  %v119 = vld [vmem:[%s1 + $0x120] sm:$0xf]
  %v120 = vld [vmem:[%s1 + $0x124] sm:$0xf]
  %v121 = vld [vmem:[%s1 + $0x128] sm:$0xf]
  %v122 = vld [vmem:[%s1 + $0x12c] sm:$0xf]
  %v123 = vld [vmem:[%s1 + $0x130] sm:$0xf]
  %v124 = vld [vmem:[%s1 + $0x134] sm:$0xf]
  %v125 = vld [vmem:[%s1 + $0x138] sm:$0xf]
  %v126 = vld [vmem:[%s1 + $0x13c] sm:$0xf]
  %v127 = vld [vmem:[%s1 + $0x140] sm:$0xf]
  %v128 = vld [vmem:[%s1 + $0x144] sm:$0xf]
  %v129 = vld [vmem:[%s1 + $0x148] sm:$0xf]
  %v130 = vld [vmem:[%s1 + $0x14c] sm:$0xf]
  %v131 = vld [vmem:[%s1 + $0x150] sm:$0xf]
  %v132 = vld [vmem:[%s1 + $0x154] sm:$0xf]
  %v133 = vld [vmem:[%s1 + $0x158] sm:$0xf]
  %v134 = vld [vmem:[%s1 + $0x15c] sm:$0xf]
  %v135 = vld [vmem:[%s1 + $0x160] sm:$0xf]
  %v136 = vld [vmem:[%s1 + $0x164] sm:$0xf]
  %v137 = vld [vmem:[%s1 + $0x168] sm:$0xf]
  %v138 = vld [vmem:[%s1 + $0x16c] sm:$0xf]
  %v139 = vld [vmem:[%s1 + $0x170] sm:$0xf]
  %v140 = vld [vmem:[%s1 + $0x174] sm:$0xf]
  %v141 = vld [vmem:[%s1 + $0x178] sm:$0xf]
  %v142 = vld [vmem:[%s1 + $0x17c] sm:$0xf]
  %v143 = vld [vmem:[%s1 + $0x180] sm:$0xf]
  %v144 = vld [vmem:[%s1 + $0x184] sm:$0xf]
  %v145 = vld [vmem:[%s1 + $0x188] sm:$0xf]
  %v146 = vld [vmem:[%s1 + $0x18c] sm:$0xf]
  %v147 = vld [vmem:[%s1 + $0x190] sm:$0xf]
  %v148 = vld [vmem:[%s1 + $0x194] sm:$0xf]
  %v149 = vld [vmem:[%s1 + $0x198] sm:$0xf]
  %v150 = vld [vmem:[%s1 + $0x19c] sm:$0xf]
  %v151 = vld [vmem:[%s1 + $0x1a0] sm:$0xf]
  %v152 = vld [vmem:[%s1 + $0x1a4] sm:$0xf]
  %v153 = vld [vmem:[%s1 + $0x1a8] sm:$0xf]
  %v154 = vld [vmem:[%s1 + $0x1ac] sm:$0xf]
  %v155 = vld [vmem:[%s1 + $0x1b0] sm:$0xf]
  %v156 = vld [vmem:[%s1 + $0x1b4] sm:$0xf]
  %v157 = vld [vmem:[%s1 + $0x1b8] sm:$0xf]
  %v158 = vld [vmem:[%s1 + $0x1bc] sm:$0xf]
  %v159 = vld [vmem:[%s1 + $0x1c0] sm:$0xf]
  %v160 = vld [vmem:[%s1 + $0x1c4] sm:$0xf]
  %v161 = vld [vmem:[%s1 + $0x1c8] sm:$0xf]
  %v162 = vld [vmem:[%s1 + $0x1cc] sm:$0xf]
  %v163 = vld [vmem:[%s1 + $0x1d0] sm:$0xf]
  %v164 = vld [vmem:[%s1 + $0x1d4] sm:$0xf]
  %v165 = vld [vmem:[%s1 + $0x1d8] sm:$0xf]
  %v166 = vld [vmem:[%s1 + $0x1dc] sm:$0xf]
  %v167 = vld [vmem:[%s1 + $0x1e0] sm:$0xf]
  %v168 = vld [vmem:[%s1 + $0x1e4] sm:$0xf]
  %v169 = vld [vmem:[%s1 + $0x1e8] sm:$0xf]
  %v170 = vld [vmem:[%s1 + $0x1ec] sm:$0xf]
  %v171 = vld [vmem:[%s1 + $0x1f0] sm:$0xf]
  %v172 = vld [vmem:[%s1 + $0x1f4] sm:$0xf]
  %v173 = vld [vmem:[%s1 + $0x1f8] sm:$0xf]
  %v174 = vld [vmem:[%s1 + $0x1fc] sm:$0xf]
  %v175 = vld [vmem:[%s1 + $0x200] sm:$0xf]
  %v176 = vld [vmem:[%s1 + $0x204] sm:$0xf]
  %v177 = vld [vmem:[%s1 + $0x208] sm:$0xf]
  %v178 = vld [vmem:[%s1 + $0x20c] sm:$0xf]
  %v179 = vld [vmem:[%s1 + $0x210] sm:$0xf]
  %v180 = vld [vmem:[%s1 + $0x214] sm:$0xf]
  %v181 = vld [vmem:[%s1 + $0x218] sm:$0xf]
  %v182 = vld [vmem:[%s1 + $0x21c] sm:$0xf]
  %v183 = vld [vmem:[%s1 + $0x220] sm:$0xf]
  %v184 = vld [vmem:[%s1 + $0x224] sm:$0xf]
  %v185 = vld [vmem:[%s1 + $0x228] sm:$0xf]
  %v186 = vld [vmem:[%s1 + $0x22c] sm:$0xf]
  %v187 = vld [vmem:[%s1 + $0x230] sm:$0xf]
  %v188 = vld [vmem:[%s1 + $0x234] sm:$0xf]
  %v189 = vld [vmem:[%s1 + $0x238] sm:$0xf]
  %v190 = vld [vmem:[%s1 + $0x23c] sm:$0xf]
  %v211 = vunpack.c.l.b16 %v27
  %v212 = vunpack.c.h.b16 %v27
  %v213 = vunpack.c.l.b16 %v28
  %v214 = vunpack.c.h.b16 %v28
  %v215 = vunpack.c.l.b16 %v29
  %v216 = vunpack.c.h.b16 %v29
  %v217 = vunpack.c.l.b16 %v30
  %v218 = vunpack.c.h.b16 %v30
  %v219 = vunpack.c.l.b16 %v31
  %v220 = vunpack.c.l.b16 %v32
  %v221 = vunpack.c.h.b16 %v32
  %v222 = vunpack.c.l.b16 %v33
  %v223 = vunpack.c.h.b16 %v33
  %v224 = vunpack.c.l.b16 %v34
  %v225 = vunpack.c.h.b16 %v34
  %v226 = vunpack.c.l.b16 %v35
  %v227 = vunpack.c.h.b16 %v35
  %v228 = vunpack.c.l.b16 %v36
  %v229 = vunpack.c.l.b16 %v37
  %v230 = vunpack.c.h.b16 %v37
  %v231 = vunpack.c.l.b16 %v38
  %v232 = vunpack.c.h.b16 %v38
  %v233 = vunpack.c.l.b16 %v39
  %v234 = vunpack.c.h.b16 %v39
  %v235 = vunpack.c.l.b16 %v40
  %v236 = vunpack.c.h.b16 %v40
  %v237 = vunpack.c.l.b16 %v41
  %v238 = vunpack.c.l.b16 %v42
  %v239 = vunpack.c.h.b16 %v42
  %v240 = vunpack.c.l.b16 %v43
  %v241 = vunpack.c.h.b16 %v43
  %v242 = vunpack.c.l.b16 %v44
  %v243 = vunpack.c.h.b16 %v44
  %v244 = vunpack.c.l.b16 %v45
  %v245 = vunpack.c.h.b16 %v45
  %v246 = vunpack.c.l.b16 %v46
  %v247 = vpack.c.b16 %v220, %v211
  %v248 = vpack.c.b16 %v221, %v212
  %v249 = vpack.c.b16 %v222, %v213
  %v250 = vpack.c.b16 %v223, %v214
  %v251 = vpack.c.b16 %v224, %v215
  %v252 = vpack.c.b16 %v225, %v216
  %v253 = vpack.c.b16 %v226, %v217
  %v254 = vpack.c.b16 %v227, %v218
  %v255 = vpack.c.b16 %v228, %v219
  %v256 = vpack.c.b16 %v238, %v229
  %v257 = vpack.c.b16 %v239, %v230
  %v258 = vpack.c.b16 %v240, %v231
  %v259 = vpack.c.b16 %v241, %v232
  %v260 = vpack.c.b16 %v242, %v233
  %v261 = vpack.c.b16 %v243, %v234
  %v262 = vpack.c.b16 %v244, %v235
  %v263 = vpack.c.b16 %v245, %v236
  %v264 = vpack.c.b16 %v246, %v237
  %v427 = vunpack.c.l.b16 %v47
  %v428 = vunpack.c.l.b16 %v48
  %v429 = vunpack.c.l.b16 %v49
  %v430 = vunpack.c.l.b16 %v50
  %v431 = vunpack.c.l.b16 %v51
  %v432 = vunpack.c.l.b16 %v52
  %v433 = vunpack.c.l.b16 %v53
  %v434 = vunpack.c.l.b16 %v54
  %v435 = vunpack.c.l.b16 %v55
  %v436 = vunpack.c.l.b16 %v56
  %v437 = vunpack.c.l.b16 %v57
  %v438 = vunpack.c.l.b16 %v58
  %v439 = vunpack.c.l.b16 %v59
  %v440 = vunpack.c.l.b16 %v60
  %v441 = vunpack.c.l.b16 %v61
  %v442 = vunpack.c.l.b16 %v62
  %v443 = vunpack.c.l.b16 %v63
  %v444 = vunpack.c.l.b16 %v64
  %v445 = vunpack.c.l.b16 %v65
  %v446 = vunpack.c.l.b16 %v66
  %v447 = vunpack.c.l.b16 %v67
  %v448 = vunpack.c.l.b16 %v68
  %v449 = vunpack.c.l.b16 %v69
  %v450 = vunpack.c.l.b16 %v70
  %v451 = vunpack.c.l.b16 %v71
  %v452 = vunpack.c.l.b16 %v72
  %v453 = vunpack.c.l.b16 %v73
  %v454 = vunpack.c.l.b16 %v74
  %v455 = vunpack.c.l.b16 %v75
  %v456 = vunpack.c.l.b16 %v76
  %v457 = vunpack.c.l.b16 %v77
  %v458 = vunpack.c.l.b16 %v78
  %v459 = vunpack.c.l.b16 %v79
  %v460 = vunpack.c.l.b16 %v80
  %v461 = vunpack.c.l.b16 %v81
  %v462 = vunpack.c.l.b16 %v82
  %v463 = vunpack.c.l.b16 %v83
  %v464 = vunpack.c.l.b16 %v84
  %v465 = vunpack.c.l.b16 %v85
  %v466 = vunpack.c.l.b16 %v86
  %v467 = vunpack.c.l.b16 %v87
  %v468 = vunpack.c.l.b16 %v88
  %v469 = vunpack.c.l.b16 %v89
  %v470 = vunpack.c.l.b16 %v90
  %v471 = vunpack.c.l.b16 %v91
  %v472 = vunpack.c.l.b16 %v92
  %v473 = vunpack.c.l.b16 %v93
  %v474 = vunpack.c.l.b16 %v94
  %v475 = vunpack.c.l.b16 %v95
  %v476 = vunpack.c.l.b16 %v96
  %v477 = vunpack.c.l.b16 %v97
  %v478 = vunpack.c.l.b16 %v98
  %v479 = vunpack.c.l.b16 %v99
  %v480 = vunpack.c.l.b16 %v100
  %v481 = vunpack.c.l.b16 %v101
  %v482 = vunpack.c.l.b16 %v102
  %v483 = vunpack.c.l.b16 %v103
  %v484 = vunpack.c.l.b16 %v104
  %v485 = vunpack.c.l.b16 %v105
  %v486 = vunpack.c.l.b16 %v106
  %v487 = vunpack.c.l.b16 %v107
  %v488 = vunpack.c.l.b16 %v108
  %v489 = vunpack.c.l.b16 %v109
  %v490 = vunpack.c.l.b16 %v110
  %v491 = vunpack.c.l.b16 %v111
  %v492 = vunpack.c.l.b16 %v112
  %v493 = vunpack.c.l.b16 %v113
  %v494 = vunpack.c.l.b16 %v114
  %v495 = vunpack.c.l.b16 %v115
  %v496 = vunpack.c.l.b16 %v116
  %v497 = vunpack.c.l.b16 %v117
  %v498 = vunpack.c.l.b16 %v118
  %v499 = vunpack.c.l.b16 %v119
  %v500 = vunpack.c.l.b16 %v120
  %v501 = vunpack.c.l.b16 %v121
  %v502 = vunpack.c.l.b16 %v122
  %v503 = vunpack.c.l.b16 %v123
  %v504 = vunpack.c.l.b16 %v124
  %v505 = vunpack.c.l.b16 %v125
  %v506 = vunpack.c.l.b16 %v126
  %v507 = vunpack.c.l.b16 %v127
  %v508 = vunpack.c.l.b16 %v128
  %v509 = vunpack.c.l.b16 %v129
  %v510 = vunpack.c.l.b16 %v130
  %v511 = vunpack.c.l.b16 %v131
  %v512 = vunpack.c.l.b16 %v132
  %v513 = vunpack.c.l.b16 %v133
  %v514 = vunpack.c.l.b16 %v134
  %v515 = vunpack.c.l.b16 %v135
  %v516 = vunpack.c.l.b16 %v136
  %v517 = vunpack.c.l.b16 %v137
  %v518 = vunpack.c.l.b16 %v138
  %v519 = vunpack.c.l.b16 %v139
  %v520 = vunpack.c.l.b16 %v140
  %v521 = vunpack.c.l.b16 %v141
  %v522 = vunpack.c.l.b16 %v142
  %v523 = vunpack.c.l.b16 %v143
  %v524 = vunpack.c.l.b16 %v144
  %v525 = vunpack.c.l.b16 %v145
  %v526 = vunpack.c.l.b16 %v146
  %v527 = vunpack.c.l.b16 %v147
  %v528 = vunpack.c.l.b16 %v148
  %v529 = vunpack.c.l.b16 %v149
  %v530 = vunpack.c.l.b16 %v150
  %v531 = vunpack.c.l.b16 %v151
  %v532 = vunpack.c.l.b16 %v152
  %v533 = vunpack.c.l.b16 %v153
  %v534 = vunpack.c.l.b16 %v154
  %v535 = vunpack.c.l.b16 %v155
  %v536 = vunpack.c.l.b16 %v156
  %v537 = vunpack.c.l.b16 %v157
  %v538 = vunpack.c.l.b16 %v158
  %v539 = vunpack.c.l.b16 %v159
  %v540 = vunpack.c.l.b16 %v160
  %v541 = vunpack.c.l.b16 %v161
  %v542 = vunpack.c.l.b16 %v162
  %v543 = vunpack.c.l.b16 %v163
  %v544 = vunpack.c.l.b16 %v164
  %v545 = vunpack.c.l.b16 %v165
  %v546 = vunpack.c.l.b16 %v166
  %v547 = vunpack.c.l.b16 %v167
  %v548 = vunpack.c.l.b16 %v168
  %v549 = vunpack.c.l.b16 %v169
  %v550 = vunpack.c.l.b16 %v170
  %v551 = vunpack.c.l.b16 %v171
  %v552 = vunpack.c.l.b16 %v172
  %v553 = vunpack.c.l.b16 %v173
  %v554 = vunpack.c.l.b16 %v174
  %v555 = vunpack.c.l.b16 %v175
  %v556 = vunpack.c.l.b16 %v176
  %v557 = vunpack.c.l.b16 %v177
  %v558 = vunpack.c.l.b16 %v178
  %v559 = vunpack.c.l.b16 %v179
  %v560 = vunpack.c.l.b16 %v180
  %v561 = vunpack.c.l.b16 %v181
  %v562 = vunpack.c.l.b16 %v182
  %v563 = vunpack.c.l.b16 %v183
  %v564 = vunpack.c.l.b16 %v184
  %v565 = vunpack.c.l.b16 %v185
  %v566 = vunpack.c.l.b16 %v186
  %v567 = vunpack.c.l.b16 %v187
  %v568 = vunpack.c.l.b16 %v188
  %v569 = vunpack.c.l.b16 %v189
  %v570 = vunpack.c.l.b16 %v190
  %v571 = vpack.c.b16 %v428, %v427
  %v572 = vpack.c.b16 %v430, %v429
  %v573 = vpack.c.b16 %v432, %v431
  %v574 = vpack.c.b16 %v434, %v433
  %v575 = vpack.c.b16 %v436, %v435
  %v576 = vpack.c.b16 %v438, %v437
  %v577 = vpack.c.b16 %v440, %v439
  %v578 = vpack.c.b16 %v442, %v441
  %v579 = vpack.c.b16 %v444, %v443
  %v580 = vpack.c.b16 %v446, %v445
  %v581 = vpack.c.b16 %v448, %v447
  %v582 = vpack.c.b16 %v450, %v449
  %v583 = vpack.c.b16 %v452, %v451
  %v584 = vpack.c.b16 %v454, %v453
  %v585 = vpack.c.b16 %v456, %v455
  %v586 = vpack.c.b16 %v458, %v457
  %v587 = vpack.c.b16 %v460, %v459
  %v588 = vpack.c.b16 %v462, %v461
  %v589 = vpack.c.b16 %v464, %v463
  %v590 = vpack.c.b16 %v466, %v465
  %v591 = vpack.c.b16 %v468, %v467
  %v592 = vpack.c.b16 %v470, %v469
  %v593 = vpack.c.b16 %v472, %v471
  %v594 = vpack.c.b16 %v474, %v473
  %v595 = vpack.c.b16 %v476, %v475
  %v596 = vpack.c.b16 %v478, %v477
  %v597 = vpack.c.b16 %v480, %v479
  %v598 = vpack.c.b16 %v482, %v481
  %v599 = vpack.c.b16 %v484, %v483
  %v600 = vpack.c.b16 %v486, %v485
  %v601 = vpack.c.b16 %v488, %v487
  %v602 = vpack.c.b16 %v490, %v489
  %v603 = vpack.c.b16 %v492, %v491
  %v604 = vpack.c.b16 %v494, %v493
  %v605 = vpack.c.b16 %v496, %v495
  %v606 = vpack.c.b16 %v498, %v497
  %v607 = vpack.c.b16 %v500, %v499
  %v608 = vpack.c.b16 %v502, %v501
  %v609 = vpack.c.b16 %v504, %v503
  %v610 = vpack.c.b16 %v506, %v505
  %v611 = vpack.c.b16 %v508, %v507
  %v612 = vpack.c.b16 %v510, %v509
  %v613 = vpack.c.b16 %v512, %v511
  %v614 = vpack.c.b16 %v514, %v513
  %v615 = vpack.c.b16 %v516, %v515
  %v616 = vpack.c.b16 %v518, %v517
  %v617 = vpack.c.b16 %v520, %v519
  %v618 = vpack.c.b16 %v522, %v521
  %v619 = vpack.c.b16 %v524, %v523
  %v620 = vpack.c.b16 %v526, %v525
  %v621 = vpack.c.b16 %v528, %v527
  %v622 = vpack.c.b16 %v530, %v529
  %v623 = vpack.c.b16 %v532, %v531
  %v624 = vpack.c.b16 %v534, %v533
  %v625 = vpack.c.b16 %v536, %v535
  %v626 = vpack.c.b16 %v538, %v537
  %v627 = vpack.c.b16 %v540, %v539
  %v628 = vpack.c.b16 %v542, %v541
  %v629 = vpack.c.b16 %v544, %v543
  %v630 = vpack.c.b16 %v546, %v545
  %v631 = vpack.c.b16 %v548, %v547
  %v632 = vpack.c.b16 %v550, %v549
  %v633 = vpack.c.b16 %v552, %v551
  %v634 = vpack.c.b16 %v554, %v553
  %v635 = vpack.c.b16 %v556, %v555
  %v636 = vpack.c.b16 %v558, %v557
  %v637 = vpack.c.b16 %v560, %v559
  %v638 = vpack.c.b16 %v562, %v561
  %v639 = vpack.c.b16 %v564, %v563
  %v640 = vpack.c.b16 %v566, %v565
  %v641 = vpack.c.b16 %v568, %v567
  %v642 = vpack.c.b16 %v570, %v569
  %715 = vmatprep.subr.bf16.mxu0 0
  %716 = vmatpush1.bf16.msra.mxu0 %v571
  %717 = vmatprep.subr.bf16.mxu0 0
  %718 = vmatpush1.bf16.msra.mxu0 %v572
  %719 = vmatprep.subr.bf16.mxu0 0
  %720 = vmatpush1.bf16.msra.mxu0 %v573
  %721 = vmatprep.subr.bf16.mxu0 0
  %722 = vmatpush1.bf16.msra.mxu0 %v574
  %723 = vmatprep.subr.bf16.mxu0 0
  %724 = vmatpush1.bf16.msra.mxu0 %v575
  %725 = vmatprep.subr.bf16.mxu0 0
  %726 = vmatpush1.bf16.msra.mxu0 %v576
  %727 = vmatprep.subr.bf16.mxu0 0
  %728 = vmatpush1.bf16.msra.mxu0 %v577
  %729 = vmatprep.subr.bf16.mxu0 0
  %730 = vmatpush1.bf16.msra.mxu0 %v578
  %731 = vmatprep.subr.bf16.mxu0 0
  %732 = vmatpush1.bf16.msra.mxu0 %v579
  %733 = vmatprep.subr.bf16.mxu0 0
  %734 = vmatpush1.bf16.msra.mxu0 %v580
  %735 = vmatprep.subr.bf16.mxu0 0
  %736 = vmatpush1.bf16.msra.mxu0 %v581
  %737 = vmatprep.subr.bf16.mxu0 0
  %738 = vmatpush1.bf16.msra.mxu0 %v582
  %739 = vmatprep.subr.bf16.mxu0 0
  %740 = vmatpush1.bf16.msra.mxu0 %v583
  %741 = vmatprep.subr.bf16.mxu0 0
  %742 = vmatpush1.bf16.msra.mxu0 %v584
  %743 = vmatprep.subr.bf16.mxu0 0
  %744 = vmatpush1.bf16.msra.mxu0 %v585
  %745 = vmatprep.subr.bf16.mxu0 0
  %746 = vmatpush1.bf16.msra.mxu0 %v586
  %747 = vmatprep.mubr.bf16.mxu0 %v248
  %748 = vmatmul.mubr.bf16.gmra.mrb[0].mxu0 %v247
  %v749 = vpop.f32.mrb[0].mxu0
  %v750 = vadd.f32 0.0, %v749
  %v751 = vpop.f32.mrb[0].mxu0
  %v752 = vpop.f32.mrb[0].mxu0
  %v753 = vadd.f32 0.0, %v752
  %v754 = vpop.f32.mrb[0].mxu0
  %755 = vmatprep.mubr.bf16.mxu0 %v257
  %756 = vmatmul.mubr.bf16.gmra.mrb[0].mxu0 %v256
  %v757 = vpop.f32.mrb[0].mxu0
  %v758 = vadd.f32 0.0, %v757
  %v759 = vpop.f32.mrb[0].mxu0
  %v760 = vpop.f32.mrb[0].mxu0
  %v761 = vadd.f32 0.0, %v760
  %v762 = vpop.f32.mrb[0].mxu0
  %763 = vdwg.mxu0
  %764 = vmatprep.subr.bf16.mxu0 0
  %765 = vmatpush1.bf16.msra.mxu0 %v587
  %766 = vmatprep.subr.bf16.mxu0 0
  %767 = vmatpush1.bf16.msra.mxu0 %v588
  %768 = vmatprep.subr.bf16.mxu0 0
  %769 = vmatpush1.bf16.msra.mxu0 %v589
  %770 = vmatprep.subr.bf16.mxu0 0
  %771 = vmatpush1.bf16.msra.mxu0 %v590
  %772 = vmatprep.subr.bf16.mxu0 0
  %773 = vmatpush1.bf16.msra.mxu0 %v591
  %774 = vmatprep.subr.bf16.mxu0 0
  %775 = vmatpush1.bf16.msra.mxu0 %v592
  %776 = vmatprep.subr.bf16.mxu0 0
  %777 = vmatpush1.bf16.msra.mxu0 %v593
  %778 = vmatprep.subr.bf16.mxu0 0
  %779 = vmatpush1.bf16.msra.mxu0 %v594
  %780 = vmatprep.subr.bf16.mxu0 0
  %781 = vmatpush1.bf16.msra.mxu0 %v595
  %782 = vmatprep.subr.bf16.mxu0 0
  %783 = vmatpush1.bf16.msra.mxu0 %v596
  %784 = vmatprep.subr.bf16.mxu0 0
  %785 = vmatpush1.bf16.msra.mxu0 %v597
  %786 = vmatprep.subr.bf16.mxu0 0
  %787 = vmatpush1.bf16.msra.mxu0 %v598
  %788 = vmatprep.subr.bf16.mxu0 0
  %789 = vmatpush1.bf16.msra.mxu0 %v599
  %790 = vmatprep.subr.bf16.mxu0 0
  %791 = vmatpush1.bf16.msra.mxu0 %v600
  %792 = vmatprep.subr.bf16.mxu0 0
  %793 = vmatpush1.bf16.msra.mxu0 %v601
  %794 = vmatprep.subr.bf16.mxu0 0
  %795 = vmatpush1.bf16.msra.mxu0 %v602
  %796 = vmatprep.mubr.bf16.mxu0 %v250
  %797 = vmatmul.mubr.bf16.gmra.mrb[0].mxu0 %v249
  %v798 = vpop.f32.mrb[0].mxu0
  %v799 = vadd.f32 %v750, %v798
  %v800 = vpop.f32.mrb[0].mxu0
  %v801 = vpop.f32.mrb[0].mxu0
  %v802 = vadd.f32 %v753, %v801
  %v803 = vpop.f32.mrb[0].mxu0
  %804 = vmatprep.mubr.bf16.mxu0 %v259
  %805 = vmatmul.mubr.bf16.gmra.mrb[0].mxu0 %v258
  %v806 = vpop.f32.mrb[0].mxu0
  %v807 = vadd.f32 %v758, %v806
  %v808 = vpop.f32.mrb[0].mxu0
  %v809 = vpop.f32.mrb[0].mxu0
  %v810 = vadd.f32 %v761, %v809
  %v811 = vpop.f32.mrb[0].mxu0
  %812 = vdwg.mxu0
  %813 = vmatprep.subr.bf16.mxu0 0
  %814 = vmatpush1.bf16.msra.mxu0 %v603
  %815 = vmatprep.subr.bf16.mxu0 0
  %816 = vmatpush1.bf16.msra.mxu0 %v604
  %817 = vmatprep.subr.bf16.mxu0 0
  %818 = vmatpush1.bf16.msra.mxu0 %v605
  %819 = vmatprep.subr.bf16.mxu0 0
  %820 = vmatpush1.bf16.msra.mxu0 %v606
  %821 = vmatprep.subr.bf16.mxu0 0
  %822 = vmatpush1.bf16.msra.mxu0 %v607
  %823 = vmatprep.subr.bf16.mxu0 0
  %824 = vmatpush1.bf16.msra.mxu0 %v608
  %825 = vmatprep.subr.bf16.mxu0 0
  %826 = vmatpush1.bf16.msra.mxu0 %v609
  %827 = vmatprep.subr.bf16.mxu0 0
  %828 = vmatpush1.bf16.msra.mxu0 %v610
  %829 = vmatprep.subr.bf16.mxu0 0
  %830 = vmatpush1.bf16.msra.mxu0 %v611
  %831 = vmatprep.subr.bf16.mxu0 0
  %832 = vmatpush1.bf16.msra.mxu0 %v612
  %833 = vmatprep.subr.bf16.mxu0 0
  %834 = vmatpush1.bf16.msra.mxu0 %v613
  %835 = vmatprep.subr.bf16.mxu0 0
  %836 = vmatpush1.bf16.msra.mxu0 %v614
  %837 = vmatprep.subr.bf16.mxu0 0
  %838 = vmatpush1.bf16.msra.mxu0 %v615
  %839 = vmatprep.subr.bf16.mxu0 0
  %840 = vmatpush1.bf16.msra.mxu0 %v616
  %841 = vmatprep.subr.bf16.mxu0 0
  %842 = vmatpush1.bf16.msra.mxu0 %v617
  %843 = vmatprep.subr.bf16.mxu0 0
  %844 = vmatpush1.bf16.msra.mxu0 %v618
  %845 = vmatprep.mubr.bf16.mxu0 %v252
  %846 = vmatmul.mubr.bf16.gmra.mrb[0].mxu0 %v251
  %v847 = vpop.f32.mrb[0].mxu0
  %v848 = vadd.f32 %v799, %v847
  %v849 = vpop.f32.mrb[0].mxu0
  %v850 = vpop.f32.mrb[0].mxu0
  %v851 = vadd.f32 %v802, %v850
  %v852 = vpop.f32.mrb[0].mxu0
  %853 = vmatprep.mubr.bf16.mxu0 %v261
  %854 = vmatmul.mubr.bf16.gmra.mrb[0].mxu0 %v260
  %v855 = vpop.f32.mrb[0].mxu0
  %v856 = vadd.f32 %v807, %v855
  %v857 = vpop.f32.mrb[0].mxu0
  %v858 = vpop.f32.mrb[0].mxu0
  %v859 = vadd.f32 %v810, %v858
  %v860 = vpop.f32.mrb[0].mxu0
  %861 = vdwg.mxu0
  %862 = vmatprep.subr.bf16.mxu0 0
  %863 = vmatpush1.bf16.msra.mxu0 %v619
  %864 = vmatprep.subr.bf16.mxu0 0
  %865 = vmatpush1.bf16.msra.mxu0 %v620
  %866 = vmatprep.subr.bf16.mxu0 0
  %867 = vmatpush1.bf16.msra.mxu0 %v621
  %868 = vmatprep.subr.bf16.mxu0 0
  %869 = vmatpush1.bf16.msra.mxu0 %v622
  %870 = vmatprep.subr.bf16.mxu0 0
  %871 = vmatpush1.bf16.msra.mxu0 %v623
  %872 = vmatprep.subr.bf16.mxu0 0
  %873 = vmatpush1.bf16.msra.mxu0 %v624
  %874 = vmatprep.subr.bf16.mxu0 0
  %875 = vmatpush1.bf16.msra.mxu0 %v625
  %876 = vmatprep.subr.bf16.mxu0 0
  %877 = vmatpush1.bf16.msra.mxu0 %v626
  %878 = vmatprep.subr.bf16.mxu0 0
  %879 = vmatpush1.bf16.msra.mxu0 %v627
  %880 = vmatprep.subr.bf16.mxu0 0
  %881 = vmatpush1.bf16.msra.mxu0 %v628
  %882 = vmatprep.subr.bf16.mxu0 0
  %883 = vmatpush1.bf16.msra.mxu0 %v629
  %884 = vmatprep.subr.bf16.mxu0 0
  %885 = vmatpush1.bf16.msra.mxu0 %v630
  %886 = vmatprep.subr.bf16.mxu0 0
  %887 = vmatpush1.bf16.msra.mxu0 %v631
  %888 = vmatprep.subr.bf16.mxu0 0
  %889 = vmatpush1.bf16.msra.mxu0 %v632
  %890 = vmatprep.subr.bf16.mxu0 0
  %891 = vmatpush1.bf16.msra.mxu0 %v633
  %892 = vmatprep.subr.bf16.mxu0 0
  %893 = vmatpush1.bf16.msra.mxu0 %v634
  %894 = vmatprep.mubr.bf16.mxu0 %v254
  %895 = vmatmul.mubr.bf16.gmra.mrb[0].mxu0 %v253
  %v896 = vpop.f32.mrb[0].mxu0
  %v897 = vadd.f32 %v848, %v896
  %v898 = vpop.f32.mrb[0].mxu0
  %v899 = vpop.f32.mrb[0].mxu0
  %v900 = vadd.f32 %v851, %v899
  %v901 = vpop.f32.mrb[0].mxu0
  %902 = vmatprep.mubr.bf16.mxu0 %v263
  %903 = vmatmul.mubr.bf16.gmra.mrb[0].mxu0 %v262
  %v904 = vpop.f32.mrb[0].mxu0
  %v905 = vadd.f32 %v856, %v904
  %v906 = vpop.f32.mrb[0].mxu0
  %v907 = vpop.f32.mrb[0].mxu0
  %v908 = vadd.f32 %v859, %v907
  %v909 = vpop.f32.mrb[0].mxu0
  %910 = vdwg.mxu0
  %911 = vmatprep.subr.bf16.mxu0 0
  %912 = vmatpush1.bf16.msra.mxu0 %v635
  %913 = vmatprep.subr.bf16.mxu0 0
  %914 = vmatpush1.bf16.msra.mxu0 %v636
  %915 = vmatprep.subr.bf16.mxu0 0
  %916 = vmatpush1.bf16.msra.mxu0 %v637
  %917 = vmatprep.subr.bf16.mxu0 0
  %918 = vmatpush1.bf16.msra.mxu0 %v638
  %919 = vmatprep.subr.bf16.mxu0 0
  %920 = vmatpush1.bf16.msra.mxu0 %v639
  %921 = vmatprep.subr.bf16.mxu0 0
  %922 = vmatpush1.bf16.msra.mxu0 %v640
  %923 = vmatprep.subr.bf16.mxu0 0
  %924 = vmatpush1.bf16.msra.mxu0 %v641
  %925 = vmatprep.subr.bf16.mxu0 0
  %926 = vmatpush1.bf16.msra.mxu0 %v642
  %927 = vmatprep.subr.bf16.mxu0 0
  %928 = vmatpush1.bf16.msra.mxu0 0
  %929 = vmatprep.subr.bf16.mxu0 0
  %930 = vmatpush1.bf16.msra.mxu0 0
  %931 = vmatprep.subr.bf16.mxu0 0
  %932 = vmatpush1.bf16.msra.mxu0 0
  %933 = vmatprep.subr.bf16.mxu0 0
  %934 = vmatpush1.bf16.msra.mxu0 0
  %935 = vmatprep.subr.bf16.mxu0 0
  %936 = vmatpush1.bf16.msra.mxu0 0
  %937 = vmatprep.subr.bf16.mxu0 0
  %938 = vmatpush1.bf16.msra.mxu0 0
  %939 = vmatprep.subr.bf16.mxu0 0
  %940 = vmatpush1.bf16.msra.mxu0 0
  %941 = vmatprep.subr.bf16.mxu0 0
  %942 = vmatpush1.bf16.msra.mxu0 0
  %943 = vmatprep.mubr.bf16.mxu0 0
  %944 = vmatmul.mubr.bf16.gmra.mrb[0].mxu0 %v255
  %v945 = vpop.f32.mrb[0].mxu0
  %v946 = vadd.f32 %v897, %v945
  %v947 = vpop.f32.mrb[0].mxu0
  %v948 = vpop.f32.mrb[0].mxu0
  %v949 = vadd.f32 %v900, %v948
  %v950 = vpop.f32.mrb[0].mxu0
  %951 = vmatprep.mubr.bf16.mxu0 0
  %952 = vmatmul.mubr.bf16.gmra.mrb[0].mxu0 %v264
  %v953 = vpop.f32.mrb[0].mxu0
  %v954 = vadd.f32 %v905, %v953
  %v955 = vpop.f32.mrb[0].mxu0
  %v956 = vpop.f32.mrb[0].mxu0
  %v957 = vadd.f32 %v908, %v956
  %v958 = vpop.f32.mrb[0].mxu0
  %959 = vdwg.mxu0
  %v960 = vld [vmem:[%s2] sm:$0x1]
  %v962 = vlaneseq
  %v963 = vshrl.u32 %v962, 7
  %v964 = vsub.s32 0, %v963
  %v965 = vrot.slane %v960, %v964
  %v967 = vmul.f32 %v946, %v965
  %v968 = vmul.f32 %v949, %v965
  %v969 = vmul.f32 %v954, %v965
  %v970 = vmul.f32 %v957, %v965
  %v971 = vld [vmem:[%s3] sm:$0x1]
  %v973 = vlaneseq
  %v974 = vshrl.u32 %v973, 7
  %v975 = vsub.s32 0, %v974
  %v976 = vrot.slane %v971, %v975
  %v978 = vadd.f32 %v967, %v976
  %v979 = vadd.f32 %v968, %v976
  %v980 = vadd.f32 %v969, %v976
  %v981 = vadd.f32 %v970, %v976
  %v982 = vmax.f32 %v978, 0.0
  %v983 = vmax.f32 %v979, 0.0
  %v984 = vmax.f32 %v980, 0.0
  %v985 = vmax.f32 %v981, 0.0
  %v986 = vpack.c.bf16 %v983, %v982
  %v987 = vpack.c.bf16 %v985, %v984
  %v988 = vld [vmem:[%s4] sm:$0xff]
  %v989 = vld [vmem:[%s4 + $0x8] sm:$0xff]
  %v990 = vld [vmem:[%s4 + $0x10] sm:$0xff]
  %v991 = vld [vmem:[%s4 + $0x18] sm:$0xff]
  %v992 = vld [vmem:[%s4 + $0x20] sm:$0xff]
  %v993 = vld [vmem:[%s4 + $0x28] sm:$0xff]
  %v994 = vld [vmem:[%s4 + $0x30] sm:$0xff]
  %v995 = vld [vmem:[%s4 + $0x38] sm:$0xff]
  %v996 = vld [vmem:[%s4 + $0x40] sm:$0xff]
  %v997 = vld [vmem:[%s4 + $0x48] sm:$0xff]
  %v998 = vld [vmem:[%s4 + $0x50] sm:$0xff]
  %v999 = vld [vmem:[%s4 + $0x58] sm:$0xff]
  %v1000 = vld [vmem:[%s4 + $0x60] sm:$0xff]
  %v1001 = vld [vmem:[%s4 + $0x68] sm:$0xff]
  %v1002 = vld [vmem:[%s4 + $0x70] sm:$0xff]
  %v1003 = vld [vmem:[%s4 + $0x78] sm:$0xff]
  %v1020 = vunpack.c.l.b16 %v988
  %v1021 = vunpack.c.h.b16 %v988
  %v1022 = vunpack.c.l.b16 %v989
  %v1023 = vunpack.c.h.b16 %v989
  %v1024 = vunpack.c.l.b16 %v990
  %v1025 = vunpack.c.h.b16 %v990
  %v1026 = vunpack.c.l.b16 %v991
  %v1027 = vunpack.c.h.b16 %v991
  %v1028 = vunpack.c.l.b16 %v992
  %v1029 = vunpack.c.h.b16 %v992
  %v1030 = vunpack.c.l.b16 %v993
  %v1031 = vunpack.c.h.b16 %v993
  %v1032 = vunpack.c.l.b16 %v994
  %v1033 = vunpack.c.h.b16 %v994
  %v1034 = vunpack.c.l.b16 %v995
  %v1035 = vunpack.c.h.b16 %v995
  %v1036 = vunpack.c.l.b16 %v996
  %v1037 = vunpack.c.h.b16 %v996
  %v1038 = vunpack.c.l.b16 %v997
  %v1039 = vunpack.c.h.b16 %v997
  %v1040 = vunpack.c.l.b16 %v998
  %v1041 = vunpack.c.h.b16 %v998
  %v1042 = vunpack.c.l.b16 %v999
  %v1043 = vunpack.c.h.b16 %v999
  %v1044 = vunpack.c.l.b16 %v1000
  %v1045 = vunpack.c.h.b16 %v1000
  %v1046 = vunpack.c.l.b16 %v1001
  %v1047 = vunpack.c.h.b16 %v1001
  %v1048 = vunpack.c.l.b16 %v1002
  %v1049 = vunpack.c.h.b16 %v1002
  %v1050 = vunpack.c.l.b16 %v1003
  %v1051 = vunpack.c.h.b16 %v1003
  %v1052 = vpack.c.b16 %v1022, %v1020
  %v1053 = vpack.c.b16 %v1023, %v1021
  %v1054 = vpack.c.b16 %v1026, %v1024
  %v1055 = vpack.c.b16 %v1027, %v1025
  %v1056 = vpack.c.b16 %v1030, %v1028
  %v1057 = vpack.c.b16 %v1031, %v1029
  %v1058 = vpack.c.b16 %v1034, %v1032
  %v1059 = vpack.c.b16 %v1035, %v1033
  %v1060 = vpack.c.b16 %v1038, %v1036
  %v1061 = vpack.c.b16 %v1039, %v1037
  %v1062 = vpack.c.b16 %v1042, %v1040
  %v1063 = vpack.c.b16 %v1043, %v1041
  %v1064 = vpack.c.b16 %v1046, %v1044
  %v1065 = vpack.c.b16 %v1047, %v1045
  %v1066 = vpack.c.b16 %v1050, %v1048
  %v1067 = vpack.c.b16 %v1051, %v1049
  %1084 = vmatprep.subr.bf16.mxu0 %v1053
  %1085 = vmatpush1.bf16.msra.mxu0 %v1052
  %1086 = vmatprep.subr.bf16.mxu0 %v1055
  %1087 = vmatpush1.bf16.msra.mxu0 %v1054
  %1088 = vmatprep.subr.bf16.mxu0 %v1057
  %1089 = vmatpush1.bf16.msra.mxu0 %v1056
  %1090 = vmatprep.subr.bf16.mxu0 %v1059
  %1091 = vmatpush1.bf16.msra.mxu0 %v1058
  %1092 = vmatprep.subr.bf16.mxu0 %v1061
  %1093 = vmatpush1.bf16.msra.mxu0 %v1060
  %1094 = vmatprep.subr.bf16.mxu0 %v1063
  %1095 = vmatpush1.bf16.msra.mxu0 %v1062
  %1096 = vmatprep.subr.bf16.mxu0 %v1065
  %1097 = vmatpush1.bf16.msra.mxu0 %v1064
  %1098 = vmatprep.subr.bf16.mxu0 %v1067
  %1099 = vmatpush1.bf16.msra.mxu0 %v1066
  %1100 = vmatprep.subr.bf16.mxu0 0
  %1101 = vmatpush1.bf16.msra.mxu0 0
  %1102 = vmatprep.subr.bf16.mxu0 0
  %1103 = vmatpush1.bf16.msra.mxu0 0
  %1104 = vmatprep.subr.bf16.mxu0 0
  %1105 = vmatpush1.bf16.msra.mxu0 0
  %1106 = vmatprep.subr.bf16.mxu0 0
  %1107 = vmatpush1.bf16.msra.mxu0 0
  %1108 = vmatprep.subr.bf16.mxu0 0
  %1109 = vmatpush1.bf16.msra.mxu0 0
  %1110 = vmatprep.subr.bf16.mxu0 0
  %1111 = vmatpush1.bf16.msra.mxu0 0
  %1112 = vmatprep.subr.bf16.mxu0 0
  %1113 = vmatpush1.bf16.msra.mxu0 0
  %1114 = vmatprep.subr.bf16.mxu0 0
  %1115 = vmatpush1.bf16.msra.mxu0 0
  %1116 = vmatprep.mubr.bf16.mxu0 0
  %1117 = vmatmul.mubr.bf16.gmra.mrb[0].mxu0 %v986
  %v1118 = vpop.f32.mrb[0].mxu0
  %v1119 = vadd.f32 0.0, %v1118
  %v1120 = vpop.f32.mrb[0].mxu0
  %v1121 = vadd.f32 0.0, %v1120
  %v1122 = vpop.f32.mrb[0].mxu0
  %v1123 = vadd.f32 0.0, %v1122
  %v1124 = vpop.f32.mrb[0].mxu0
  %v1125 = vadd.f32 0.0, %v1124
  %1126 = vmatprep.mubr.bf16.mxu0 0
  %1127 = vmatmul.mubr.bf16.gmra.mrb[0].mxu0 %v987
  %v1128 = vpop.f32.mrb[0].mxu0
  %v1129 = vadd.f32 0.0, %v1128
  %v1130 = vpop.f32.mrb[0].mxu0
  %v1131 = vadd.f32 0.0, %v1130
  %v1132 = vpop.f32.mrb[0].mxu0
  %v1133 = vadd.f32 0.0, %v1132
  %v1134 = vpop.f32.mrb[0].mxu0
  %v1135 = vadd.f32 0.0, %v1134
  %1136 = vdwg.mxu0
  %v1137 = vld [vmem:[%s5] sm:$0x3]
  %v1139 = vlaneseq
  %v1140 = vshrl.u32 %v1139, 7
  %v1141 = vsub.s32 0, %v1140
  %v1142 = vrot.slane %v1137, %v1141
  %v1143 = vlaneseq
  %v1144 = vshrl.u32 %v1143, 7
  %v1145 = vsub.s32 1, %v1144
  %v1146 = vrot.slane %v1137, %v1145
  %v1149 = vmul.f32 %v1119, %v1142
  %v1150 = vmul.f32 %v1121, %v1146
  %v1151 = vmul.f32 %v1123, %v1142
  %v1152 = vmul.f32 %v1125, %v1146
  %v1153 = vmul.f32 %v1129, %v1142
  %v1154 = vmul.f32 %v1131, %v1146
  %v1155 = vmul.f32 %v1133, %v1142
  %v1156 = vmul.f32 %v1135, %v1146
  %v1157 = vld [vmem:[%s6] sm:$0x3]
  %v1159 = vlaneseq
  %v1160 = vshrl.u32 %v1159, 7
  %v1161 = vsub.s32 0, %v1160
  %v1162 = vrot.slane %v1157, %v1161
  %v1163 = vlaneseq
  %v1164 = vshrl.u32 %v1163, 7
  %v1165 = vsub.s32 1, %v1164
  %v1166 = vrot.slane %v1157, %v1165
  %v1169 = vadd.f32 %v1149, %v1162
  %v1170 = vadd.f32 %v1150, %v1166
  %v1171 = vadd.f32 %v1151, %v1162
  %v1172 = vadd.f32 %v1152, %v1166
  %v1173 = vadd.f32 %v1153, %v1162
  %v1174 = vadd.f32 %v1154, %v1166
  %v1175 = vadd.f32 %v1155, %v1162
  %v1176 = vadd.f32 %v1156, %v1166
  %v1177 = vpack.c.bf16 %v1171, %v1169
  %v1178 = vpack.c.bf16 %v1172, %v1170
  %v1179 = vpack.c.bf16 %v1175, %v1173
  %v1180 = vpack.c.bf16 %v1176, %v1174
  %v1185 = vunpack.c.l.b16 %v1177
  %v1186 = vunpack.c.l.b16 %v1178
  %v1187 = vunpack.c.h.b16 %v1177
  %v1188 = vunpack.c.h.b16 %v1178
  %v1189 = vunpack.c.l.b16 %v1179
  %v1190 = vunpack.c.l.b16 %v1180
  %v1191 = vunpack.c.h.b16 %v1179
  %v1192 = vunpack.c.h.b16 %v1180
  %v1193 = vpack.c.b16 %v1186, %v1185
  %v1194 = vpack.c.b16 %v1188, %v1187
  %v1195 = vpack.c.b16 %v1190, %v1189
  %v1196 = vpack.c.b16 %v1192, %v1191
  %1201 = vst [vmem:[%s7] sm:$0xff] %v1193
  %1202 = vst [vmem:[%s7 + $0x8] sm:$0xff] %v1194
  %1203 = vst [vmem:[%s7 + $0x10] sm:$0xff] %v1195
  %1204 = vst [vmem:[%s7 + $0x18] sm:$0xff] %v1196
  // Predicated region
  $region30: #{encoder_forward.7} parent=0 // pred_check
    _
  $region31: #{encoder_forward.7} parent=0 // pred_check_branch
    %1206 = sbr.rel (0) target = $region33
  $region32: #{encoder_forward.7} parent=0 // pred_region
    _
  $region33: #{encoder_forward.7} parent=0 // pred_fallthru
    _
  // Predicated region
  $region34: #{encoder_forward.7} parent=0 // pred_check
    _
  $region35: #{encoder_forward.7} parent=0 // pred_check_branch
    %1208 = sbr.rel (0) target = $region37
  $region36: #{encoder_forward.7} parent=0 // pred_region
    _
  $region37: #{encoder_forward.7} parent=0 // pred_fallthru
    _

// kernel: encoder_forward.9
$region0: #{encoder_forward.9}
  #allocation0 [shape = 'u32[]', space=smem, size = 0x4, offset = 0x4, fixed_abs, tag = 'smem constant byte address 0x4 - core index']
  #allocation1 [shape = 'u32[144,128]{1,0:T(1,128)}', space=vmem, size = 0x12000, scoped, tag = 'internal scratch']
  %s0 = inlined_call_operand.vmem [shape: bf16[128,216], index: 0, kind: input, shape index: {}]
  %s1 = inlined_call_operand.vmem [shape: bf16[216,128], index: 1, kind: input, shape index: {}]
  %s2 = inlined_call_operand.vmem [shape: f32[1,128], index: 2, kind: input, shape index: {}]
  %s3 = inlined_call_operand.vmem [shape: f32[1,128], index: 3, kind: input, shape index: {}]
  %s4 = inlined_call_operand.vmem [shape: bf16[128,128], index: 4, kind: output, shape index: {}]
  %s5 = sld [smem:[#allocation0]]
  $region26: #{encoder_forward.9} parent=0
    _
  %s7 = ssub.s32 1, %s5
  %s8 = scalar_select 0, %s7, %s5
  // Predicated region
  $region2: #{encoder_forward.9} parent=0 // pred_check
    _
  $region3: #{encoder_forward.9} parent=0 // pred_check_branch
    %10 = sbr.rel (0) target = $region5
  $region4: #{encoder_forward.9} parent=0 // pred_region
    _
  $region5: #{encoder_forward.9} parent=0 // pred_fallthru
    _
  // Predicated region
  $region6: #{encoder_forward.9} parent=0 // pred_check
    _
  $region7: #{encoder_forward.9} parent=0 // pred_check_branch
    %12 = sbr.rel (0) target = $region9
  $region8: #{encoder_forward.9} parent=0 // pred_region
    _
  $region9: #{encoder_forward.9} parent=0 // pred_fallthru
    _
  // Predicated region
  $region10: #{encoder_forward.9} parent=0 // pred_check
    _
  $region11: #{encoder_forward.9} parent=0 // pred_check_branch
    %14 = sbr.rel (0) target = $region13
  $region12: #{encoder_forward.9} parent=0 // pred_region
    _
  $region13: #{encoder_forward.9} parent=0 // pred_fallthru
    _
  // Predicated region
  $region14: #{encoder_forward.9} parent=0 // pred_check
    _
  $region15: #{encoder_forward.9} parent=0 // pred_check_branch
    %16 = sbr.rel (0) target = $region17
  $region16: #{encoder_forward.9} parent=0 // pred_region
    _
  $region17: #{encoder_forward.9} parent=0 // pred_fallthru
    _
  %v18 = vld [vmem:[%s0] sm:$0xff]
  %v19 = vld [vmem:[%s0 + $0x8] sm:$0xff]
  %v20 = vld [vmem:[%s0 + $0x10] sm:$0xff]
  %v21 = vld [vmem:[%s0 + $0x18] sm:$0xff]
  %v22 = vld [vmem:[%s0 + $0x20] sm:$0xff]
  %v23 = vld [vmem:[%s0 + $0x28] sm:$0xff]
  %v24 = vld [vmem:[%s0 + $0x30] sm:$0xff]
  %v25 = vld [vmem:[%s0 + $0x38] sm:$0xff]
  %v26 = vld [vmem:[%s0 + $0x40] sm:$0xff]
  %v27 = vld [vmem:[%s0 + $0x48] sm:$0xff]
  %v28 = vld [vmem:[%s0 + $0x50] sm:$0xff]
  %v29 = vld [vmem:[%s0 + $0x58] sm:$0xff]
  %v30 = vld [vmem:[%s0 + $0x60] sm:$0xff]
  %v31 = vld [vmem:[%s0 + $0x68] sm:$0xff]
  %v32 = vld [vmem:[%s0 + $0x70] sm:$0xff]
  %v33 = vld [vmem:[%s0 + $0x78] sm:$0xff]
  %v34 = vld [vmem:[%s1] sm:$0xf]
  %v35 = vld [vmem:[%s1 + $0x4] sm:$0xf]
  %v36 = vld [vmem:[%s1 + $0x8] sm:$0xf]
  %v37 = vld [vmem:[%s1 + $0xc] sm:$0xf]
  %v38 = vld [vmem:[%s1 + $0x10] sm:$0xf]
  %v39 = vld [vmem:[%s1 + $0x14] sm:$0xf]
  %v40 = vld [vmem:[%s1 + $0x18] sm:$0xf]
  %v41 = vld [vmem:[%s1 + $0x1c] sm:$0xf]
  %v42 = vld [vmem:[%s1 + $0x20] sm:$0xf]
  %v43 = vld [vmem:[%s1 + $0x24] sm:$0xf]
  %v44 = vld [vmem:[%s1 + $0x28] sm:$0xf]
  %v45 = vld [vmem:[%s1 + $0x2c] sm:$0xf]
  %v46 = vld [vmem:[%s1 + $0x30] sm:$0xf]
  %v47 = vld [vmem:[%s1 + $0x34] sm:$0xf]
  %v48 = vld [vmem:[%s1 + $0x38] sm:$0xf]
  %v49 = vld [vmem:[%s1 + $0x3c] sm:$0xf]
  %v50 = vld [vmem:[%s1 + $0x40] sm:$0xf]
  %v51 = vld [vmem:[%s1 + $0x44] sm:$0xf]
  %v52 = vld [vmem:[%s1 + $0x48] sm:$0xf]
  %v53 = vld [vmem:[%s1 + $0x4c] sm:$0xf]
  %v54 = vld [vmem:[%s1 + $0x50] sm:$0xf]
  %v55 = vld [vmem:[%s1 + $0x54] sm:$0xf]
  %v56 = vld [vmem:[%s1 + $0x58] sm:$0xf]
  %v57 = vld [vmem:[%s1 + $0x5c] sm:$0xf]
  %v58 = vld [vmem:[%s1 + $0x60] sm:$0xf]
  %v59 = vld [vmem:[%s1 + $0x64] sm:$0xf]
  %v60 = vld [vmem:[%s1 + $0x68] sm:$0xf]
  %v77 = vunpack.c.l.b16 %v18
  %v78 = vunpack.c.h.b16 %v18
  %v79 = vunpack.c.l.b16 %v19
  %v80 = vunpack.c.h.b16 %v19
  %v81 = vunpack.c.l.b16 %v20
  %v82 = vunpack.c.h.b16 %v20
  %v83 = vunpack.c.l.b16 %v21
  %v84 = vunpack.c.h.b16 %v21
  %v85 = vunpack.c.l.b16 %v22
  %v86 = vunpack.c.h.b16 %v22
  %v87 = vunpack.c.l.b16 %v23
  %v88 = vunpack.c.h.b16 %v23
  %v89 = vunpack.c.l.b16 %v24
  %v90 = vunpack.c.h.b16 %v24
  %v91 = vunpack.c.l.b16 %v25
  %v92 = vunpack.c.h.b16 %v25
  %v93 = vunpack.c.l.b16 %v26
  %v94 = vunpack.c.h.b16 %v26
  %v95 = vunpack.c.l.b16 %v27
  %v96 = vunpack.c.h.b16 %v27
  %v97 = vunpack.c.l.b16 %v28
  %v98 = vunpack.c.h.b16 %v28
  %v99 = vunpack.c.l.b16 %v29
  %v100 = vunpack.c.h.b16 %v29
  %v101 = vunpack.c.l.b16 %v30
  %v102 = vunpack.c.h.b16 %v30
  %v103 = vunpack.c.l.b16 %v31
  %v104 = vunpack.c.h.b16 %v31
  %v105 = vunpack.c.l.b16 %v32
  %v106 = vunpack.c.h.b16 %v32
  %v107 = vunpack.c.l.b16 %v33
  %v108 = vunpack.c.h.b16 %v33
  %v109 = vpack.c.b16 %v79, %v77
  %v110 = vpack.c.b16 %v80, %v78
  %v111 = vpack.c.b16 %v83, %v81
  %v112 = vpack.c.b16 %v84, %v82
  %v113 = vpack.c.b16 %v87, %v85
  %v114 = vpack.c.b16 %v88, %v86
  %v115 = vpack.c.b16 %v91, %v89
  %v116 = vpack.c.b16 %v92, %v90
  %v117 = vpack.c.b16 %v95, %v93
  %v118 = vpack.c.b16 %v96, %v94
  %v119 = vpack.c.b16 %v99, %v97
  %v120 = vpack.c.b16 %v100, %v98
  %v121 = vpack.c.b16 %v103, %v101
  %v122 = vpack.c.b16 %v104, %v102
  %v123 = vpack.c.b16 %v107, %v105
  %v124 = vpack.c.b16 %v108, %v106
  %v160 = vunpack.c.l.b16 %v34
  %v161 = vunpack.c.l.b16 %v35
  %v162 = vunpack.c.l.b16 %v36
  %v163 = vunpack.c.l.b16 %v37
  %v164 = vunpack.c.l.b16 %v38
  %v165 = vunpack.c.l.b16 %v39
  %v166 = vunpack.c.l.b16 %v40
  %v167 = vunpack.c.l.b16 %v41
  %v168 = vunpack.c.l.b16 %v42
  %v169 = vunpack.c.l.b16 %v43
  %v170 = vunpack.c.l.b16 %v44
  %v171 = vunpack.c.l.b16 %v45
  %v172 = vunpack.c.l.b16 %v46
  %v173 = vunpack.c.l.b16 %v47
  %v174 = vunpack.c.l.b16 %v48
  %v175 = vunpack.c.l.b16 %v49
  %v176 = vunpack.c.l.b16 %v50
  %v177 = vunpack.c.l.b16 %v51
  %v178 = vunpack.c.l.b16 %v52
  %v179 = vunpack.c.l.b16 %v53
  %v180 = vunpack.c.l.b16 %v54
  %v181 = vunpack.c.l.b16 %v55
  %v182 = vunpack.c.l.b16 %v56
  %v183 = vunpack.c.l.b16 %v57
  %v184 = vunpack.c.l.b16 %v58
  %v185 = vunpack.c.l.b16 %v59
  %v186 = vunpack.c.l.b16 %v60
  %v187 = vpack.c.b16 %v161, %v160
  %v188 = vpack.c.b16 %v163, %v162
  %v189 = vpack.c.b16 %v165, %v164
  %v190 = vpack.c.b16 %v167, %v166
  %v191 = vpack.c.b16 %v169, %v168
  %v192 = vpack.c.b16 %v171, %v170
  %v193 = vpack.c.b16 %v173, %v172
  %v194 = vpack.c.b16 %v175, %v174
  %v195 = vpack.c.b16 %v177, %v176
  %v196 = vpack.c.b16 %v179, %v178
  %v197 = vpack.c.b16 %v181, %v180
  %v198 = vpack.c.b16 %v183, %v182
  %v199 = vpack.c.b16 %v185, %v184
  %v200 = vpack.c.b16 %v186, %v186
  %vm214 = vcmask 719872
  %v216 = vsel %vm214, %v110, 0
  %v219 = vsel %vm214, %v112, 0
  %v222 = vsel %vm214, %v114, 0
  %v225 = vsel %vm214, %v116, 0
  %v228 = vsel %vm214, %v118, 0
  %v231 = vsel %vm214, %v120, 0
  %v234 = vsel %vm214, %v122, 0
  %v237 = vsel %vm214, %v124, 0
  %vm239 = vcmask 1043456
  %v241 = vsel %vm239, %v200, 0
  %243 = vmatprep.subr.bf16.mxu0 0
  %244 = vmatpush1.bf16.msra.mxu0 %v187
  %245 = vmatprep.subr.bf16.mxu0 0
  %246 = vmatpush1.bf16.msra.mxu0 %v188
  %247 = vmatprep.subr.bf16.mxu0 0
  %248 = vmatpush1.bf16.msra.mxu0 %v189
  %249 = vmatprep.subr.bf16.mxu0 0
  %250 = vmatpush1.bf16.msra.mxu0 %v190
  %251 = vmatprep.subr.bf16.mxu0 0
  %252 = vmatpush1.bf16.msra.mxu0 %v191
  %253 = vmatprep.subr.bf16.mxu0 0
  %254 = vmatpush1.bf16.msra.mxu0 %v192
  %255 = vmatprep.subr.bf16.mxu0 0
  %256 = vmatpush1.bf16.msra.mxu0 %v193
  %257 = vmatprep.subr.bf16.mxu0 0
  %258 = vmatpush1.bf16.msra.mxu0 %v194
  %259 = vmatprep.subr.bf16.mxu0 0
  %260 = vmatpush1.bf16.msra.mxu0 %v195
  %261 = vmatprep.subr.bf16.mxu0 0
  %262 = vmatpush1.bf16.msra.mxu0 %v196
  %263 = vmatprep.subr.bf16.mxu0 0
  %264 = vmatpush1.bf16.msra.mxu0 %v197
  %265 = vmatprep.subr.bf16.mxu0 0
  %266 = vmatpush1.bf16.msra.mxu0 %v198
  %267 = vmatprep.subr.bf16.mxu0 0
  %268 = vmatpush1.bf16.msra.mxu0 %v199
  %269 = vmatprep.subr.bf16.mxu0 0
  %270 = vmatpush1.bf16.msra.mxu0 %v241
  %271 = vmatprep.subr.bf16.mxu0 0
  %272 = vmatpush1.bf16.msra.mxu0 0
  %273 = vmatprep.subr.bf16.mxu0 0
  %274 = vmatpush1.bf16.msra.mxu0 0
  %275 = vmatprep.mubr.bf16.mxu0 %v216
  %276 = vmatmul.mubr.bf16.gmra.mrb[0].mxu0 %v109
  %v277 = vpop.f32.mrb[0].mxu0
  %v278 = vadd.f32 0.0, %v277
  %v279 = vpop.f32.mrb[0].mxu0
  %v280 = vpop.f32.mrb[0].mxu0
  %v281 = vadd.f32 0.0, %v280
  %v282 = vpop.f32.mrb[0].mxu0
  %283 = vmatprep.mubr.bf16.mxu0 %v219
  %284 = vmatmul.mubr.bf16.gmra.mrb[0].mxu0 %v111
  %v285 = vpop.f32.mrb[0].mxu0
  %v286 = vadd.f32 0.0, %v285
  %v287 = vpop.f32.mrb[0].mxu0
  %v288 = vpop.f32.mrb[0].mxu0
  %v289 = vadd.f32 0.0, %v288
  %v290 = vpop.f32.mrb[0].mxu0
  %291 = vmatprep.mubr.bf16.mxu0 %v222
  %292 = vmatmul.mubr.bf16.gmra.mrb[0].mxu0 %v113
  %v293 = vpop.f32.mrb[0].mxu0
  %v294 = vadd.f32 0.0, %v293
  %v295 = vpop.f32.mrb[0].mxu0
  %v296 = vpop.f32.mrb[0].mxu0
  %v297 = vadd.f32 0.0, %v296
  %v298 = vpop.f32.mrb[0].mxu0
  %299 = vmatprep.mubr.bf16.mxu0 %v225
  %300 = vmatmul.mubr.bf16.gmra.mrb[0].mxu0 %v115
  %v301 = vpop.f32.mrb[0].mxu0
  %v302 = vadd.f32 0.0, %v301
  %v303 = vpop.f32.mrb[0].mxu0
  %v304 = vpop.f32.mrb[0].mxu0
  %v305 = vadd.f32 0.0, %v304
  %v306 = vpop.f32.mrb[0].mxu0
  %307 = vmatprep.mubr.bf16.mxu0 %v228
  %308 = vmatmul.mubr.bf16.gmra.mrb[0].mxu0 %v117
  %v309 = vpop.f32.mrb[0].mxu0
  %v310 = vadd.f32 0.0, %v309
  %v311 = vpop.f32.mrb[0].mxu0
  %v312 = vpop.f32.mrb[0].mxu0
  %v313 = vadd.f32 0.0, %v312
  %v314 = vpop.f32.mrb[0].mxu0
  %315 = vmatprep.mubr.bf16.mxu0 %v231
  %316 = vmatmul.mubr.bf16.gmra.mrb[0].mxu0 %v119
  %v317 = vpop.f32.mrb[0].mxu0
  %v318 = vadd.f32 0.0, %v317
  %v319 = vpop.f32.mrb[0].mxu0
  %v320 = vpop.f32.mrb[0].mxu0
  %v321 = vadd.f32 0.0, %v320
  %v322 = vpop.f32.mrb[0].mxu0
  %323 = vmatprep.mubr.bf16.mxu0 %v234
  %324 = vmatmul.mubr.bf16.gmra.mrb[0].mxu0 %v121
  %v325 = vpop.f32.mrb[0].mxu0
  %v326 = vadd.f32 0.0, %v325
  %v327 = vpop.f32.mrb[0].mxu0
  %v328 = vpop.f32.mrb[0].mxu0
  %v329 = vadd.f32 0.0, %v328
  %v330 = vpop.f32.mrb[0].mxu0
  %331 = vmatprep.mubr.bf16.mxu0 %v237
  %332 = vmatmul.mubr.bf16.gmra.mrb[0].mxu0 %v123
  %v333 = vpop.f32.mrb[0].mxu0
  %v334 = vadd.f32 0.0, %v333
  %v335 = vpop.f32.mrb[0].mxu0
  %v336 = vpop.f32.mrb[0].mxu0
  %v337 = vadd.f32 0.0, %v336
  %v338 = vpop.f32.mrb[0].mxu0
  %339 = vdwg.mxu0
  %v340 = vld [vmem:[%s2] sm:$0x1]
  %v342 = vlaneseq
  %v343 = vshrl.u32 %v342, 7
  %v344 = vsub.s32 0, %v343
  %v345 = vrot.slane %v340, %v344
  %v347 = vmul.f32 %v278, %v345
  %v348 = vmul.f32 %v281, %v345
  %v349 = vmul.f32 %v286, %v345
  %v350 = vmul.f32 %v289, %v345
  %v351 = vmul.f32 %v294, %v345
  %v352 = vmul.f32 %v297, %v345
  %v353 = vmul.f32 %v302, %v345
  %v354 = vmul.f32 %v305, %v345
  %v355 = vmul.f32 %v310, %v345
  %v356 = vmul.f32 %v313, %v345
  %v357 = vmul.f32 %v318, %v345
  %v358 = vmul.f32 %v321, %v345
  %v359 = vmul.f32 %v326, %v345
  %v360 = vmul.f32 %v329, %v345
  %v361 = vmul.f32 %v334, %v345
  %v362 = vmul.f32 %v337, %v345
  %v363 = vld [vmem:[%s3] sm:$0x1]
  %v365 = vlaneseq
  %v366 = vshrl.u32 %v365, 7
  %v367 = vsub.s32 0, %v366
  %v368 = vrot.slane %v363, %v367
  %v370 = vadd.f32 %v347, %v368
  %v371 = vadd.f32 %v348, %v368
  %v372 = vadd.f32 %v349, %v368
  %v373 = vadd.f32 %v350, %v368
  %v374 = vadd.f32 %v351, %v368
  %v375 = vadd.f32 %v352, %v368
  %v376 = vadd.f32 %v353, %v368
  %v377 = vadd.f32 %v354, %v368
  %v378 = vadd.f32 %v355, %v368
  %v379 = vadd.f32 %v356, %v368
  %v380 = vadd.f32 %v357, %v368
  %v381 = vadd.f32 %v358, %v368
  %v382 = vadd.f32 %v359, %v368
  %v383 = vadd.f32 %v360, %v368
  %v384 = vadd.f32 %v361, %v368
  %v385 = vadd.f32 %v362, %v368
  %v386 = vmax.f32 %v370, 0.0
  %v387 = vmax.f32 %v371, 0.0
  %v388 = vmax.f32 %v372, 0.0
  %v389 = vmax.f32 %v373, 0.0
  %v390 = vmax.f32 %v374, 0.0
  %v391 = vmax.f32 %v375, 0.0
  %v392 = vmax.f32 %v376, 0.0
  %v393 = vmax.f32 %v377, 0.0
  %v394 = vmax.f32 %v378, 0.0
  %v395 = vmax.f32 %v379, 0.0
  %v396 = vmax.f32 %v380, 0.0
  %v397 = vmax.f32 %v381, 0.0
  %v398 = vmax.f32 %v382, 0.0
  %v399 = vmax.f32 %v383, 0.0
  %v400 = vmax.f32 %v384, 0.0
  %v401 = vmax.f32 %v385, 0.0
  %v402 = vpack.c.bf16 %v387, %v386
  %v403 = vpack.c.bf16 %v389, %v388
  %v404 = vpack.c.bf16 %v391, %v390
  %v405 = vpack.c.bf16 %v393, %v392
  %v406 = vpack.c.bf16 %v395, %v394
  %v407 = vpack.c.bf16 %v397, %v396
  %v408 = vpack.c.bf16 %v399, %v398
  %v409 = vpack.c.bf16 %v401, %v400
  %v418 = vunpack.c.l.b16 %v402
  %v419 = vunpack.c.h.b16 %v402
  %v420 = vunpack.c.l.b16 %v403
  %v421 = vunpack.c.h.b16 %v403
  %v422 = vunpack.c.l.b16 %v404
  %v423 = vunpack.c.h.b16 %v404
  %v424 = vunpack.c.l.b16 %v405
  %v425 = vunpack.c.h.b16 %v405
  %v426 = vunpack.c.l.b16 %v406
  %v427 = vunpack.c.h.b16 %v406
  %v428 = vunpack.c.l.b16 %v407
  %v429 = vunpack.c.h.b16 %v407
  %v430 = vunpack.c.l.b16 %v408
  %v431 = vunpack.c.h.b16 %v408
  %v432 = vunpack.c.l.b16 %v409
  %v433 = vunpack.c.h.b16 %v409
  %v434 = vpack.c.b16 %v418, %v418
  %v435 = vpack.c.b16 %v419, %v419
  %v436 = vpack.c.b16 %v420, %v420
  %v437 = vpack.c.b16 %v421, %v421
  %v438 = vpack.c.b16 %v422, %v422
  %v439 = vpack.c.b16 %v423, %v423
  %v440 = vpack.c.b16 %v424, %v424
  %v441 = vpack.c.b16 %v425, %v425
  %v442 = vpack.c.b16 %v426, %v426
  %v443 = vpack.c.b16 %v427, %v427
  %v444 = vpack.c.b16 %v428, %v428
  %v445 = vpack.c.b16 %v429, %v429
  %v446 = vpack.c.b16 %v430, %v430
  %v447 = vpack.c.b16 %v431, %v431
  %v448 = vpack.c.b16 %v432, %v432
  %v449 = vpack.c.b16 %v433, %v433
  %466 = vst [vmem:[%s4] sm:$0xf] %v434
  %467 = vst [vmem:[%s4 + $0x4] sm:$0xf] %v435
  %468 = vst [vmem:[%s4 + $0x8] sm:$0xf] %v436
  %469 = vst [vmem:[%s4 + $0xc] sm:$0xf] %v437
  %470 = vst [vmem:[%s4 + $0x10] sm:$0xf] %v438
  %471 = vst [vmem:[%s4 + $0x14] sm:$0xf] %v439
  %472 = vst [vmem:[%s4 + $0x18] sm:$0xf] %v440
  %473 = vst [vmem:[%s4 + $0x1c] sm:$0xf] %v441
  %474 = vst [vmem:[%s4 + $0x20] sm:$0xf] %v442
  %475 = vst [vmem:[%s4 + $0x24] sm:$0xf] %v443
  %476 = vst [vmem:[%s4 + $0x28] sm:$0xf] %v444
  %477 = vst [vmem:[%s4 + $0x2c] sm:$0xf] %v445
  %478 = vst [vmem:[%s4 + $0x30] sm:$0xf] %v446
  %479 = vst [vmem:[%s4 + $0x34] sm:$0xf] %v447
  %480 = vst [vmem:[%s4 + $0x38] sm:$0xf] %v448
  %481 = vst [vmem:[%s4 + $0x3c] sm:$0xf] %v449
  // Predicated region
  $region18: #{encoder_forward.9} parent=0 // pred_check
    _
  $region19: #{encoder_forward.9} parent=0 // pred_check_branch
    %483 = sbr.rel (0) target = $region21
  $region20: #{encoder_forward.9} parent=0 // pred_region
    _
  $region21: #{encoder_forward.9} parent=0 // pred_fallthru
    _
  // Predicated region
  $region22: #{encoder_forward.9} parent=0 // pred_check
    _
  $region23: #{encoder_forward.9} parent=0 // pred_check_branch
    %485 = sbr.rel (0) target = $region25
  $region24: #{encoder_forward.9} parent=0 // pred_region
    _
  $region25: #{encoder_forward.9} parent=0 // pred_fallthru
    _

// kernel: encoder_forward.8
$region0: #{encoder_forward.8}
  #allocation0 [shape = 'u32[]', space=smem, size = 0x4, offset = 0x4, fixed_abs, tag = 'smem constant byte address 0x4 - core index']
  #allocation1 [shape = 'u32[144,128]{1,0:T(1,128)}', space=vmem, size = 0x12000, scoped, tag = 'internal scratch']
  %s0 = inlined_call_operand.vmem [shape: bf16[128,2736], index: 0, kind: input, shape index: {}]
  %s1 = inlined_call_operand.vmem [shape: bf16[2736,128], index: 1, kind: input, shape index: {}]
  %s2 = inlined_call_operand.vmem [shape: f32[1,128], index: 2, kind: input, shape index: {}]
  %s3 = inlined_call_operand.vmem [shape: f32[1,128], index: 3, kind: input, shape index: {}]
  %s4 = inlined_call_operand.vmem [shape: bf16[128,128], index: 4, kind: output, shape index: {}]
  %s5 = sld [smem:[#allocation0]]
  $region26: #{encoder_forward.8} parent=0
    _
  %s7 = ssub.s32 1, %s5
  %s8 = scalar_select 0, %s7, %s5
  // Predicated region
  $region2: #{encoder_forward.8} parent=0 // pred_check
    _
  $region3: #{encoder_forward.8} parent=0 // pred_check_branch
    %10 = sbr.rel (0) target = $region5
  $region4: #{encoder_forward.8} parent=0 // pred_region
    _
  $region5: #{encoder_forward.8} parent=0 // pred_fallthru
    _
  // Predicated region
  $region6: #{encoder_forward.8} parent=0 // pred_check
    _
  $region7: #{encoder_forward.8} parent=0 // pred_check_branch
    %12 = sbr.rel (0) target = $region9
  $region8: #{encoder_forward.8} parent=0 // pred_region
    _
  $region9: #{encoder_forward.8} parent=0 // pred_fallthru
    _
  // Predicated region
  $region10: #{encoder_forward.8} parent=0 // pred_check
    _
  $region11: #{encoder_forward.8} parent=0 // pred_check_branch
    %14 = sbr.rel (0) target = $region13
  $region12: #{encoder_forward.8} parent=0 // pred_region
    _
  $region13: #{encoder_forward.8} parent=0 // pred_fallthru
    _
  // Predicated region
  $region14: #{encoder_forward.8} parent=0 // pred_check
    _
  $region15: #{encoder_forward.8} parent=0 // pred_check_branch
    %16 = sbr.rel (0) target = $region17
  $region16: #{encoder_forward.8} parent=0 // pred_region
    _
  $region17: #{encoder_forward.8} parent=0 // pred_fallthru
    _
  %v18 = vld [vmem:[%s0] sm:$0xff]
  %v19 = vld [vmem:[%s0 + $0x8] sm:$0xff]
  %v20 = vld [vmem:[%s0 + $0x10] sm:$0xff]
  %v21 = vld [vmem:[%s0 + $0x18] sm:$0xff]
  %v22 = vld [vmem:[%s0 + $0x20] sm:$0xff]
  %v23 = vld [vmem:[%s0 + $0x28] sm:$0xff]
  %v24 = vld [vmem:[%s0 + $0x30] sm:$0xff]
  %v25 = vld [vmem:[%s0 + $0x38] sm:$0xff]
  %v26 = vld [vmem:[%s0 + $0x40] sm:$0xff]
  %v27 = vld [vmem:[%s0 + $0x48] sm:$0xff]
  %v28 = vld [vmem:[%s0 + $0x50] sm:$0xff]
  %v29 = vld [vmem:[%s0 + $0x58] sm:$0xff]
  %v30 = vld [vmem:[%s0 + $0x60] sm:$0xff]
  %v31 = vld [vmem:[%s0 + $0x68] sm:$0xff]
  %v32 = vld [vmem:[%s0 + $0x70] sm:$0xff]
  %v33 = vld [vmem:[%s0 + $0x78] sm:$0xff]
  %v34 = vld [vmem:[%s0 + $0x80] sm:$0xff]
  %v35 = vld [vmem:[%s0 + $0x88] sm:$0xff]
  %v36 = vld [vmem:[%s0 + $0x90] sm:$0xff]
  %v37 = vld [vmem:[%s0 + $0x98] sm:$0xff]
  %v38 = vld [vmem:[%s0 + $0xa0] sm:$0xff]
  %v39 = vld [vmem:[%s0 + $0xa8] sm:$0xff]
  %v40 = vld [vmem:[%s0 + $0xb0] sm:$0xff]
  %v41 = vld [vmem:[%s0 + $0xb8] sm:$0xff]
  %v42 = vld [vmem:[%s0 + $0xc0] sm:$0xff]
  %v43 = vld [vmem:[%s0 + $0xc8] sm:$0xff]
  %v44 = vld [vmem:[%s0 + $0xd0] sm:$0xff]
  %v45 = vld [vmem:[%s0 + $0xd8] sm:$0xff]
  %v46 = vld [vmem:[%s0 + $0xe0] sm:$0xff]
  %v47 = vld [vmem:[%s0 + $0xe8] sm:$0xff]
  %v48 = vld [vmem:[%s0 + $0xf0] sm:$0xff]
  %v49 = vld [vmem:[%s0 + $0xf8] sm:$0xff]
  %v50 = vld [vmem:[%s0 + $0x100] sm:$0xff]
  %v51 = vld [vmem:[%s0 + $0x108] sm:$0xff]
  %v52 = vld [vmem:[%s0 + $0x110] sm:$0xff]
  %v53 = vld [vmem:[%s0 + $0x118] sm:$0xff]
  %v54 = vld [vmem:[%s0 + $0x120] sm:$0xff]
  %v55 = vld [vmem:[%s0 + $0x128] sm:$0xff]
  %v56 = vld [vmem:[%s0 + $0x130] sm:$0xff]
  %v57 = vld [vmem:[%s0 + $0x138] sm:$0xff]
  %v58 = vld [vmem:[%s0 + $0x140] sm:$0xff]
  %v59 = vld [vmem:[%s0 + $0x148] sm:$0xff]
  %v60 = vld [vmem:[%s0 + $0x150] sm:$0xff]
  %v61 = vld [vmem:[%s0 + $0x158] sm:$0xff]
  %v62 = vld [vmem:[%s0 + $0x160] sm:$0xff]
  %v63 = vld [vmem:[%s0 + $0x168] sm:$0xff]
  %v64 = vld [vmem:[%s0 + $0x170] sm:$0xff]
  %v65 = vld [vmem:[%s0 + $0x178] sm:$0xff]
  %v66 = vld [vmem:[%s0 + $0x180] sm:$0xff]
  %v67 = vld [vmem:[%s0 + $0x188] sm:$0xff]
  %v68 = vld [vmem:[%s0 + $0x190] sm:$0xff]
  %v69 = vld [vmem:[%s0 + $0x198] sm:$0xff]
  %v70 = vld [vmem:[%s0 + $0x1a0] sm:$0xff]
  %v71 = vld [vmem:[%s0 + $0x1a8] sm:$0xff]
  %v72 = vld [vmem:[%s0 + $0x1b0] sm:$0xff]
  %v73 = vld [vmem:[%s0 + $0x1b8] sm:$0xff]
  %v74 = vld [vmem:[%s0 + $0x1c0] sm:$0xff]
  %v75 = vld [vmem:[%s0 + $0x1c8] sm:$0xff]
  %v76 = vld [vmem:[%s0 + $0x1d0] sm:$0xff]
  %v77 = vld [vmem:[%s0 + $0x1d8] sm:$0xff]
  %v78 = vld [vmem:[%s0 + $0x1e0] sm:$0xff]
  %v79 = vld [vmem:[%s0 + $0x1e8] sm:$0xff]
  %v80 = vld [vmem:[%s0 + $0x1f0] sm:$0xff]
  %v81 = vld [vmem:[%s0 + $0x1f8] sm:$0xff]
  %v82 = vld [vmem:[%s0 + $0x200] sm:$0xff]
  %v83 = vld [vmem:[%s0 + $0x208] sm:$0xff]
  %v84 = vld [vmem:[%s0 + $0x210] sm:$0xff]
  %v85 = vld [vmem:[%s0 + $0x218] sm:$0xff]
  %v86 = vld [vmem:[%s0 + $0x220] sm:$0xff]
  %v87 = vld [vmem:[%s0 + $0x228] sm:$0xff]
  %v88 = vld [vmem:[%s0 + $0x230] sm:$0xff]
  %v89 = vld [vmem:[%s0 + $0x238] sm:$0xff]
  %v90 = vld [vmem:[%s0 + $0x240] sm:$0xff]
  %v91 = vld [vmem:[%s0 + $0x248] sm:$0xff]
  %v92 = vld [vmem:[%s0 + $0x250] sm:$0xff]
  %v93 = vld [vmem:[%s0 + $0x258] sm:$0xff]
  %v94 = vld [vmem:[%s0 + $0x260] sm:$0xff]
  %v95 = vld [vmem:[%s0 + $0x268] sm:$0xff]
  %v96 = vld [vmem:[%s0 + $0x270] sm:$0xff]
  %v97 = vld [vmem:[%s0 + $0x278] sm:$0xff]
  %v98 = vld [vmem:[%s0 + $0x280] sm:$0xff]
  %v99 = vld [vmem:[%s0 + $0x288] sm:$0xff]
  %v100 = vld [vmem:[%s0 + $0x290] sm:$0xff]
  %v101 = vld [vmem:[%s0 + $0x298] sm:$0xff]
  %v102 = vld [vmem:[%s0 + $0x2a0] sm:$0xff]
  %v103 = vld [vmem:[%s0 + $0x2a8] sm:$0xff]
  %v104 = vld [vmem:[%s0 + $0x2b0] sm:$0xff]
  %v105 = vld [vmem:[%s0 + $0x2b8] sm:$0xff]
  %v106 = vld [vmem:[%s0 + $0x2c0] sm:$0xff]
  %v107 = vld [vmem:[%s0 + $0x2c8] sm:$0xff]
  %v108 = vld [vmem:[%s0 + $0x2d0] sm:$0xff]
  %v109 = vld [vmem:[%s0 + $0x2d8] sm:$0xff]
  %v110 = vld [vmem:[%s0 + $0x2e0] sm:$0xff]
  %v111 = vld [vmem:[%s0 + $0x2e8] sm:$0xff]
  %v112 = vld [vmem:[%s0 + $0x2f0] sm:$0xff]
  %v113 = vld [vmem:[%s0 + $0x2f8] sm:$0xff]
  %v114 = vld [vmem:[%s0 + $0x300] sm:$0xff]
  %v115 = vld [vmem:[%s0 + $0x308] sm:$0xff]
  %v116 = vld [vmem:[%s0 + $0x310] sm:$0xff]
  %v117 = vld [vmem:[%s0 + $0x318] sm:$0xff]
  %v118 = vld [vmem:[%s0 + $0x320] sm:$0xff]
  %v119 = vld [vmem:[%s0 + $0x328] sm:$0xff]
  %v120 = vld [vmem:[%s0 + $0x330] sm:$0xff]
  %v121 = vld [vmem:[%s0 + $0x338] sm:$0xff]
  %v122 = vld [vmem:[%s0 + $0x340] sm:$0xff]
  %v123 = vld [vmem:[%s0 + $0x348] sm:$0xff]
  %v124 = vld [vmem:[%s0 + $0x350] sm:$0xff]
  %v125 = vld [vmem:[%s0 + $0x358] sm:$0xff]
  %v126 = vld [vmem:[%s0 + $0x360] sm:$0xff]
  %v127 = vld [vmem:[%s0 + $0x368] sm:$0xff]
  %v128 = vld [vmem:[%s0 + $0x370] sm:$0xff]
  %v129 = vld [vmem:[%s0 + $0x378] sm:$0xff]
  %v130 = vld [vmem:[%s0 + $0x380] sm:$0xff]
  %v131 = vld [vmem:[%s0 + $0x388] sm:$0xff]
  %v132 = vld [vmem:[%s0 + $0x390] sm:$0xff]
  %v133 = vld [vmem:[%s0 + $0x398] sm:$0xff]
  %v134 = vld [vmem:[%s0 + $0x3a0] sm:$0xff]
  %v135 = vld [vmem:[%s0 + $0x3a8] sm:$0xff]
  %v136 = vld [vmem:[%s0 + $0x3b0] sm:$0xff]
  %v137 = vld [vmem:[%s0 + $0x3b8] sm:$0xff]
  %v138 = vld [vmem:[%s0 + $0x3c0] sm:$0xff]
  %v139 = vld [vmem:[%s0 + $0x3c8] sm:$0xff]
  %v140 = vld [vmem:[%s0 + $0x3d0] sm:$0xff]
  %v141 = vld [vmem:[%s0 + $0x3d8] sm:$0xff]
  %v142 = vld [vmem:[%s0 + $0x3e0] sm:$0xff]
  %v143 = vld [vmem:[%s0 + $0x3e8] sm:$0xff]
  %v144 = vld [vmem:[%s0 + $0x3f0] sm:$0xff]
  %v145 = vld [vmem:[%s0 + $0x3f8] sm:$0xff]
  %v146 = vld [vmem:[%s0 + $0x400] sm:$0xff]
  %v147 = vld [vmem:[%s0 + $0x408] sm:$0xff]
  %v148 = vld [vmem:[%s0 + $0x410] sm:$0xff]
  %v149 = vld [vmem:[%s0 + $0x418] sm:$0xff]
  %v150 = vld [vmem:[%s0 + $0x420] sm:$0xff]
  %v151 = vld [vmem:[%s0 + $0x428] sm:$0xff]
  %v152 = vld [vmem:[%s0 + $0x430] sm:$0xff]
  %v153 = vld [vmem:[%s0 + $0x438] sm:$0xff]
  %v154 = vld [vmem:[%s0 + $0x440] sm:$0xff]
  %v155 = vld [vmem:[%s0 + $0x448] sm:$0xff]
  %v156 = vld [vmem:[%s0 + $0x450] sm:$0xff]
  %v157 = vld [vmem:[%s0 + $0x458] sm:$0xff]
  %v158 = vld [vmem:[%s0 + $0x460] sm:$0xff]
  %v159 = vld [vmem:[%s0 + $0x468] sm:$0xff]
  %v160 = vld [vmem:[%s0 + $0x470] sm:$0xff]
  %v161 = vld [vmem:[%s0 + $0x478] sm:$0xff]
  %v162 = vld [vmem:[%s0 + $0x480] sm:$0xff]
  %v163 = vld [vmem:[%s0 + $0x488] sm:$0xff]
  %v164 = vld [vmem:[%s0 + $0x490] sm:$0xff]
  %v165 = vld [vmem:[%s0 + $0x498] sm:$0xff]
  %v166 = vld [vmem:[%s0 + $0x4a0] sm:$0xff]
  %v167 = vld [vmem:[%s0 + $0x4a8] sm:$0xff]
  %v168 = vld [vmem:[%s0 + $0x4b0] sm:$0xff]
  %v169 = vld [vmem:[%s0 + $0x4b8] sm:$0xff]
  %v170 = vld [vmem:[%s0 + $0x4c0] sm:$0xff]
  %v171 = vld [vmem:[%s0 + $0x4c8] sm:$0xff]
  %v172 = vld [vmem:[%s0 + $0x4d0] sm:$0xff]
  %v173 = vld [vmem:[%s0 + $0x4d8] sm:$0xff]
  %v174 = vld [vmem:[%s0 + $0x4e0] sm:$0xff]
  %v175 = vld [vmem:[%s0 + $0x4e8] sm:$0xff]
  %v176 = vld [vmem:[%s0 + $0x4f0] sm:$0xff]
  %v177 = vld [vmem:[%s0 + $0x4f8] sm:$0xff]
  %v178 = vld [vmem:[%s0 + $0x500] sm:$0xff]
  %v179 = vld [vmem:[%s0 + $0x508] sm:$0xff]
  %v180 = vld [vmem:[%s0 + $0x510] sm:$0xff]
  %v181 = vld [vmem:[%s0 + $0x518] sm:$0xff]
  %v182 = vld [vmem:[%s0 + $0x520] sm:$0xff]
  %v183 = vld [vmem:[%s0 + $0x528] sm:$0xff]
  %v184 = vld [vmem:[%s0 + $0x530] sm:$0xff]
  %v185 = vld [vmem:[%s0 + $0x538] sm:$0xff]
  %v186 = vld [vmem:[%s0 + $0x540] sm:$0xff]
  %v187 = vld [vmem:[%s0 + $0x548] sm:$0xff]
  %v188 = vld [vmem:[%s0 + $0x550] sm:$0xff]
  %v189 = vld [vmem:[%s0 + $0x558] sm:$0xff]
  %v190 = vld [vmem:[%s0 + $0x560] sm:$0xff]
  %v191 = vld [vmem:[%s0 + $0x568] sm:$0xff]
  %v192 = vld [vmem:[%s0 + $0x570] sm:$0xff]
  %v193 = vld [vmem:[%s0 + $0x578] sm:$0xff]
  %v194 = vld [vmem:[%s1] sm:$0xf]
  %v195 = vld [vmem:[%s1 + $0x4] sm:$0xf]
  %v196 = vld [vmem:[%s1 + $0x8] sm:$0xf]
  %v197 = vld [vmem:[%s1 + $0xc] sm:$0xf]
  %v198 = vld [vmem:[%s1 + $0x10] sm:$0xf]
  %v199 = vld [vmem:[%s1 + $0x14] sm:$0xf]
  %v200 = vld [vmem:[%s1 + $0x18] sm:$0xf]
  %v201 = vld [vmem:[%s1 + $0x1c] sm:$0xf]
  %v202 = vld [vmem:[%s1 + $0x20] sm:$0xf]
  %v203 = vld [vmem:[%s1 + $0x24] sm:$0xf]
  %v204 = vld [vmem:[%s1 + $0x28] sm:$0xf]
  %v205 = vld [vmem:[%s1 + $0x2c] sm:$0xf]
  %v206 = vld [vmem:[%s1 + $0x30] sm:$0xf]
  %v207 = vld [vmem:[%s1 + $0x34] sm:$0xf]
  %v208 = vld [vmem:[%s1 + $0x38] sm:$0xf]
  %v209 = vld [vmem:[%s1 + $0x3c] sm:$0xf]
  %v210 = vld [vmem:[%s1 + $0x40] sm:$0xf]
  %v211 = vld [vmem:[%s1 + $0x44] sm:$0xf]
  %v212 = vld [vmem:[%s1 + $0x48] sm:$0xf]
  %v213 = vld [vmem:[%s1 + $0x4c] sm:$0xf]
  %v214 = vld [vmem:[%s1 + $0x50] sm:$0xf]
  %v215 = vld [vmem:[%s1 + $0x54] sm:$0xf]
  %v216 = vld [vmem:[%s1 + $0x58] sm:$0xf]
  %v217 = vld [vmem:[%s1 + $0x5c] sm:$0xf]
  %v218 = vld [vmem:[%s1 + $0x60] sm:$0xf]
  %v219 = vld [vmem:[%s1 + $0x64] sm:$0xf]
  %v220 = vld [vmem:[%s1 + $0x68] sm:$0xf]
  %v221 = vld [vmem:[%s1 + $0x6c] sm:$0xf]
  %v222 = vld [vmem:[%s1 + $0x70] sm:$0xf]
  %v223 = vld [vmem:[%s1 + $0x74] sm:$0xf]
  %v224 = vld [vmem:[%s1 + $0x78] sm:$0xf]
  %v225 = vld [vmem:[%s1 + $0x7c] sm:$0xf]
  %v226 = vld [vmem:[%s1 + $0x80] sm:$0xf]
  %v227 = vld [vmem:[%s1 + $0x84] sm:$0xf]
  %v228 = vld [vmem:[%s1 + $0x88] sm:$0xf]
  %v229 = vld [vmem:[%s1 + $0x8c] sm:$0xf]
  %v230 = vld [vmem:[%s1 + $0x90] sm:$0xf]
  %v231 = vld [vmem:[%s1 + $0x94] sm:$0xf]
  %v232 = vld [vmem:[%s1 + $0x98] sm:$0xf]
  %v233 = vld [vmem:[%s1 + $0x9c] sm:$0xf]
  %v234 = vld [vmem:[%s1 + $0xa0] sm:$0xf]
  %v235 = vld [vmem:[%s1 + $0xa4] sm:$0xf]
  %v236 = vld [vmem:[%s1 + $0xa8] sm:$0xf]
  %v237 = vld [vmem:[%s1 + $0xac] sm:$0xf]
  %v238 = vld [vmem:[%s1 + $0xb0] sm:$0xf]
  %v239 = vld [vmem:[%s1 + $0xb4] sm:$0xf]
  %v240 = vld [vmem:[%s1 + $0xb8] sm:$0xf]
  %v241 = vld [vmem:[%s1 + $0xbc] sm:$0xf]
  %v242 = vld [vmem:[%s1 + $0xc0] sm:$0xf]
  %v243 = vld [vmem:[%s1 + $0xc4] sm:$0xf]
  %v244 = vld [vmem:[%s1 + $0xc8] sm:$0xf]
  %v245 = vld [vmem:[%s1 + $0xcc] sm:$0xf]
  %v246 = vld [vmem:[%s1 + $0xd0] sm:$0xf]
  %v247 = vld [vmem:[%s1 + $0xd4] sm:$0xf]
  %v248 = vld [vmem:[%s1 + $0xd8] sm:$0xf]
  %v249 = vld [vmem:[%s1 + $0xdc] sm:$0xf]
  %v250 = vld [vmem:[%s1 + $0xe0] sm:$0xf]
  %v251 = vld [vmem:[%s1 + $0xe4] sm:$0xf]
  %v252 = vld [vmem:[%s1 + $0xe8] sm:$0xf]
  %v253 = vld [vmem:[%s1 + $0xec] sm:$0xf]
  %v254 = vld [vmem:[%s1 + $0xf0] sm:$0xf]
  %v255 = vld [vmem:[%s1 + $0xf4] sm:$0xf]
  %v256 = vld [vmem:[%s1 + $0xf8] sm:$0xf]
  %v257 = vld [vmem:[%s1 + $0xfc] sm:$0xf]
  %v258 = vld [vmem:[%s1 + $0x100] sm:$0xf]
  %v259 = vld [vmem:[%s1 + $0x104] sm:$0xf]
  %v260 = vld [vmem:[%s1 + $0x108] sm:$0xf]
  %v261 = vld [vmem:[%s1 + $0x10c] sm:$0xf]
  %v262 = vld [vmem:[%s1 + $0x110] sm:$0xf]
  %v263 = vld [vmem:[%s1 + $0x114] sm:$0xf]
  %v264 = vld [vmem:[%s1 + $0x118] sm:$0xf]
  %v265 = vld [vmem:[%s1 + $0x11c] sm:$0xf]
  %v266 = vld [vmem:[%s1 + $0x120] sm:$0xf]
  %v267 = vld [vmem:[%s1 + $0x124] sm:$0xf]
  %v268 = vld [vmem:[%s1 + $0x128] sm:$0xf]
  %v269 = vld [vmem:[%s1 + $0x12c] sm:$0xf]
  %v270 = vld [vmem:[%s1 + $0x130] sm:$0xf]
  %v271 = vld [vmem:[%s1 + $0x134] sm:$0xf]
  %v272 = vld [vmem:[%s1 + $0x138] sm:$0xf]
  %v273 = vld [vmem:[%s1 + $0x13c] sm:$0xf]
  %v274 = vld [vmem:[%s1 + $0x140] sm:$0xf]
  %v275 = vld [vmem:[%s1 + $0x144] sm:$0xf]
  %v276 = vld [vmem:[%s1 + $0x148] sm:$0xf]
  %v277 = vld [vmem:[%s1 + $0x14c] sm:$0xf]
  %v278 = vld [vmem:[%s1 + $0x150] sm:$0xf]
  %v279 = vld [vmem:[%s1 + $0x154] sm:$0xf]
  %v280 = vld [vmem:[%s1 + $0x158] sm:$0xf]
  %v281 = vld [vmem:[%s1 + $0x15c] sm:$0xf]
  %v282 = vld [vmem:[%s1 + $0x160] sm:$0xf]
  %v283 = vld [vmem:[%s1 + $0x164] sm:$0xf]
  %v284 = vld [vmem:[%s1 + $0x168] sm:$0xf]
  %v285 = vld [vmem:[%s1 + $0x16c] sm:$0xf]
  %v286 = vld [vmem:[%s1 + $0x170] sm:$0xf]
  %v287 = vld [vmem:[%s1 + $0x174] sm:$0xf]
  %v288 = vld [vmem:[%s1 + $0x178] sm:$0xf]
  %v289 = vld [vmem:[%s1 + $0x17c] sm:$0xf]
  %v290 = vld [vmem:[%s1 + $0x180] sm:$0xf]
  %v291 = vld [vmem:[%s1 + $0x184] sm:$0xf]
  %v292 = vld [vmem:[%s1 + $0x188] sm:$0xf]
  %v293 = vld [vmem:[%s1 + $0x18c] sm:$0xf]
  %v294 = vld [vmem:[%s1 + $0x190] sm:$0xf]
  %v295 = vld [vmem:[%s1 + $0x194] sm:$0xf]
  %v296 = vld [vmem:[%s1 + $0x198] sm:$0xf]
  %v297 = vld [vmem:[%s1 + $0x19c] sm:$0xf]
  %v298 = vld [vmem:[%s1 + $0x1a0] sm:$0xf]
  %v299 = vld [vmem:[%s1 + $0x1a4] sm:$0xf]
  %v300 = vld [vmem:[%s1 + $0x1a8] sm:$0xf]
  %v301 = vld [vmem:[%s1 + $0x1ac] sm:$0xf]
  %v302 = vld [vmem:[%s1 + $0x1b0] sm:$0xf]
  %v303 = vld [vmem:[%s1 + $0x1b4] sm:$0xf]
  %v304 = vld [vmem:[%s1 + $0x1b8] sm:$0xf]
  %v305 = vld [vmem:[%s1 + $0x1bc] sm:$0xf]
  %v306 = vld [vmem:[%s1 + $0x1c0] sm:$0xf]
  %v307 = vld [vmem:[%s1 + $0x1c4] sm:$0xf]
  %v308 = vld [vmem:[%s1 + $0x1c8] sm:$0xf]
  %v309 = vld [vmem:[%s1 + $0x1cc] sm:$0xf]
  %v310 = vld [vmem:[%s1 + $0x1d0] sm:$0xf]
  %v311 = vld [vmem:[%s1 + $0x1d4] sm:$0xf]
  %v312 = vld [vmem:[%s1 + $0x1d8] sm:$0xf]
  %v313 = vld [vmem:[%s1 + $0x1dc] sm:$0xf]
  %v314 = vld [vmem:[%s1 + $0x1e0] sm:$0xf]
  %v315 = vld [vmem:[%s1 + $0x1e4] sm:$0xf]
  %v316 = vld [vmem:[%s1 + $0x1e8] sm:$0xf]
  %v317 = vld [vmem:[%s1 + $0x1ec] sm:$0xf]
  %v318 = vld [vmem:[%s1 + $0x1f0] sm:$0xf]
  %v319 = vld [vmem:[%s1 + $0x1f4] sm:$0xf]
  %v320 = vld [vmem:[%s1 + $0x1f8] sm:$0xf]
  %v321 = vld [vmem:[%s1 + $0x1fc] sm:$0xf]
  %v322 = vld [vmem:[%s1 + $0x200] sm:$0xf]
  %v323 = vld [vmem:[%s1 + $0x204] sm:$0xf]
  %v324 = vld [vmem:[%s1 + $0x208] sm:$0xf]
  %v325 = vld [vmem:[%s1 + $0x20c] sm:$0xf]
  %v326 = vld [vmem:[%s1 + $0x210] sm:$0xf]
  %v327 = vld [vmem:[%s1 + $0x214] sm:$0xf]
  %v328 = vld [vmem:[%s1 + $0x218] sm:$0xf]
  %v329 = vld [vmem:[%s1 + $0x21c] sm:$0xf]
  %v330 = vld [vmem:[%s1 + $0x220] sm:$0xf]
  %v331 = vld [vmem:[%s1 + $0x224] sm:$0xf]
  %v332 = vld [vmem:[%s1 + $0x228] sm:$0xf]
  %v333 = vld [vmem:[%s1 + $0x22c] sm:$0xf]
  %v334 = vld [vmem:[%s1 + $0x230] sm:$0xf]
  %v335 = vld [vmem:[%s1 + $0x234] sm:$0xf]
  %v336 = vld [vmem:[%s1 + $0x238] sm:$0xf]
  %v337 = vld [vmem:[%s1 + $0x23c] sm:$0xf]
  %v338 = vld [vmem:[%s1 + $0x240] sm:$0xf]
  %v339 = vld [vmem:[%s1 + $0x244] sm:$0xf]
  %v340 = vld [vmem:[%s1 + $0x248] sm:$0xf]
  %v341 = vld [vmem:[%s1 + $0x24c] sm:$0xf]
  %v342 = vld [vmem:[%s1 + $0x250] sm:$0xf]
  %v343 = vld [vmem:[%s1 + $0x254] sm:$0xf]
  %v344 = vld [vmem:[%s1 + $0x258] sm:$0xf]
  %v345 = vld [vmem:[%s1 + $0x25c] sm:$0xf]
  %v346 = vld [vmem:[%s1 + $0x260] sm:$0xf]
  %v347 = vld [vmem:[%s1 + $0x264] sm:$0xf]
  %v348 = vld [vmem:[%s1 + $0x268] sm:$0xf]
  %v349 = vld [vmem:[%s1 + $0x26c] sm:$0xf]
  %v350 = vld [vmem:[%s1 + $0x270] sm:$0xf]
  %v351 = vld [vmem:[%s1 + $0x274] sm:$0xf]
  %v352 = vld [vmem:[%s1 + $0x278] sm:$0xf]
  %v353 = vld [vmem:[%s1 + $0x27c] sm:$0xf]
  %v354 = vld [vmem:[%s1 + $0x280] sm:$0xf]
  %v355 = vld [vmem:[%s1 + $0x284] sm:$0xf]
  %v356 = vld [vmem:[%s1 + $0x288] sm:$0xf]
  %v357 = vld [vmem:[%s1 + $0x28c] sm:$0xf]
  %v358 = vld [vmem:[%s1 + $0x290] sm:$0xf]
  %v359 = vld [vmem:[%s1 + $0x294] sm:$0xf]
  %v360 = vld [vmem:[%s1 + $0x298] sm:$0xf]
  %v361 = vld [vmem:[%s1 + $0x29c] sm:$0xf]
  %v362 = vld [vmem:[%s1 + $0x2a0] sm:$0xf]
  %v363 = vld [vmem:[%s1 + $0x2a4] sm:$0xf]
  %v364 = vld [vmem:[%s1 + $0x2a8] sm:$0xf]
  %v365 = vld [vmem:[%s1 + $0x2ac] sm:$0xf]
  %v366 = vld [vmem:[%s1 + $0x2b0] sm:$0xf]
  %v367 = vld [vmem:[%s1 + $0x2b4] sm:$0xf]
  %v368 = vld [vmem:[%s1 + $0x2b8] sm:$0xf]
  %v369 = vld [vmem:[%s1 + $0x2bc] sm:$0xf]
  %v370 = vld [vmem:[%s1 + $0x2c0] sm:$0xf]
  %v371 = vld [vmem:[%s1 + $0x2c4] sm:$0xf]
  %v372 = vld [vmem:[%s1 + $0x2c8] sm:$0xf]
  %v373 = vld [vmem:[%s1 + $0x2cc] sm:$0xf]
  %v374 = vld [vmem:[%s1 + $0x2d0] sm:$0xf]
  %v375 = vld [vmem:[%s1 + $0x2d4] sm:$0xf]
  %v376 = vld [vmem:[%s1 + $0x2d8] sm:$0xf]
  %v377 = vld [vmem:[%s1 + $0x2dc] sm:$0xf]
  %v378 = vld [vmem:[%s1 + $0x2e0] sm:$0xf]
  %v379 = vld [vmem:[%s1 + $0x2e4] sm:$0xf]
  %v380 = vld [vmem:[%s1 + $0x2e8] sm:$0xf]
  %v381 = vld [vmem:[%s1 + $0x2ec] sm:$0xf]
  %v382 = vld [vmem:[%s1 + $0x2f0] sm:$0xf]
  %v383 = vld [vmem:[%s1 + $0x2f4] sm:$0xf]
  %v384 = vld [vmem:[%s1 + $0x2f8] sm:$0xf]
  %v385 = vld [vmem:[%s1 + $0x2fc] sm:$0xf]
  %v386 = vld [vmem:[%s1 + $0x300] sm:$0xf]
  %v387 = vld [vmem:[%s1 + $0x304] sm:$0xf]
  %v388 = vld [vmem:[%s1 + $0x308] sm:$0xf]
  %v389 = vld [vmem:[%s1 + $0x30c] sm:$0xf]
  %v390 = vld [vmem:[%s1 + $0x310] sm:$0xf]
  %v391 = vld [vmem:[%s1 + $0x314] sm:$0xf]
  %v392 = vld [vmem:[%s1 + $0x318] sm:$0xf]
  %v393 = vld [vmem:[%s1 + $0x31c] sm:$0xf]
  %v394 = vld [vmem:[%s1 + $0x320] sm:$0xf]
  %v395 = vld [vmem:[%s1 + $0x324] sm:$0xf]
  %v396 = vld [vmem:[%s1 + $0x328] sm:$0xf]
  %v397 = vld [vmem:[%s1 + $0x32c] sm:$0xf]
  %v398 = vld [vmem:[%s1 + $0x330] sm:$0xf]
  %v399 = vld [vmem:[%s1 + $0x334] sm:$0xf]
  %v400 = vld [vmem:[%s1 + $0x338] sm:$0xf]
  %v401 = vld [vmem:[%s1 + $0x33c] sm:$0xf]
  %v402 = vld [vmem:[%s1 + $0x340] sm:$0xf]
  %v403 = vld [vmem:[%s1 + $0x344] sm:$0xf]
  %v404 = vld [vmem:[%s1 + $0x348] sm:$0xf]
  %v405 = vld [vmem:[%s1 + $0x34c] sm:$0xf]
  %v406 = vld [vmem:[%s1 + $0x350] sm:$0xf]
  %v407 = vld [vmem:[%s1 + $0x354] sm:$0xf]
  %v408 = vld [vmem:[%s1 + $0x358] sm:$0xf]
  %v409 = vld [vmem:[%s1 + $0x35c] sm:$0xf]
  %v410 = vld [vmem:[%s1 + $0x360] sm:$0xf]
  %v411 = vld [vmem:[%s1 + $0x364] sm:$0xf]
  %v412 = vld [vmem:[%s1 + $0x368] sm:$0xf]
  %v413 = vld [vmem:[%s1 + $0x36c] sm:$0xf]
  %v414 = vld [vmem:[%s1 + $0x370] sm:$0xf]
  %v415 = vld [vmem:[%s1 + $0x374] sm:$0xf]
  %v416 = vld [vmem:[%s1 + $0x378] sm:$0xf]
  %v417 = vld [vmem:[%s1 + $0x37c] sm:$0xf]
  %v418 = vld [vmem:[%s1 + $0x380] sm:$0xf]
  %v419 = vld [vmem:[%s1 + $0x384] sm:$0xf]
  %v420 = vld [vmem:[%s1 + $0x388] sm:$0xf]
  %v421 = vld [vmem:[%s1 + $0x38c] sm:$0xf]
  %v422 = vld [vmem:[%s1 + $0x390] sm:$0xf]
  %v423 = vld [vmem:[%s1 + $0x394] sm:$0xf]
  %v424 = vld [vmem:[%s1 + $0x398] sm:$0xf]
  %v425 = vld [vmem:[%s1 + $0x39c] sm:$0xf]
  %v426 = vld [vmem:[%s1 + $0x3a0] sm:$0xf]
  %v427 = vld [vmem:[%s1 + $0x3a4] sm:$0xf]
  %v428 = vld [vmem:[%s1 + $0x3a8] sm:$0xf]
  %v429 = vld [vmem:[%s1 + $0x3ac] sm:$0xf]
  %v430 = vld [vmem:[%s1 + $0x3b0] sm:$0xf]
  %v431 = vld [vmem:[%s1 + $0x3b4] sm:$0xf]
  %v432 = vld [vmem:[%s1 + $0x3b8] sm:$0xf]
  %v433 = vld [vmem:[%s1 + $0x3bc] sm:$0xf]
  %v434 = vld [vmem:[%s1 + $0x3c0] sm:$0xf]
  %v435 = vld [vmem:[%s1 + $0x3c4] sm:$0xf]
  %v436 = vld [vmem:[%s1 + $0x3c8] sm:$0xf]
  %v437 = vld [vmem:[%s1 + $0x3cc] sm:$0xf]
  %v438 = vld [vmem:[%s1 + $0x3d0] sm:$0xf]
  %v439 = vld [vmem:[%s1 + $0x3d4] sm:$0xf]
  %v440 = vld [vmem:[%s1 + $0x3d8] sm:$0xf]
  %v441 = vld [vmem:[%s1 + $0x3dc] sm:$0xf]
  %v442 = vld [vmem:[%s1 + $0x3e0] sm:$0xf]
  %v443 = vld [vmem:[%s1 + $0x3e4] sm:$0xf]
  %v444 = vld [vmem:[%s1 + $0x3e8] sm:$0xf]
  %v445 = vld [vmem:[%s1 + $0x3ec] sm:$0xf]
  %v446 = vld [vmem:[%s1 + $0x3f0] sm:$0xf]
  %v447 = vld [vmem:[%s1 + $0x3f4] sm:$0xf]
  %v448 = vld [vmem:[%s1 + $0x3f8] sm:$0xf]
  %v449 = vld [vmem:[%s1 + $0x3fc] sm:$0xf]
  %v450 = vld [vmem:[%s1 + $0x400] sm:$0xf]
  %v451 = vld [vmem:[%s1 + $0x404] sm:$0xf]
  %v452 = vld [vmem:[%s1 + $0x408] sm:$0xf]
  %v453 = vld [vmem:[%s1 + $0x40c] sm:$0xf]
  %v454 = vld [vmem:[%s1 + $0x410] sm:$0xf]
  %v455 = vld [vmem:[%s1 + $0x414] sm:$0xf]
  %v456 = vld [vmem:[%s1 + $0x418] sm:$0xf]
  %v457 = vld [vmem:[%s1 + $0x41c] sm:$0xf]
  %v458 = vld [vmem:[%s1 + $0x420] sm:$0xf]
  %v459 = vld [vmem:[%s1 + $0x424] sm:$0xf]
  %v460 = vld [vmem:[%s1 + $0x428] sm:$0xf]
  %v461 = vld [vmem:[%s1 + $0x42c] sm:$0xf]
  %v462 = vld [vmem:[%s1 + $0x430] sm:$0xf]
  %v463 = vld [vmem:[%s1 + $0x434] sm:$0xf]
  %v464 = vld [vmem:[%s1 + $0x438] sm:$0xf]
  %v465 = vld [vmem:[%s1 + $0x43c] sm:$0xf]
  %v466 = vld [vmem:[%s1 + $0x440] sm:$0xf]
  %v467 = vld [vmem:[%s1 + $0x444] sm:$0xf]
  %v468 = vld [vmem:[%s1 + $0x448] sm:$0xf]
  %v469 = vld [vmem:[%s1 + $0x44c] sm:$0xf]
  %v470 = vld [vmem:[%s1 + $0x450] sm:$0xf]
  %v471 = vld [vmem:[%s1 + $0x454] sm:$0xf]
  %v472 = vld [vmem:[%s1 + $0x458] sm:$0xf]
  %v473 = vld [vmem:[%s1 + $0x45c] sm:$0xf]
  %v474 = vld [vmem:[%s1 + $0x460] sm:$0xf]
  %v475 = vld [vmem:[%s1 + $0x464] sm:$0xf]
  %v476 = vld [vmem:[%s1 + $0x468] sm:$0xf]
  %v477 = vld [vmem:[%s1 + $0x46c] sm:$0xf]
  %v478 = vld [vmem:[%s1 + $0x470] sm:$0xf]
  %v479 = vld [vmem:[%s1 + $0x474] sm:$0xf]
  %v480 = vld [vmem:[%s1 + $0x478] sm:$0xf]
  %v481 = vld [vmem:[%s1 + $0x47c] sm:$0xf]
  %v482 = vld [vmem:[%s1 + $0x480] sm:$0xf]
  %v483 = vld [vmem:[%s1 + $0x484] sm:$0xf]
  %v484 = vld [vmem:[%s1 + $0x488] sm:$0xf]
  %v485 = vld [vmem:[%s1 + $0x48c] sm:$0xf]
  %v486 = vld [vmem:[%s1 + $0x490] sm:$0xf]
  %v487 = vld [vmem:[%s1 + $0x494] sm:$0xf]
  %v488 = vld [vmem:[%s1 + $0x498] sm:$0xf]
  %v489 = vld [vmem:[%s1 + $0x49c] sm:$0xf]
  %v490 = vld [vmem:[%s1 + $0x4a0] sm:$0xf]
  %v491 = vld [vmem:[%s1 + $0x4a4] sm:$0xf]
  %v492 = vld [vmem:[%s1 + $0x4a8] sm:$0xf]
  %v493 = vld [vmem:[%s1 + $0x4ac] sm:$0xf]
  %v494 = vld [vmem:[%s1 + $0x4b0] sm:$0xf]
  %v495 = vld [vmem:[%s1 + $0x4b4] sm:$0xf]
  %v496 = vld [vmem:[%s1 + $0x4b8] sm:$0xf]
  %v497 = vld [vmem:[%s1 + $0x4bc] sm:$0xf]
  %v498 = vld [vmem:[%s1 + $0x4c0] sm:$0xf]
  %v499 = vld [vmem:[%s1 + $0x4c4] sm:$0xf]
  %v500 = vld [vmem:[%s1 + $0x4c8] sm:$0xf]
  %v501 = vld [vmem:[%s1 + $0x4cc] sm:$0xf]
  %v502 = vld [vmem:[%s1 + $0x4d0] sm:$0xf]
  %v503 = vld [vmem:[%s1 + $0x4d4] sm:$0xf]
  %v504 = vld [vmem:[%s1 + $0x4d8] sm:$0xf]
  %v505 = vld [vmem:[%s1 + $0x4dc] sm:$0xf]
  %v506 = vld [vmem:[%s1 + $0x4e0] sm:$0xf]
  %v507 = vld [vmem:[%s1 + $0x4e4] sm:$0xf]
  %v508 = vld [vmem:[%s1 + $0x4e8] sm:$0xf]
  %v509 = vld [vmem:[%s1 + $0x4ec] sm:$0xf]
  %v510 = vld [vmem:[%s1 + $0x4f0] sm:$0xf]
  %v511 = vld [vmem:[%s1 + $0x4f4] sm:$0xf]
  %v512 = vld [vmem:[%s1 + $0x4f8] sm:$0xf]
  %v513 = vld [vmem:[%s1 + $0x4fc] sm:$0xf]
  %v514 = vld [vmem:[%s1 + $0x500] sm:$0xf]
  %v515 = vld [vmem:[%s1 + $0x504] sm:$0xf]
  %v516 = vld [vmem:[%s1 + $0x508] sm:$0xf]
  %v517 = vld [vmem:[%s1 + $0x50c] sm:$0xf]
  %v518 = vld [vmem:[%s1 + $0x510] sm:$0xf]
  %v519 = vld [vmem:[%s1 + $0x514] sm:$0xf]
  %v520 = vld [vmem:[%s1 + $0x518] sm:$0xf]
  %v521 = vld [vmem:[%s1 + $0x51c] sm:$0xf]
  %v522 = vld [vmem:[%s1 + $0x520] sm:$0xf]
  %v523 = vld [vmem:[%s1 + $0x524] sm:$0xf]
  %v524 = vld [vmem:[%s1 + $0x528] sm:$0xf]
  %v525 = vld [vmem:[%s1 + $0x52c] sm:$0xf]
  %v526 = vld [vmem:[%s1 + $0x530] sm:$0xf]
  %v527 = vld [vmem:[%s1 + $0x534] sm:$0xf]
  %v528 = vld [vmem:[%s1 + $0x538] sm:$0xf]
  %v529 = vld [vmem:[%s1 + $0x53c] sm:$0xf]
  %v530 = vld [vmem:[%s1 + $0x540] sm:$0xf]
  %v531 = vld [vmem:[%s1 + $0x544] sm:$0xf]
  %v532 = vld [vmem:[%s1 + $0x548] sm:$0xf]
  %v533 = vld [vmem:[%s1 + $0x54c] sm:$0xf]
  %v534 = vld [vmem:[%s1 + $0x550] sm:$0xf]
  %v535 = vld [vmem:[%s1 + $0x554] sm:$0xf]
  %v712 = vunpack.c.l.b16 %v18
  %v713 = vunpack.c.h.b16 %v18
  %v714 = vunpack.c.l.b16 %v19
  %v715 = vunpack.c.h.b16 %v19
  %v716 = vunpack.c.l.b16 %v20
  %v717 = vunpack.c.h.b16 %v20
  %v718 = vunpack.c.l.b16 %v21
  %v719 = vunpack.c.h.b16 %v21
  %v720 = vunpack.c.l.b16 %v22
  %v721 = vunpack.c.h.b16 %v22
  %v722 = vunpack.c.l.b16 %v23
  %v723 = vunpack.c.h.b16 %v23
  %v724 = vunpack.c.l.b16 %v24
  %v725 = vunpack.c.h.b16 %v24
  %v726 = vunpack.c.l.b16 %v25
  %v727 = vunpack.c.h.b16 %v25
  %v728 = vunpack.c.l.b16 %v26
  %v729 = vunpack.c.h.b16 %v26
  %v730 = vunpack.c.l.b16 %v27
  %v731 = vunpack.c.h.b16 %v27
  %v732 = vunpack.c.l.b16 %v28
  %v733 = vunpack.c.h.b16 %v28
  %v734 = vunpack.c.l.b16 %v29
  %v735 = vunpack.c.h.b16 %v29
  %v736 = vunpack.c.l.b16 %v30
  %v737 = vunpack.c.h.b16 %v30
  %v738 = vunpack.c.l.b16 %v31
  %v739 = vunpack.c.h.b16 %v31
  %v740 = vunpack.c.l.b16 %v32
  %v741 = vunpack.c.h.b16 %v32
  %v742 = vunpack.c.l.b16 %v33
  %v743 = vunpack.c.h.b16 %v33
  %v744 = vunpack.c.l.b16 %v34
  %v745 = vunpack.c.h.b16 %v34
  %v746 = vunpack.c.l.b16 %v35
  %v747 = vunpack.c.h.b16 %v35
  %v748 = vunpack.c.l.b16 %v36
  %v749 = vunpack.c.h.b16 %v36
  %v750 = vunpack.c.l.b16 %v37
  %v751 = vunpack.c.h.b16 %v37
  %v752 = vunpack.c.l.b16 %v38
  %v753 = vunpack.c.h.b16 %v38
  %v754 = vunpack.c.l.b16 %v39
  %v755 = vunpack.c.h.b16 %v39
  %v756 = vunpack.c.l.b16 %v40
  %v757 = vunpack.c.h.b16 %v40
  %v758 = vunpack.c.l.b16 %v41
  %v759 = vunpack.c.h.b16 %v41
  %v760 = vunpack.c.l.b16 %v42
  %v761 = vunpack.c.h.b16 %v42
  %v762 = vunpack.c.l.b16 %v43
  %v763 = vunpack.c.h.b16 %v43
  %v764 = vunpack.c.l.b16 %v44
  %v765 = vunpack.c.h.b16 %v44
  %v766 = vunpack.c.l.b16 %v45
  %v767 = vunpack.c.h.b16 %v45
  %v768 = vunpack.c.l.b16 %v46
  %v769 = vunpack.c.h.b16 %v46
  %v770 = vunpack.c.l.b16 %v47
  %v771 = vunpack.c.h.b16 %v47
  %v772 = vunpack.c.l.b16 %v48
  %v773 = vunpack.c.h.b16 %v48
  %v774 = vunpack.c.l.b16 %v49
  %v775 = vunpack.c.h.b16 %v49
  %v776 = vunpack.c.l.b16 %v50
  %v777 = vunpack.c.h.b16 %v50
  %v778 = vunpack.c.l.b16 %v51
  %v779 = vunpack.c.h.b16 %v51
  %v780 = vunpack.c.l.b16 %v52
  %v781 = vunpack.c.h.b16 %v52
  %v782 = vunpack.c.l.b16 %v53
  %v783 = vunpack.c.h.b16 %v53
  %v784 = vunpack.c.l.b16 %v54
  %v785 = vunpack.c.h.b16 %v54
  %v786 = vunpack.c.l.b16 %v55
  %v787 = vunpack.c.h.b16 %v55
  %v788 = vunpack.c.l.b16 %v56
  %v789 = vunpack.c.h.b16 %v56
  %v790 = vunpack.c.l.b16 %v57
  %v791 = vunpack.c.h.b16 %v57
  %v792 = vunpack.c.l.b16 %v58
  %v793 = vunpack.c.h.b16 %v58
  %v794 = vunpack.c.l.b16 %v59
  %v795 = vunpack.c.h.b16 %v59
  %v796 = vunpack.c.l.b16 %v60
  %v797 = vunpack.c.h.b16 %v60
  %v798 = vunpack.c.l.b16 %v61
  %v799 = vunpack.c.h.b16 %v61
  %v800 = vunpack.c.l.b16 %v62
  %v801 = vunpack.c.h.b16 %v62
  %v802 = vunpack.c.l.b16 %v63
  %v803 = vunpack.c.h.b16 %v63
  %v804 = vunpack.c.l.b16 %v64
  %v805 = vunpack.c.h.b16 %v64
  %v806 = vunpack.c.l.b16 %v65
  %v807 = vunpack.c.h.b16 %v65
  %v808 = vunpack.c.l.b16 %v66
  %v809 = vunpack.c.h.b16 %v66
  %v810 = vunpack.c.l.b16 %v67
  %v811 = vunpack.c.h.b16 %v67
  %v812 = vunpack.c.l.b16 %v68
  %v813 = vunpack.c.h.b16 %v68
  %v814 = vunpack.c.l.b16 %v69
  %v815 = vunpack.c.h.b16 %v69
  %v816 = vunpack.c.l.b16 %v70
  %v817 = vunpack.c.h.b16 %v70
  %v818 = vunpack.c.l.b16 %v71
  %v819 = vunpack.c.h.b16 %v71
  %v820 = vunpack.c.l.b16 %v72
  %v821 = vunpack.c.h.b16 %v72
  %v822 = vunpack.c.l.b16 %v73
  %v823 = vunpack.c.h.b16 %v73
  %v824 = vunpack.c.l.b16 %v74
  %v825 = vunpack.c.h.b16 %v74
  %v826 = vunpack.c.l.b16 %v75
  %v827 = vunpack.c.h.b16 %v75
  %v828 = vunpack.c.l.b16 %v76
  %v829 = vunpack.c.h.b16 %v76
  %v830 = vunpack.c.l.b16 %v77
  %v831 = vunpack.c.h.b16 %v77
  %v832 = vunpack.c.l.b16 %v78
  %v833 = vunpack.c.h.b16 %v78
  %v834 = vunpack.c.l.b16 %v79
  %v835 = vunpack.c.h.b16 %v79
  %v836 = vunpack.c.l.b16 %v80
  %v837 = vunpack.c.h.b16 %v80
  %v838 = vunpack.c.l.b16 %v81
  %v839 = vunpack.c.h.b16 %v81
  %v840 = vunpack.c.l.b16 %v82
  %v841 = vunpack.c.h.b16 %v82
  %v842 = vunpack.c.l.b16 %v83
  %v843 = vunpack.c.h.b16 %v83
  %v844 = vunpack.c.l.b16 %v84
  %v845 = vunpack.c.h.b16 %v84
  %v846 = vunpack.c.l.b16 %v85
  %v847 = vunpack.c.h.b16 %v85
  %v848 = vunpack.c.l.b16 %v86
  %v849 = vunpack.c.h.b16 %v86
  %v850 = vunpack.c.l.b16 %v87
  %v851 = vunpack.c.h.b16 %v87
  %v852 = vunpack.c.l.b16 %v88
  %v853 = vunpack.c.h.b16 %v88
  %v854 = vunpack.c.l.b16 %v89
  %v855 = vunpack.c.h.b16 %v89
  %v856 = vunpack.c.l.b16 %v90
  %v857 = vunpack.c.h.b16 %v90
  %v858 = vunpack.c.l.b16 %v91
  %v859 = vunpack.c.h.b16 %v91
  %v860 = vunpack.c.l.b16 %v92
  %v861 = vunpack.c.h.b16 %v92
  %v862 = vunpack.c.l.b16 %v93
  %v863 = vunpack.c.h.b16 %v93
  %v864 = vunpack.c.l.b16 %v94
  %v865 = vunpack.c.h.b16 %v94
  %v866 = vunpack.c.l.b16 %v95
  %v867 = vunpack.c.h.b16 %v95
  %v868 = vunpack.c.l.b16 %v96
  %v869 = vunpack.c.h.b16 %v96
  %v870 = vunpack.c.l.b16 %v97
  %v871 = vunpack.c.h.b16 %v97
  %v872 = vunpack.c.l.b16 %v98
  %v873 = vunpack.c.h.b16 %v98
  %v874 = vunpack.c.l.b16 %v99
  %v875 = vunpack.c.h.b16 %v99
  %v876 = vunpack.c.l.b16 %v100
  %v877 = vunpack.c.h.b16 %v100
  %v878 = vunpack.c.l.b16 %v101
  %v879 = vunpack.c.h.b16 %v101
  %v880 = vunpack.c.l.b16 %v102
  %v881 = vunpack.c.h.b16 %v102
  %v882 = vunpack.c.l.b16 %v103
  %v883 = vunpack.c.h.b16 %v103
  %v884 = vunpack.c.l.b16 %v104
  %v885 = vunpack.c.h.b16 %v104
  %v886 = vunpack.c.l.b16 %v105
  %v887 = vunpack.c.h.b16 %v105
  %v888 = vunpack.c.l.b16 %v106
  %v889 = vunpack.c.h.b16 %v106
  %v890 = vunpack.c.l.b16 %v107
  %v891 = vunpack.c.h.b16 %v107
  %v892 = vunpack.c.l.b16 %v108
  %v893 = vunpack.c.h.b16 %v108
  %v894 = vunpack.c.l.b16 %v109
  %v895 = vunpack.c.h.b16 %v109
  %v896 = vunpack.c.l.b16 %v110
  %v897 = vunpack.c.h.b16 %v110
  %v898 = vunpack.c.l.b16 %v111
  %v899 = vunpack.c.h.b16 %v111
  %v900 = vunpack.c.l.b16 %v112
  %v901 = vunpack.c.h.b16 %v112
  %v902 = vunpack.c.l.b16 %v113
  %v903 = vunpack.c.h.b16 %v113
  %v904 = vunpack.c.l.b16 %v114
  %v905 = vunpack.c.h.b16 %v114
  %v906 = vunpack.c.l.b16 %v115
  %v907 = vunpack.c.h.b16 %v115
  %v908 = vunpack.c.l.b16 %v116
  %v909 = vunpack.c.h.b16 %v116
  %v910 = vunpack.c.l.b16 %v117
  %v911 = vunpack.c.h.b16 %v117
  %v912 = vunpack.c.l.b16 %v118
  %v913 = vunpack.c.h.b16 %v118
  %v914 = vunpack.c.l.b16 %v119
  %v915 = vunpack.c.h.b16 %v119
  %v916 = vunpack.c.l.b16 %v120
  %v917 = vunpack.c.h.b16 %v120
  %v918 = vunpack.c.l.b16 %v121
  %v919 = vunpack.c.h.b16 %v121
  %v920 = vunpack.c.l.b16 %v122
  %v921 = vunpack.c.h.b16 %v122
  %v922 = vunpack.c.l.b16 %v123
  %v923 = vunpack.c.h.b16 %v123
  %v924 = vunpack.c.l.b16 %v124
  %v925 = vunpack.c.h.b16 %v124
  %v926 = vunpack.c.l.b16 %v125
  %v927 = vunpack.c.h.b16 %v125
  %v928 = vunpack.c.l.b16 %v126
  %v929 = vunpack.c.h.b16 %v126
  %v930 = vunpack.c.l.b16 %v127
  %v931 = vunpack.c.h.b16 %v127
  %v932 = vunpack.c.l.b16 %v128
  %v933 = vunpack.c.h.b16 %v128
  %v934 = vunpack.c.l.b16 %v129
  %v935 = vunpack.c.h.b16 %v129
  %v936 = vunpack.c.l.b16 %v130
  %v937 = vunpack.c.h.b16 %v130
  %v938 = vunpack.c.l.b16 %v131
  %v939 = vunpack.c.h.b16 %v131
  %v940 = vunpack.c.l.b16 %v132
  %v941 = vunpack.c.h.b16 %v132
  %v942 = vunpack.c.l.b16 %v133
  %v943 = vunpack.c.h.b16 %v133
  %v944 = vunpack.c.l.b16 %v134
  %v945 = vunpack.c.h.b16 %v134
  %v946 = vunpack.c.l.b16 %v135
  %v947 = vunpack.c.h.b16 %v135
  %v948 = vunpack.c.l.b16 %v136
  %v949 = vunpack.c.h.b16 %v136
  %v950 = vunpack.c.l.b16 %v137
  %v951 = vunpack.c.h.b16 %v137
  %v952 = vunpack.c.l.b16 %v138
  %v953 = vunpack.c.h.b16 %v138
  %v954 = vunpack.c.l.b16 %v139
  %v955 = vunpack.c.h.b16 %v139
  %v956 = vunpack.c.l.b16 %v140
  %v957 = vunpack.c.h.b16 %v140
  %v958 = vunpack.c.l.b16 %v141
  %v959 = vunpack.c.h.b16 %v141
  %v960 = vunpack.c.l.b16 %v142
  %v961 = vunpack.c.h.b16 %v142
  %v962 = vunpack.c.l.b16 %v143
  %v963 = vunpack.c.h.b16 %v143
  %v964 = vunpack.c.l.b16 %v144
  %v965 = vunpack.c.h.b16 %v144
  %v966 = vunpack.c.l.b16 %v145
  %v967 = vunpack.c.h.b16 %v145
  %v968 = vunpack.c.l.b16 %v146
  %v969 = vunpack.c.h.b16 %v146
  %v970 = vunpack.c.l.b16 %v147
  %v971 = vunpack.c.h.b16 %v147
  %v972 = vunpack.c.l.b16 %v148
  %v973 = vunpack.c.h.b16 %v148
  %v974 = vunpack.c.l.b16 %v149
  %v975 = vunpack.c.h.b16 %v149
  %v976 = vunpack.c.l.b16 %v150
  %v977 = vunpack.c.h.b16 %v150
  %v978 = vunpack.c.l.b16 %v151
  %v979 = vunpack.c.h.b16 %v151
  %v980 = vunpack.c.l.b16 %v152
  %v981 = vunpack.c.h.b16 %v152
  %v982 = vunpack.c.l.b16 %v153
  %v983 = vunpack.c.h.b16 %v153
  %v984 = vunpack.c.l.b16 %v154
  %v985 = vunpack.c.h.b16 %v154
  %v986 = vunpack.c.l.b16 %v155
  %v987 = vunpack.c.h.b16 %v155
  %v988 = vunpack.c.l.b16 %v156
  %v989 = vunpack.c.h.b16 %v156
  %v990 = vunpack.c.l.b16 %v157
  %v991 = vunpack.c.h.b16 %v157
  %v992 = vunpack.c.l.b16 %v158
  %v993 = vunpack.c.h.b16 %v158
  %v994 = vunpack.c.l.b16 %v159
  %v995 = vunpack.c.h.b16 %v159
  %v996 = vunpack.c.l.b16 %v160
  %v997 = vunpack.c.h.b16 %v160
  %v998 = vunpack.c.l.b16 %v161
  %v999 = vunpack.c.h.b16 %v161
  %v1000 = vunpack.c.l.b16 %v162
  %v1001 = vunpack.c.h.b16 %v162
  %v1002 = vunpack.c.l.b16 %v163
  %v1003 = vunpack.c.h.b16 %v163
  %v1004 = vunpack.c.l.b16 %v164
  %v1005 = vunpack.c.h.b16 %v164
  %v1006 = vunpack.c.l.b16 %v165
  %v1007 = vunpack.c.h.b16 %v165
  %v1008 = vunpack.c.l.b16 %v166
  %v1009 = vunpack.c.h.b16 %v166
  %v1010 = vunpack.c.l.b16 %v167
  %v1011 = vunpack.c.h.b16 %v167
  %v1012 = vunpack.c.l.b16 %v168
  %v1013 = vunpack.c.h.b16 %v168
  %v1014 = vunpack.c.l.b16 %v169
  %v1015 = vunpack.c.h.b16 %v169
  %v1016 = vunpack.c.l.b16 %v170
  %v1017 = vunpack.c.h.b16 %v170
  %v1018 = vunpack.c.l.b16 %v171
  %v1019 = vunpack.c.h.b16 %v171
  %v1020 = vunpack.c.l.b16 %v172
  %v1021 = vunpack.c.h.b16 %v172
  %v1022 = vunpack.c.l.b16 %v173
  %v1023 = vunpack.c.h.b16 %v173
  %v1024 = vunpack.c.l.b16 %v174
  %v1025 = vunpack.c.h.b16 %v174
  %v1026 = vunpack.c.l.b16 %v175
  %v1027 = vunpack.c.h.b16 %v175
  %v1028 = vunpack.c.l.b16 %v176
  %v1029 = vunpack.c.h.b16 %v176
  %v1030 = vunpack.c.l.b16 %v177
  %v1031 = vunpack.c.h.b16 %v177
  %v1032 = vunpack.c.l.b16 %v178
  %v1033 = vunpack.c.h.b16 %v178
  %v1034 = vunpack.c.l.b16 %v179
  %v1035 = vunpack.c.h.b16 %v179
  %v1036 = vunpack.c.l.b16 %v180
  %v1037 = vunpack.c.h.b16 %v180
  %v1038 = vunpack.c.l.b16 %v181
  %v1039 = vunpack.c.h.b16 %v181
  %v1040 = vunpack.c.l.b16 %v182
  %v1041 = vunpack.c.h.b16 %v182
  %v1042 = vunpack.c.l.b16 %v183
  %v1043 = vunpack.c.h.b16 %v183
  %v1044 = vunpack.c.l.b16 %v184
  %v1045 = vunpack.c.h.b16 %v184
  %v1046 = vunpack.c.l.b16 %v185
  %v1047 = vunpack.c.h.b16 %v185
  %v1048 = vunpack.c.l.b16 %v186
  %v1049 = vunpack.c.h.b16 %v186
  %v1050 = vunpack.c.l.b16 %v187
  %v1051 = vunpack.c.h.b16 %v187
  %v1052 = vunpack.c.l.b16 %v188
  %v1053 = vunpack.c.h.b16 %v188
  %v1054 = vunpack.c.l.b16 %v189
  %v1055 = vunpack.c.h.b16 %v189
  %v1056 = vunpack.c.l.b16 %v190
  %v1057 = vunpack.c.h.b16 %v190
  %v1058 = vunpack.c.l.b16 %v191
  %v1059 = vunpack.c.h.b16 %v191
  %v1060 = vunpack.c.l.b16 %v192
  %v1061 = vunpack.c.h.b16 %v192
  %v1062 = vunpack.c.l.b16 %v193
  %v1063 = vunpack.c.h.b16 %v193
  %v1064 = vpack.c.b16 %v734, %v712
  %v1065 = vpack.c.b16 %v735, %v713
  %v1066 = vpack.c.b16 %v736, %v714
  %v1067 = vpack.c.b16 %v737, %v715
  %v1068 = vpack.c.b16 %v738, %v716
  %v1069 = vpack.c.b16 %v739, %v717
  %v1070 = vpack.c.b16 %v740, %v718
  %v1071 = vpack.c.b16 %v741, %v719
  %v1072 = vpack.c.b16 %v742, %v720
  %v1073 = vpack.c.b16 %v743, %v721
  %v1074 = vpack.c.b16 %v744, %v722
  %v1075 = vpack.c.b16 %v745, %v723
  %v1076 = vpack.c.b16 %v746, %v724
  %v1077 = vpack.c.b16 %v747, %v725
  %v1078 = vpack.c.b16 %v748, %v726
  %v1079 = vpack.c.b16 %v749, %v727
  %v1080 = vpack.c.b16 %v750, %v728
  %v1081 = vpack.c.b16 %v751, %v729
  %v1082 = vpack.c.b16 %v752, %v730
  %v1083 = vpack.c.b16 %v753, %v731
  %v1084 = vpack.c.b16 %v754, %v732
  %v1085 = vpack.c.b16 %v755, %v733
  %v1086 = vpack.c.b16 %v778, %v756
  %v1087 = vpack.c.b16 %v779, %v757
  %v1088 = vpack.c.b16 %v780, %v758
  %v1089 = vpack.c.b16 %v781, %v759
  %v1090 = vpack.c.b16 %v782, %v760
  %v1091 = vpack.c.b16 %v783, %v761
  %v1092 = vpack.c.b16 %v784, %v762
  %v1093 = vpack.c.b16 %v785, %v763
  %v1094 = vpack.c.b16 %v786, %v764
  %v1095 = vpack.c.b16 %v787, %v765
  %v1096 = vpack.c.b16 %v788, %v766
  %v1097 = vpack.c.b16 %v789, %v767
  %v1098 = vpack.c.b16 %v790, %v768
  %v1099 = vpack.c.b16 %v791, %v769
  %v1100 = vpack.c.b16 %v792, %v770
  %v1101 = vpack.c.b16 %v793, %v771
  %v1102 = vpack.c.b16 %v794, %v772
  %v1103 = vpack.c.b16 %v795, %v773
  %v1104 = vpack.c.b16 %v796, %v774
  %v1105 = vpack.c.b16 %v797, %v775
  %v1106 = vpack.c.b16 %v798, %v776
  %v1107 = vpack.c.b16 %v799, %v777
  %v1108 = vpack.c.b16 %v822, %v800
  %v1109 = vpack.c.b16 %v823, %v801
  %v1110 = vpack.c.b16 %v824, %v802
  %v1111 = vpack.c.b16 %v825, %v803
  %v1112 = vpack.c.b16 %v826, %v804
  %v1113 = vpack.c.b16 %v827, %v805
  %v1114 = vpack.c.b16 %v828, %v806
  %v1115 = vpack.c.b16 %v829, %v807
  %v1116 = vpack.c.b16 %v830, %v808
  %v1117 = vpack.c.b16 %v831, %v809
  %v1118 = vpack.c.b16 %v832, %v810
  %v1119 = vpack.c.b16 %v833, %v811
  %v1120 = vpack.c.b16 %v834, %v812
  %v1121 = vpack.c.b16 %v835, %v813
  %v1122 = vpack.c.b16 %v836, %v814
  %v1123 = vpack.c.b16 %v837, %v815
  %v1124 = vpack.c.b16 %v838, %v816
  %v1125 = vpack.c.b16 %v839, %v817
  %v1126 = vpack.c.b16 %v840, %v818
  %v1127 = vpack.c.b16 %v841, %v819
  %v1128 = vpack.c.b16 %v842, %v820
  %v1129 = vpack.c.b16 %v843, %v821
  %v1130 = vpack.c.b16 %v866, %v844
  %v1131 = vpack.c.b16 %v867, %v845
  %v1132 = vpack.c.b16 %v868, %v846
  %v1133 = vpack.c.b16 %v869, %v847
  %v1134 = vpack.c.b16 %v870, %v848
  %v1135 = vpack.c.b16 %v871, %v849
  %v1136 = vpack.c.b16 %v872, %v850
  %v1137 = vpack.c.b16 %v873, %v851
  %v1138 = vpack.c.b16 %v874, %v852
  %v1139 = vpack.c.b16 %v875, %v853
  %v1140 = vpack.c.b16 %v876, %v854
  %v1141 = vpack.c.b16 %v877, %v855
  %v1142 = vpack.c.b16 %v878, %v856
  %v1143 = vpack.c.b16 %v879, %v857
  %v1144 = vpack.c.b16 %v880, %v858
  %v1145 = vpack.c.b16 %v881, %v859
  %v1146 = vpack.c.b16 %v882, %v860
  %v1147 = vpack.c.b16 %v883, %v861
  %v1148 = vpack.c.b16 %v884, %v862
  %v1149 = vpack.c.b16 %v885, %v863
  %v1150 = vpack.c.b16 %v886, %v864
  %v1151 = vpack.c.b16 %v887, %v865
  %v1152 = vpack.c.b16 %v910, %v888
  %v1153 = vpack.c.b16 %v911, %v889
  %v1154 = vpack.c.b16 %v912, %v890
  %v1155 = vpack.c.b16 %v913, %v891
  %v1156 = vpack.c.b16 %v914, %v892
  %v1157 = vpack.c.b16 %v915, %v893
  %v1158 = vpack.c.b16 %v916, %v894
  %v1159 = vpack.c.b16 %v917, %v895
  %v1160 = vpack.c.b16 %v918, %v896
  %v1161 = vpack.c.b16 %v919, %v897
  %v1162 = vpack.c.b16 %v920, %v898
  %v1163 = vpack.c.b16 %v921, %v899
  %v1164 = vpack.c.b16 %v922, %v900
  %v1165 = vpack.c.b16 %v923, %v901
  %v1166 = vpack.c.b16 %v924, %v902
  %v1167 = vpack.c.b16 %v925, %v903
  %v1168 = vpack.c.b16 %v926, %v904
  %v1169 = vpack.c.b16 %v927, %v905
  %v1170 = vpack.c.b16 %v928, %v906
  %v1171 = vpack.c.b16 %v929, %v907
  %v1172 = vpack.c.b16 %v930, %v908
  %v1173 = vpack.c.b16 %v931, %v909
  %v1174 = vpack.c.b16 %v954, %v932
  %v1175 = vpack.c.b16 %v955, %v933
  %v1176 = vpack.c.b16 %v956, %v934
  %v1177 = vpack.c.b16 %v957, %v935
  %v1178 = vpack.c.b16 %v958, %v936
  %v1179 = vpack.c.b16 %v959, %v937
  %v1180 = vpack.c.b16 %v960, %v938
  %v1181 = vpack.c.b16 %v961, %v939
  %v1182 = vpack.c.b16 %v962, %v940
  %v1183 = vpack.c.b16 %v963, %v941
  %v1184 = vpack.c.b16 %v964, %v942
  %v1185 = vpack.c.b16 %v965, %v943
  %v1186 = vpack.c.b16 %v966, %v944
  %v1187 = vpack.c.b16 %v967, %v945
  %v1188 = vpack.c.b16 %v968, %v946
  %v1189 = vpack.c.b16 %v969, %v947
  %v1190 = vpack.c.b16 %v970, %v948
  %v1191 = vpack.c.b16 %v971, %v949
  %v1192 = vpack.c.b16 %v972, %v950
  %v1193 = vpack.c.b16 %v973, %v951
  %v1194 = vpack.c.b16 %v974, %v952
  %v1195 = vpack.c.b16 %v975, %v953
  %v1196 = vpack.c.b16 %v998, %v976
  %v1197 = vpack.c.b16 %v999, %v977
  %v1198 = vpack.c.b16 %v1000, %v978
  %v1199 = vpack.c.b16 %v1001, %v979
  %v1200 = vpack.c.b16 %v1002, %v980
  %v1201 = vpack.c.b16 %v1003, %v981
  %v1202 = vpack.c.b16 %v1004, %v982
  %v1203 = vpack.c.b16 %v1005, %v983
  %v1204 = vpack.c.b16 %v1006, %v984
  %v1205 = vpack.c.b16 %v1007, %v985
  %v1206 = vpack.c.b16 %v1008, %v986
  %v1207 = vpack.c.b16 %v1009, %v987
  %v1208 = vpack.c.b16 %v1010, %v988
  %v1209 = vpack.c.b16 %v1011, %v989
  %v1210 = vpack.c.b16 %v1012, %v990
  %v1211 = vpack.c.b16 %v1013, %v991
  %v1212 = vpack.c.b16 %v1014, %v992
  %v1213 = vpack.c.b16 %v1015, %v993
  %v1214 = vpack.c.b16 %v1016, %v994
  %v1215 = vpack.c.b16 %v1017, %v995
  %v1216 = vpack.c.b16 %v1018, %v996
  %v1217 = vpack.c.b16 %v1019, %v997
  %v1218 = vpack.c.b16 %v1042, %v1020
  %v1219 = vpack.c.b16 %v1043, %v1021
  %v1220 = vpack.c.b16 %v1044, %v1022
  %v1221 = vpack.c.b16 %v1045, %v1023
  %v1222 = vpack.c.b16 %v1046, %v1024
  %v1223 = vpack.c.b16 %v1047, %v1025
  %v1224 = vpack.c.b16 %v1048, %v1026
  %v1225 = vpack.c.b16 %v1049, %v1027
  %v1226 = vpack.c.b16 %v1050, %v1028
  %v1227 = vpack.c.b16 %v1051, %v1029
  %v1228 = vpack.c.b16 %v1052, %v1030
  %v1229 = vpack.c.b16 %v1053, %v1031
  %v1230 = vpack.c.b16 %v1054, %v1032
  %v1231 = vpack.c.b16 %v1055, %v1033
  %v1232 = vpack.c.b16 %v1056, %v1034
  %v1233 = vpack.c.b16 %v1057, %v1035
  %v1234 = vpack.c.b16 %v1058, %v1036
  %v1235 = vpack.c.b16 %v1059, %v1037
  %v1236 = vpack.c.b16 %v1060, %v1038
  %v1237 = vpack.c.b16 %v1061, %v1039
  %v1238 = vpack.c.b16 %v1062, %v1040
  %v1239 = vpack.c.b16 %v1063, %v1041
  %v1750 = vunpack.c.l.b16 %v194
  %v1751 = vunpack.c.l.b16 %v195
  %v1752 = vunpack.c.l.b16 %v196
  %v1753 = vunpack.c.l.b16 %v197
  %v1754 = vunpack.c.l.b16 %v198
  %v1755 = vunpack.c.l.b16 %v199
  %v1756 = vunpack.c.l.b16 %v200
  %v1757 = vunpack.c.l.b16 %v201
  %v1758 = vunpack.c.l.b16 %v202
  %v1759 = vunpack.c.l.b16 %v203
  %v1760 = vunpack.c.l.b16 %v204
  %v1761 = vunpack.c.l.b16 %v205
  %v1762 = vunpack.c.l.b16 %v206
  %v1763 = vunpack.c.l.b16 %v207
  %v1764 = vunpack.c.l.b16 %v208
  %v1765 = vunpack.c.l.b16 %v209
  %v1766 = vunpack.c.l.b16 %v210
  %v1767 = vunpack.c.l.b16 %v211
  %v1768 = vunpack.c.l.b16 %v212
  %v1769 = vunpack.c.l.b16 %v213
  %v1770 = vunpack.c.l.b16 %v214
  %v1771 = vunpack.c.l.b16 %v215
  %v1772 = vunpack.c.l.b16 %v216
  %v1773 = vunpack.c.l.b16 %v217
  %v1774 = vunpack.c.l.b16 %v218
  %v1775 = vunpack.c.l.b16 %v219
  %v1776 = vunpack.c.l.b16 %v220
  %v1777 = vunpack.c.l.b16 %v221
  %v1778 = vunpack.c.l.b16 %v222
  %v1779 = vunpack.c.l.b16 %v223
  %v1780 = vunpack.c.l.b16 %v224
  %v1781 = vunpack.c.l.b16 %v225
  %v1782 = vunpack.c.l.b16 %v226
  %v1783 = vunpack.c.l.b16 %v227
  %v1784 = vunpack.c.l.b16 %v228
  %v1785 = vunpack.c.l.b16 %v229
  %v1786 = vunpack.c.l.b16 %v230
  %v1787 = vunpack.c.l.b16 %v231
  %v1788 = vunpack.c.l.b16 %v232
  %v1789 = vunpack.c.l.b16 %v233
  %v1790 = vunpack.c.l.b16 %v234
  %v1791 = vunpack.c.l.b16 %v235
  %v1792 = vunpack.c.l.b16 %v236
  %v1793 = vunpack.c.l.b16 %v237
  %v1794 = vunpack.c.l.b16 %v238
  %v1795 = vunpack.c.l.b16 %v239
  %v1796 = vunpack.c.l.b16 %v240
  %v1797 = vunpack.c.l.b16 %v241
  %v1798 = vunpack.c.l.b16 %v242
  %v1799 = vunpack.c.l.b16 %v243
  %v1800 = vunpack.c.l.b16 %v244
  %v1801 = vunpack.c.l.b16 %v245
  %v1802 = vunpack.c.l.b16 %v246
  %v1803 = vunpack.c.l.b16 %v247
  %v1804 = vunpack.c.l.b16 %v248
  %v1805 = vunpack.c.l.b16 %v249
  %v1806 = vunpack.c.l.b16 %v250
  %v1807 = vunpack.c.l.b16 %v251
  %v1808 = vunpack.c.l.b16 %v252
  %v1809 = vunpack.c.l.b16 %v253
  %v1810 = vunpack.c.l.b16 %v254
  %v1811 = vunpack.c.l.b16 %v255
  %v1812 = vunpack.c.l.b16 %v256
  %v1813 = vunpack.c.l.b16 %v257
  %v1814 = vunpack.c.l.b16 %v258
  %v1815 = vunpack.c.l.b16 %v259
  %v1816 = vunpack.c.l.b16 %v260
  %v1817 = vunpack.c.l.b16 %v261
  %v1818 = vunpack.c.l.b16 %v262
  %v1819 = vunpack.c.l.b16 %v263
  %v1820 = vunpack.c.l.b16 %v264
  %v1821 = vunpack.c.l.b16 %v265
  %v1822 = vunpack.c.l.b16 %v266
  %v1823 = vunpack.c.l.b16 %v267
  %v1824 = vunpack.c.l.b16 %v268
  %v1825 = vunpack.c.l.b16 %v269
  %v1826 = vunpack.c.l.b16 %v270
  %v1827 = vunpack.c.l.b16 %v271
  %v1828 = vunpack.c.l.b16 %v272
  %v1829 = vunpack.c.l.b16 %v273
  %v1830 = vunpack.c.l.b16 %v274
  %v1831 = vunpack.c.l.b16 %v275
  %v1832 = vunpack.c.l.b16 %v276
  %v1833 = vunpack.c.l.b16 %v277
  %v1834 = vunpack.c.l.b16 %v278
  %v1835 = vunpack.c.l.b16 %v279
  %v1836 = vunpack.c.l.b16 %v280
  %v1837 = vunpack.c.l.b16 %v281
  %v1838 = vunpack.c.l.b16 %v282
  %v1839 = vunpack.c.l.b16 %v283
  %v1840 = vunpack.c.l.b16 %v284
  %v1841 = vunpack.c.l.b16 %v285
  %v1842 = vunpack.c.l.b16 %v286
  %v1843 = vunpack.c.l.b16 %v287
  %v1844 = vunpack.c.l.b16 %v288
  %v1845 = vunpack.c.l.b16 %v289
  %v1846 = vunpack.c.l.b16 %v290
  %v1847 = vunpack.c.l.b16 %v291
  %v1848 = vunpack.c.l.b16 %v292
  %v1849 = vunpack.c.l.b16 %v293
  %v1850 = vunpack.c.l.b16 %v294
  %v1851 = vunpack.c.l.b16 %v295
  %v1852 = vunpack.c.l.b16 %v296
  %v1853 = vunpack.c.l.b16 %v297
  %v1854 = vunpack.c.l.b16 %v298
  %v1855 = vunpack.c.l.b16 %v299
  %v1856 = vunpack.c.l.b16 %v300
  %v1857 = vunpack.c.l.b16 %v301
  %v1858 = vunpack.c.l.b16 %v302
  %v1859 = vunpack.c.l.b16 %v303
  %v1860 = vunpack.c.l.b16 %v304
  %v1861 = vunpack.c.l.b16 %v305
  %v1862 = vunpack.c.l.b16 %v306
  %v1863 = vunpack.c.l.b16 %v307
  %v1864 = vunpack.c.l.b16 %v308
  %v1865 = vunpack.c.l.b16 %v309
  %v1866 = vunpack.c.l.b16 %v310
  %v1867 = vunpack.c.l.b16 %v311
  %v1868 = vunpack.c.l.b16 %v312
  %v1869 = vunpack.c.l.b16 %v313
  %v1870 = vunpack.c.l.b16 %v314
  %v1871 = vunpack.c.l.b16 %v315
  %v1872 = vunpack.c.l.b16 %v316
  %v1873 = vunpack.c.l.b16 %v317
  %v1874 = vunpack.c.l.b16 %v318
  %v1875 = vunpack.c.l.b16 %v319
  %v1876 = vunpack.c.l.b16 %v320
  %v1877 = vunpack.c.l.b16 %v321
  %v1878 = vunpack.c.l.b16 %v322
  %v1879 = vunpack.c.l.b16 %v323
  %v1880 = vunpack.c.l.b16 %v324
  %v1881 = vunpack.c.l.b16 %v325
  %v1882 = vunpack.c.l.b16 %v326
  %v1883 = vunpack.c.l.b16 %v327
  %v1884 = vunpack.c.l.b16 %v328
  %v1885 = vunpack.c.l.b16 %v329
  %v1886 = vunpack.c.l.b16 %v330
  %v1887 = vunpack.c.l.b16 %v331
  %v1888 = vunpack.c.l.b16 %v332
  %v1889 = vunpack.c.l.b16 %v333
  %v1890 = vunpack.c.l.b16 %v334
  %v1891 = vunpack.c.l.b16 %v335
  %v1892 = vunpack.c.l.b16 %v336
  %v1893 = vunpack.c.l.b16 %v337
  %v1894 = vunpack.c.l.b16 %v338
  %v1895 = vunpack.c.l.b16 %v339
  %v1896 = vunpack.c.l.b16 %v340
  %v1897 = vunpack.c.l.b16 %v341
  %v1898 = vunpack.c.l.b16 %v342
  %v1899 = vunpack.c.l.b16 %v343
  %v1900 = vunpack.c.l.b16 %v344
  %v1901 = vunpack.c.l.b16 %v345
  %v1902 = vunpack.c.l.b16 %v346
  %v1903 = vunpack.c.l.b16 %v347
  %v1904 = vunpack.c.l.b16 %v348
  %v1905 = vunpack.c.l.b16 %v349
  %v1906 = vunpack.c.l.b16 %v350
  %v1907 = vunpack.c.l.b16 %v351
  %v1908 = vunpack.c.l.b16 %v352
  %v1909 = vunpack.c.l.b16 %v353
  %v1910 = vunpack.c.l.b16 %v354
  %v1911 = vunpack.c.l.b16 %v355
  %v1912 = vunpack.c.l.b16 %v356
  %v1913 = vunpack.c.l.b16 %v357
  %v1914 = vunpack.c.l.b16 %v358
  %v1915 = vunpack.c.l.b16 %v359
  %v1916 = vunpack.c.l.b16 %v360
  %v1917 = vunpack.c.l.b16 %v361
  %v1918 = vunpack.c.l.b16 %v362
  %v1919 = vunpack.c.l.b16 %v363
  %v1920 = vunpack.c.l.b16 %v364
  %v1921 = vunpack.c.l.b16 %v365
  %v1922 = vunpack.c.l.b16 %v366
  %v1923 = vunpack.c.l.b16 %v367
  %v1924 = vunpack.c.l.b16 %v368
  %v1925 = vunpack.c.l.b16 %v369
  %v1926 = vunpack.c.l.b16 %v370
  %v1927 = vunpack.c.l.b16 %v371
  %v1928 = vunpack.c.l.b16 %v372
  %v1929 = vunpack.c.l.b16 %v373
  %v1930 = vunpack.c.l.b16 %v374
  %v1931 = vunpack.c.l.b16 %v375
  %v1932 = vunpack.c.l.b16 %v376
  %v1933 = vunpack.c.l.b16 %v377
  %v1934 = vunpack.c.l.b16 %v378
  %v1935 = vunpack.c.l.b16 %v379
  %v1936 = vunpack.c.l.b16 %v380
  %v1937 = vunpack.c.l.b16 %v381
  %v1938 = vunpack.c.l.b16 %v382
  %v1939 = vunpack.c.l.b16 %v383
  %v1940 = vunpack.c.l.b16 %v384
  %v1941 = vunpack.c.l.b16 %v385
  %v1942 = vunpack.c.l.b16 %v386
  %v1943 = vunpack.c.l.b16 %v387
  %v1944 = vunpack.c.l.b16 %v388
  %v1945 = vunpack.c.l.b16 %v389
  %v1946 = vunpack.c.l.b16 %v390
  %v1947 = vunpack.c.l.b16 %v391
  %v1948 = vunpack.c.l.b16 %v392
  %v1949 = vunpack.c.l.b16 %v393
  %v1950 = vunpack.c.l.b16 %v394
  %v1951 = vunpack.c.l.b16 %v395
  %v1952 = vunpack.c.l.b16 %v396
  %v1953 = vunpack.c.l.b16 %v397
  %v1954 = vunpack.c.l.b16 %v398
  %v1955 = vunpack.c.l.b16 %v399
  %v1956 = vunpack.c.l.b16 %v400
  %v1957 = vunpack.c.l.b16 %v401
  %v1958 = vunpack.c.l.b16 %v402
  %v1959 = vunpack.c.l.b16 %v403
  %v1960 = vunpack.c.l.b16 %v404
  %v1961 = vunpack.c.l.b16 %v405
  %v1962 = vunpack.c.l.b16 %v406
  %v1963 = vunpack.c.l.b16 %v407
  %v1964 = vunpack.c.l.b16 %v408
  %v1965 = vunpack.c.l.b16 %v409
  %v1966 = vunpack.c.l.b16 %v410
  %v1967 = vunpack.c.l.b16 %v411
  %v1968 = vunpack.c.l.b16 %v412
  %v1969 = vunpack.c.l.b16 %v413
  %v1970 = vunpack.c.l.b16 %v414
  %v1971 = vunpack.c.l.b16 %v415
  %v1972 = vunpack.c.l.b16 %v416
  %v1973 = vunpack.c.l.b16 %v417
  %v1974 = vunpack.c.l.b16 %v418
  %v1975 = vunpack.c.l.b16 %v419
  %v1976 = vunpack.c.l.b16 %v420
  %v1977 = vunpack.c.l.b16 %v421
  %v1978 = vunpack.c.l.b16 %v422
  %v1979 = vunpack.c.l.b16 %v423
  %v1980 = vunpack.c.l.b16 %v424
  %v1981 = vunpack.c.l.b16 %v425
  %v1982 = vunpack.c.l.b16 %v426
  %v1983 = vunpack.c.l.b16 %v427
  %v1984 = vunpack.c.l.b16 %v428
  %v1985 = vunpack.c.l.b16 %v429
  %v1986 = vunpack.c.l.b16 %v430
  %v1987 = vunpack.c.l.b16 %v431
  %v1988 = vunpack.c.l.b16 %v432
  %v1989 = vunpack.c.l.b16 %v433
  %v1990 = vunpack.c.l.b16 %v434
  %v1991 = vunpack.c.l.b16 %v435
  %v1992 = vunpack.c.l.b16 %v436
  %v1993 = vunpack.c.l.b16 %v437
  %v1994 = vunpack.c.l.b16 %v438
  %v1995 = vunpack.c.l.b16 %v439
  %v1996 = vunpack.c.l.b16 %v440
  %v1997 = vunpack.c.l.b16 %v441
  %v1998 = vunpack.c.l.b16 %v442
  %v1999 = vunpack.c.l.b16 %v443
  %v2000 = vunpack.c.l.b16 %v444
  %v2001 = vunpack.c.l.b16 %v445
  %v2002 = vunpack.c.l.b16 %v446
  %v2003 = vunpack.c.l.b16 %v447
  %v2004 = vunpack.c.l.b16 %v448
  %v2005 = vunpack.c.l.b16 %v449
  %v2006 = vunpack.c.l.b16 %v450
  %v2007 = vunpack.c.l.b16 %v451
  %v2008 = vunpack.c.l.b16 %v452
  %v2009 = vunpack.c.l.b16 %v453
  %v2010 = vunpack.c.l.b16 %v454
  %v2011 = vunpack.c.l.b16 %v455
  %v2012 = vunpack.c.l.b16 %v456
  %v2013 = vunpack.c.l.b16 %v457
  %v2014 = vunpack.c.l.b16 %v458
  %v2015 = vunpack.c.l.b16 %v459
  %v2016 = vunpack.c.l.b16 %v460
  %v2017 = vunpack.c.l.b16 %v461
  %v2018 = vunpack.c.l.b16 %v462
  %v2019 = vunpack.c.l.b16 %v463
  %v2020 = vunpack.c.l.b16 %v464
  %v2021 = vunpack.c.l.b16 %v465
  %v2022 = vunpack.c.l.b16 %v466
  %v2023 = vunpack.c.l.b16 %v467
  %v2024 = vunpack.c.l.b16 %v468
  %v2025 = vunpack.c.l.b16 %v469
  %v2026 = vunpack.c.l.b16 %v470
  %v2027 = vunpack.c.l.b16 %v471
  %v2028 = vunpack.c.l.b16 %v472
  %v2029 = vunpack.c.l.b16 %v473
  %v2030 = vunpack.c.l.b16 %v474
  %v2031 = vunpack.c.l.b16 %v475
  %v2032 = vunpack.c.l.b16 %v476
  %v2033 = vunpack.c.l.b16 %v477
  %v2034 = vunpack.c.l.b16 %v478
  %v2035 = vunpack.c.l.b16 %v479
  %v2036 = vunpack.c.l.b16 %v480
  %v2037 = vunpack.c.l.b16 %v481
  %v2038 = vunpack.c.l.b16 %v482
  %v2039 = vunpack.c.l.b16 %v483
  %v2040 = vunpack.c.l.b16 %v484
  %v2041 = vunpack.c.l.b16 %v485
  %v2042 = vunpack.c.l.b16 %v486
  %v2043 = vunpack.c.l.b16 %v487
  %v2044 = vunpack.c.l.b16 %v488
  %v2045 = vunpack.c.l.b16 %v489
  %v2046 = vunpack.c.l.b16 %v490
  %v2047 = vunpack.c.l.b16 %v491
  %v2048 = vunpack.c.l.b16 %v492
  %v2049 = vunpack.c.l.b16 %v493
  %v2050 = vunpack.c.l.b16 %v494
  %v2051 = vunpack.c.l.b16 %v495
  %v2052 = vunpack.c.l.b16 %v496
  %v2053 = vunpack.c.l.b16 %v497
  %v2054 = vunpack.c.l.b16 %v498
  %v2055 = vunpack.c.l.b16 %v499
  %v2056 = vunpack.c.l.b16 %v500
  %v2057 = vunpack.c.l.b16 %v501
  %v2058 = vunpack.c.l.b16 %v502
  %v2059 = vunpack.c.l.b16 %v503
  %v2060 = vunpack.c.l.b16 %v504
  %v2061 = vunpack.c.l.b16 %v505
  %v2062 = vunpack.c.l.b16 %v506
  %v2063 = vunpack.c.l.b16 %v507
  %v2064 = vunpack.c.l.b16 %v508
  %v2065 = vunpack.c.l.b16 %v509
  %v2066 = vunpack.c.l.b16 %v510
  %v2067 = vunpack.c.l.b16 %v511
  %v2068 = vunpack.c.l.b16 %v512
  %v2069 = vunpack.c.l.b16 %v513
  %v2070 = vunpack.c.l.b16 %v514
  %v2071 = vunpack.c.l.b16 %v515
  %v2072 = vunpack.c.l.b16 %v516
  %v2073 = vunpack.c.l.b16 %v517
  %v2074 = vunpack.c.l.b16 %v518
  %v2075 = vunpack.c.l.b16 %v519
  %v2076 = vunpack.c.l.b16 %v520
  %v2077 = vunpack.c.l.b16 %v521
  %v2078 = vunpack.c.l.b16 %v522
  %v2079 = vunpack.c.l.b16 %v523
  %v2080 = vunpack.c.l.b16 %v524
  %v2081 = vunpack.c.l.b16 %v525
  %v2082 = vunpack.c.l.b16 %v526
  %v2083 = vunpack.c.l.b16 %v527
  %v2084 = vunpack.c.l.b16 %v528
  %v2085 = vunpack.c.l.b16 %v529
  %v2086 = vunpack.c.l.b16 %v530
  %v2087 = vunpack.c.l.b16 %v531
  %v2088 = vunpack.c.l.b16 %v532
  %v2089 = vunpack.c.l.b16 %v533
  %v2090 = vunpack.c.l.b16 %v534
  %v2091 = vunpack.c.l.b16 %v535
  %v2092 = vpack.c.b16 %v1751, %v1750
  %v2093 = vpack.c.b16 %v1753, %v1752
  %v2094 = vpack.c.b16 %v1755, %v1754
  %v2095 = vpack.c.b16 %v1757, %v1756
  %v2096 = vpack.c.b16 %v1759, %v1758
  %v2097 = vpack.c.b16 %v1761, %v1760
  %v2098 = vpack.c.b16 %v1763, %v1762
  %v2099 = vpack.c.b16 %v1765, %v1764
  %v2100 = vpack.c.b16 %v1767, %v1766
  %v2101 = vpack.c.b16 %v1769, %v1768
  %v2102 = vpack.c.b16 %v1771, %v1770
  %v2103 = vpack.c.b16 %v1773, %v1772
  %v2104 = vpack.c.b16 %v1775, %v1774
  %v2105 = vpack.c.b16 %v1777, %v1776
  %v2106 = vpack.c.b16 %v1779, %v1778
  %v2107 = vpack.c.b16 %v1781, %v1780
  %v2108 = vpack.c.b16 %v1783, %v1782
  %v2109 = vpack.c.b16 %v1785, %v1784
  %v2110 = vpack.c.b16 %v1787, %v1786
  %v2111 = vpack.c.b16 %v1789, %v1788
  %v2112 = vpack.c.b16 %v1791, %v1790
  %v2113 = vpack.c.b16 %v1793, %v1792
  %v2114 = vpack.c.b16 %v1795, %v1794
  %v2115 = vpack.c.b16 %v1797, %v1796
  %v2116 = vpack.c.b16 %v1799, %v1798
  %v2117 = vpack.c.b16 %v1801, %v1800
  %v2118 = vpack.c.b16 %v1803, %v1802
  %v2119 = vpack.c.b16 %v1805, %v1804
  %v2120 = vpack.c.b16 %v1807, %v1806
  %v2121 = vpack.c.b16 %v1809, %v1808
  %v2122 = vpack.c.b16 %v1811, %v1810
  %v2123 = vpack.c.b16 %v1813, %v1812
  %v2124 = vpack.c.b16 %v1815, %v1814
  %v2125 = vpack.c.b16 %v1817, %v1816
  %v2126 = vpack.c.b16 %v1819, %v1818
  %v2127 = vpack.c.b16 %v1821, %v1820
  %v2128 = vpack.c.b16 %v1823, %v1822
  %v2129 = vpack.c.b16 %v1825, %v1824
  %v2130 = vpack.c.b16 %v1827, %v1826
  %v2131 = vpack.c.b16 %v1829, %v1828
  %v2132 = vpack.c.b16 %v1831, %v1830
  %v2133 = vpack.c.b16 %v1833, %v1832
  %v2134 = vpack.c.b16 %v1835, %v1834
  %v2135 = vpack.c.b16 %v1837, %v1836
  %v2136 = vpack.c.b16 %v1839, %v1838
  %v2137 = vpack.c.b16 %v1841, %v1840
  %v2138 = vpack.c.b16 %v1843, %v1842
  %v2139 = vpack.c.b16 %v1845, %v1844
  %v2140 = vpack.c.b16 %v1847, %v1846
  %v2141 = vpack.c.b16 %v1849, %v1848
  %v2142 = vpack.c.b16 %v1851, %v1850
  %v2143 = vpack.c.b16 %v1853, %v1852
  %v2144 = vpack.c.b16 %v1855, %v1854
  %v2145 = vpack.c.b16 %v1857, %v1856
  %v2146 = vpack.c.b16 %v1859, %v1858
  %v2147 = vpack.c.b16 %v1861, %v1860
  %v2148 = vpack.c.b16 %v1863, %v1862
  %v2149 = vpack.c.b16 %v1865, %v1864
  %v2150 = vpack.c.b16 %v1867, %v1866
  %v2151 = vpack.c.b16 %v1869, %v1868
  %v2152 = vpack.c.b16 %v1871, %v1870
  %v2153 = vpack.c.b16 %v1873, %v1872
  %v2154 = vpack.c.b16 %v1875, %v1874
  %v2155 = vpack.c.b16 %v1877, %v1876
  %v2156 = vpack.c.b16 %v1879, %v1878
  %v2157 = vpack.c.b16 %v1881, %v1880
  %v2158 = vpack.c.b16 %v1883, %v1882
  %v2159 = vpack.c.b16 %v1885, %v1884
  %v2160 = vpack.c.b16 %v1887, %v1886
  %v2161 = vpack.c.b16 %v1889, %v1888
  %v2162 = vpack.c.b16 %v1891, %v1890
  %v2163 = vpack.c.b16 %v1893, %v1892
  %v2164 = vpack.c.b16 %v1895, %v1894
  %v2165 = vpack.c.b16 %v1897, %v1896
  %v2166 = vpack.c.b16 %v1899, %v1898
  %v2167 = vpack.c.b16 %v1901, %v1900
  %v2168 = vpack.c.b16 %v1903, %v1902
  %v2169 = vpack.c.b16 %v1905, %v1904
  %v2170 = vpack.c.b16 %v1907, %v1906
  %v2171 = vpack.c.b16 %v1909, %v1908
  %v2172 = vpack.c.b16 %v1911, %v1910
  %v2173 = vpack.c.b16 %v1913, %v1912
  %v2174 = vpack.c.b16 %v1915, %v1914
  %v2175 = vpack.c.b16 %v1917, %v1916
  %v2176 = vpack.c.b16 %v1919, %v1918
  %v2177 = vpack.c.b16 %v1921, %v1920
  %v2178 = vpack.c.b16 %v1923, %v1922
  %v2179 = vpack.c.b16 %v1925, %v1924
  %v2180 = vpack.c.b16 %v1927, %v1926
  %v2181 = vpack.c.b16 %v1929, %v1928
  %v2182 = vpack.c.b16 %v1931, %v1930
  %v2183 = vpack.c.b16 %v1933, %v1932
  %v2184 = vpack.c.b16 %v1935, %v1934
  %v2185 = vpack.c.b16 %v1937, %v1936
  %v2186 = vpack.c.b16 %v1939, %v1938
  %v2187 = vpack.c.b16 %v1941, %v1940
  %v2188 = vpack.c.b16 %v1943, %v1942
  %v2189 = vpack.c.b16 %v1945, %v1944
  %v2190 = vpack.c.b16 %v1947, %v1946
  %v2191 = vpack.c.b16 %v1949, %v1948
  %v2192 = vpack.c.b16 %v1951, %v1950
  %v2193 = vpack.c.b16 %v1953, %v1952
  %v2194 = vpack.c.b16 %v1955, %v1954
  %v2195 = vpack.c.b16 %v1957, %v1956
  %v2196 = vpack.c.b16 %v1959, %v1958
  %v2197 = vpack.c.b16 %v1961, %v1960
  %v2198 = vpack.c.b16 %v1963, %v1962
  %v2199 = vpack.c.b16 %v1965, %v1964
  %v2200 = vpack.c.b16 %v1967, %v1966
  %v2201 = vpack.c.b16 %v1969, %v1968
  %v2202 = vpack.c.b16 %v1971, %v1970
  %v2203 = vpack.c.b16 %v1973, %v1972
  %v2204 = vpack.c.b16 %v1975, %v1974
  %v2205 = vpack.c.b16 %v1977, %v1976
  %v2206 = vpack.c.b16 %v1979, %v1978
  %v2207 = vpack.c.b16 %v1981, %v1980
  %v2208 = vpack.c.b16 %v1983, %v1982
  %v2209 = vpack.c.b16 %v1985, %v1984
  %v2210 = vpack.c.b16 %v1987, %v1986
  %v2211 = vpack.c.b16 %v1989, %v1988
  %v2212 = vpack.c.b16 %v1991, %v1990
  %v2213 = vpack.c.b16 %v1993, %v1992
  %v2214 = vpack.c.b16 %v1995, %v1994
  %v2215 = vpack.c.b16 %v1997, %v1996
  %v2216 = vpack.c.b16 %v1999, %v1998
  %v2217 = vpack.c.b16 %v2001, %v2000
  %v2218 = vpack.c.b16 %v2003, %v2002
  %v2219 = vpack.c.b16 %v2005, %v2004
  %v2220 = vpack.c.b16 %v2007, %v2006
  %v2221 = vpack.c.b16 %v2009, %v2008
  %v2222 = vpack.c.b16 %v2011, %v2010
  %v2223 = vpack.c.b16 %v2013, %v2012
  %v2224 = vpack.c.b16 %v2015, %v2014
  %v2225 = vpack.c.b16 %v2017, %v2016
  %v2226 = vpack.c.b16 %v2019, %v2018
  %v2227 = vpack.c.b16 %v2021, %v2020
  %v2228 = vpack.c.b16 %v2023, %v2022
  %v2229 = vpack.c.b16 %v2025, %v2024
  %v2230 = vpack.c.b16 %v2027, %v2026
  %v2231 = vpack.c.b16 %v2029, %v2028
  %v2232 = vpack.c.b16 %v2031, %v2030
  %v2233 = vpack.c.b16 %v2033, %v2032
  %v2234 = vpack.c.b16 %v2035, %v2034
  %v2235 = vpack.c.b16 %v2037, %v2036
  %v2236 = vpack.c.b16 %v2039, %v2038
  %v2237 = vpack.c.b16 %v2041, %v2040
  %v2238 = vpack.c.b16 %v2043, %v2042
  %v2239 = vpack.c.b16 %v2045, %v2044
  %v2240 = vpack.c.b16 %v2047, %v2046
  %v2241 = vpack.c.b16 %v2049, %v2048
  %v2242 = vpack.c.b16 %v2051, %v2050
  %v2243 = vpack.c.b16 %v2053, %v2052
  %v2244 = vpack.c.b16 %v2055, %v2054
  %v2245 = vpack.c.b16 %v2057, %v2056
  %v2246 = vpack.c.b16 %v2059, %v2058
  %v2247 = vpack.c.b16 %v2061, %v2060
  %v2248 = vpack.c.b16 %v2063, %v2062
  %v2249 = vpack.c.b16 %v2065, %v2064
  %v2250 = vpack.c.b16 %v2067, %v2066
  %v2251 = vpack.c.b16 %v2069, %v2068
  %v2252 = vpack.c.b16 %v2071, %v2070
  %v2253 = vpack.c.b16 %v2073, %v2072
  %v2254 = vpack.c.b16 %v2075, %v2074
  %v2255 = vpack.c.b16 %v2077, %v2076
  %v2256 = vpack.c.b16 %v2079, %v2078
  %v2257 = vpack.c.b16 %v2081, %v2080
  %v2258 = vpack.c.b16 %v2083, %v2082
  %v2259 = vpack.c.b16 %v2085, %v2084
  %v2260 = vpack.c.b16 %v2087, %v2086
  %v2261 = vpack.c.b16 %v2089, %v2088
  %v2262 = vpack.c.b16 %v2091, %v2090
  %vm2434 = vcmask 392192
  %v2436 = vsel %vm2434, %v1085, 0
  %v2439 = vsel %vm2434, %v1107, 0
  %v2442 = vsel %vm2434, %v1129, 0
  %v2445 = vsel %vm2434, %v1151, 0
  %v2448 = vsel %vm2434, %v1173, 0
  %v2451 = vsel %vm2434, %v1195, 0
  %v2454 = vsel %vm2434, %v1217, 0
  %v2457 = vsel %vm2434, %v1239, 0
  %2459 = vmatprep.subr.bf16.mxu0 0
  %2460 = vmatpush1.bf16.msra.mxu0 %v2092
  %2461 = vmatprep.subr.bf16.mxu0 0
  %2462 = vmatpush1.bf16.msra.mxu0 %v2093
  %2463 = vmatprep.subr.bf16.mxu0 0
  %2464 = vmatpush1.bf16.msra.mxu0 %v2094
  %2465 = vmatprep.subr.bf16.mxu0 0
  %2466 = vmatpush1.bf16.msra.mxu0 %v2095
  %2467 = vmatprep.subr.bf16.mxu0 0
  %2468 = vmatpush1.bf16.msra.mxu0 %v2096
  %2469 = vmatprep.subr.bf16.mxu0 0
  %2470 = vmatpush1.bf16.msra.mxu0 %v2097
  %2471 = vmatprep.subr.bf16.mxu0 0
  %2472 = vmatpush1.bf16.msra.mxu0 %v2098
  %2473 = vmatprep.subr.bf16.mxu0 0
  %2474 = vmatpush1.bf16.msra.mxu0 %v2099
  %2475 = vmatprep.subr.bf16.mxu0 0
  %2476 = vmatpush1.bf16.msra.mxu0 %v2100
  %2477 = vmatprep.subr.bf16.mxu0 0
  %2478 = vmatpush1.bf16.msra.mxu0 %v2101
  %2479 = vmatprep.subr.bf16.mxu0 0
  %2480 = vmatpush1.bf16.msra.mxu0 %v2102
  %2481 = vmatprep.subr.bf16.mxu0 0
  %2482 = vmatpush1.bf16.msra.mxu0 %v2103
  %2483 = vmatprep.subr.bf16.mxu0 0
  %2484 = vmatpush1.bf16.msra.mxu0 %v2104
  %2485 = vmatprep.subr.bf16.mxu0 0
  %2486 = vmatpush1.bf16.msra.mxu0 %v2105
  %2487 = vmatprep.subr.bf16.mxu0 0
  %2488 = vmatpush1.bf16.msra.mxu0 %v2106
  %2489 = vmatprep.subr.bf16.mxu0 0
  %2490 = vmatpush1.bf16.msra.mxu0 %v2107
  %2491 = vmatprep.mubr.bf16.mxu0 %v1065
  %2492 = vmatmul.mubr.bf16.gmra.mrb[0].mxu0 %v1064
  %v2493 = vpop.f32.mrb[0].mxu0
  %v2494 = vadd.f32 0.0, %v2493
  %v2495 = vpop.f32.mrb[0].mxu0
  %v2496 = vpop.f32.mrb[0].mxu0
  %v2497 = vadd.f32 0.0, %v2496
  %v2498 = vpop.f32.mrb[0].mxu0
  %2499 = vmatprep.mubr.bf16.mxu0 %v1087
  %2500 = vmatmul.mubr.bf16.gmra.mrb[0].mxu0 %v1086
  %v2501 = vpop.f32.mrb[0].mxu0
  %v2502 = vadd.f32 0.0, %v2501
  %v2503 = vpop.f32.mrb[0].mxu0
  %v2504 = vpop.f32.mrb[0].mxu0
  %v2505 = vadd.f32 0.0, %v2504
  %v2506 = vpop.f32.mrb[0].mxu0
  %2507 = vmatprep.mubr.bf16.mxu0 %v1109
  %2508 = vmatmul.mubr.bf16.gmra.mrb[0].mxu0 %v1108
  %v2509 = vpop.f32.mrb[0].mxu0
  %v2510 = vadd.f32 0.0, %v2509
  %v2511 = vpop.f32.mrb[0].mxu0
  %v2512 = vpop.f32.mrb[0].mxu0
  %v2513 = vadd.f32 0.0, %v2512
  %v2514 = vpop.f32.mrb[0].mxu0
  %2515 = vmatprep.mubr.bf16.mxu0 %v1131
  %2516 = vmatmul.mubr.bf16.gmra.mrb[0].mxu0 %v1130
  %v2517 = vpop.f32.mrb[0].mxu0
  %v2518 = vadd.f32 0.0, %v2517
  %v2519 = vpop.f32.mrb[0].mxu0
  %v2520 = vpop.f32.mrb[0].mxu0
  %v2521 = vadd.f32 0.0, %v2520
  %v2522 = vpop.f32.mrb[0].mxu0
  %2523 = vmatprep.mubr.bf16.mxu0 %v1153
  %2524 = vmatmul.mubr.bf16.gmra.mrb[0].mxu0 %v1152
  %v2525 = vpop.f32.mrb[0].mxu0
  %v2526 = vadd.f32 0.0, %v2525
  %v2527 = vpop.f32.mrb[0].mxu0
  %v2528 = vpop.f32.mrb[0].mxu0
  %v2529 = vadd.f32 0.0, %v2528
  %v2530 = vpop.f32.mrb[0].mxu0
  %2531 = vmatprep.mubr.bf16.mxu0 %v1175
  %2532 = vmatmul.mubr.bf16.gmra.mrb[0].mxu0 %v1174
  %v2533 = vpop.f32.mrb[0].mxu0
  %v2534 = vadd.f32 0.0, %v2533
  %v2535 = vpop.f32.mrb[0].mxu0
  %v2536 = vpop.f32.mrb[0].mxu0
  %v2537 = vadd.f32 0.0, %v2536
  %v2538 = vpop.f32.mrb[0].mxu0
  %2539 = vmatprep.mubr.bf16.mxu0 %v1197
  %2540 = vmatmul.mubr.bf16.gmra.mrb[0].mxu0 %v1196
  %v2541 = vpop.f32.mrb[0].mxu0
  %v2542 = vadd.f32 0.0, %v2541
  %v2543 = vpop.f32.mrb[0].mxu0
  %v2544 = vpop.f32.mrb[0].mxu0
  %v2545 = vadd.f32 0.0, %v2544
  %v2546 = vpop.f32.mrb[0].mxu0
  %2547 = vmatprep.mubr.bf16.mxu0 %v1219
  %2548 = vmatmul.mubr.bf16.gmra.mrb[0].mxu0 %v1218
  %v2549 = vpop.f32.mrb[0].mxu0
  %v2550 = vadd.f32 0.0, %v2549
  %v2551 = vpop.f32.mrb[0].mxu0
  %v2552 = vpop.f32.mrb[0].mxu0
  %v2553 = vadd.f32 0.0, %v2552
  %v2554 = vpop.f32.mrb[0].mxu0
  %2555 = vdwg.mxu0
  %2556 = vmatprep.subr.bf16.mxu0 0
  %2557 = vmatpush1.bf16.msra.mxu0 %v2108
  %2558 = vmatprep.subr.bf16.mxu0 0
  %2559 = vmatpush1.bf16.msra.mxu0 %v2109
  %2560 = vmatprep.subr.bf16.mxu0 0
  %2561 = vmatpush1.bf16.msra.mxu0 %v2110
  %2562 = vmatprep.subr.bf16.mxu0 0
  %2563 = vmatpush1.bf16.msra.mxu0 %v2111
  %2564 = vmatprep.subr.bf16.mxu0 0
  %2565 = vmatpush1.bf16.msra.mxu0 %v2112
  %2566 = vmatprep.subr.bf16.mxu0 0
  %2567 = vmatpush1.bf16.msra.mxu0 %v2113
  %2568 = vmatprep.subr.bf16.mxu0 0
  %2569 = vmatpush1.bf16.msra.mxu0 %v2114
  %2570 = vmatprep.subr.bf16.mxu0 0
  %2571 = vmatpush1.bf16.msra.mxu0 %v2115
  %2572 = vmatprep.subr.bf16.mxu0 0
  %2573 = vmatpush1.bf16.msra.mxu0 %v2116
  %2574 = vmatprep.subr.bf16.mxu0 0
  %2575 = vmatpush1.bf16.msra.mxu0 %v2117
  %2576 = vmatprep.subr.bf16.mxu0 0
  %2577 = vmatpush1.bf16.msra.mxu0 %v2118
  %2578 = vmatprep.subr.bf16.mxu0 0
  %2579 = vmatpush1.bf16.msra.mxu0 %v2119
  %2580 = vmatprep.subr.bf16.mxu0 0
  %2581 = vmatpush1.bf16.msra.mxu0 %v2120
  %2582 = vmatprep.subr.bf16.mxu0 0
  %2583 = vmatpush1.bf16.msra.mxu0 %v2121
  %2584 = vmatprep.subr.bf16.mxu0 0
  %2585 = vmatpush1.bf16.msra.mxu0 %v2122
  %2586 = vmatprep.subr.bf16.mxu0 0
  %2587 = vmatpush1.bf16.msra.mxu0 %v2123
  %2588 = vmatprep.mubr.bf16.mxu0 %v1067
  %2589 = vmatmul.mubr.bf16.gmra.mrb[0].mxu0 %v1066
  %v2590 = vpop.f32.mrb[0].mxu0
  %v2591 = vadd.f32 %v2494, %v2590
  %v2592 = vpop.f32.mrb[0].mxu0
  %v2593 = vpop.f32.mrb[0].mxu0
  %v2594 = vadd.f32 %v2497, %v2593
  %v2595 = vpop.f32.mrb[0].mxu0
  %2596 = vmatprep.mubr.bf16.mxu0 %v1089
  %2597 = vmatmul.mubr.bf16.gmra.mrb[0].mxu0 %v1088
  %v2598 = vpop.f32.mrb[0].mxu0
  %v2599 = vadd.f32 %v2502, %v2598
  %v2600 = vpop.f32.mrb[0].mxu0
  %v2601 = vpop.f32.mrb[0].mxu0
  %v2602 = vadd.f32 %v2505, %v2601
  %v2603 = vpop.f32.mrb[0].mxu0
  %2604 = vmatprep.mubr.bf16.mxu0 %v1111
  %2605 = vmatmul.mubr.bf16.gmra.mrb[0].mxu0 %v1110
  %v2606 = vpop.f32.mrb[0].mxu0
  %v2607 = vadd.f32 %v2510, %v2606
  %v2608 = vpop.f32.mrb[0].mxu0
  %v2609 = vpop.f32.mrb[0].mxu0
  %v2610 = vadd.f32 %v2513, %v2609
  %v2611 = vpop.f32.mrb[0].mxu0
  %2612 = vmatprep.mubr.bf16.mxu0 %v1133
  %2613 = vmatmul.mubr.bf16.gmra.mrb[0].mxu0 %v1132
  %v2614 = vpop.f32.mrb[0].mxu0
  %v2615 = vadd.f32 %v2518, %v2614
  %v2616 = vpop.f32.mrb[0].mxu0
  %v2617 = vpop.f32.mrb[0].mxu0
  %v2618 = vadd.f32 %v2521, %v2617
  %v2619 = vpop.f32.mrb[0].mxu0
  %2620 = vmatprep.mubr.bf16.mxu0 %v1155
  %2621 = vmatmul.mubr.bf16.gmra.mrb[0].mxu0 %v1154
  %v2622 = vpop.f32.mrb[0].mxu0
  %v2623 = vadd.f32 %v2526, %v2622
  %v2624 = vpop.f32.mrb[0].mxu0
  %v2625 = vpop.f32.mrb[0].mxu0
  %v2626 = vadd.f32 %v2529, %v2625
  %v2627 = vpop.f32.mrb[0].mxu0
  %2628 = vmatprep.mubr.bf16.mxu0 %v1177
  %2629 = vmatmul.mubr.bf16.gmra.mrb[0].mxu0 %v1176
  %v2630 = vpop.f32.mrb[0].mxu0
  %v2631 = vadd.f32 %v2534, %v2630
  %v2632 = vpop.f32.mrb[0].mxu0
  %v2633 = vpop.f32.mrb[0].mxu0
  %v2634 = vadd.f32 %v2537, %v2633
  %v2635 = vpop.f32.mrb[0].mxu0
  %2636 = vmatprep.mubr.bf16.mxu0 %v1199
  %2637 = vmatmul.mubr.bf16.gmra.mrb[0].mxu0 %v1198
  %v2638 = vpop.f32.mrb[0].mxu0
  %v2639 = vadd.f32 %v2542, %v2638
  %v2640 = vpop.f32.mrb[0].mxu0
  %v2641 = vpop.f32.mrb[0].mxu0
  %v2642 = vadd.f32 %v2545, %v2641
  %v2643 = vpop.f32.mrb[0].mxu0
  %2644 = vmatprep.mubr.bf16.mxu0 %v1221
  %2645 = vmatmul.mubr.bf16.gmra.mrb[0].mxu0 %v1220
  %v2646 = vpop.f32.mrb[0].mxu0
  %v2647 = vadd.f32 %v2550, %v2646
  %v2648 = vpop.f32.mrb[0].mxu0
  %v2649 = vpop.f32.mrb[0].mxu0
  %v2650 = vadd.f32 %v2553, %v2649
  %v2651 = vpop.f32.mrb[0].mxu0
  %2652 = vdwg.mxu0
  %2653 = vmatprep.subr.bf16.mxu0 0
  %2654 = vmatpush1.bf16.msra.mxu0 %v2124
  %2655 = vmatprep.subr.bf16.mxu0 0
  %2656 = vmatpush1.bf16.msra.mxu0 %v2125
  %2657 = vmatprep.subr.bf16.mxu0 0
  %2658 = vmatpush1.bf16.msra.mxu0 %v2126
  %2659 = vmatprep.subr.bf16.mxu0 0
  %2660 = vmatpush1.bf16.msra.mxu0 %v2127
  %2661 = vmatprep.subr.bf16.mxu0 0
  %2662 = vmatpush1.bf16.msra.mxu0 %v2128
  %2663 = vmatprep.subr.bf16.mxu0 0
  %2664 = vmatpush1.bf16.msra.mxu0 %v2129
  %2665 = vmatprep.subr.bf16.mxu0 0
  %2666 = vmatpush1.bf16.msra.mxu0 %v2130
  %2667 = vmatprep.subr.bf16.mxu0 0
  %2668 = vmatpush1.bf16.msra.mxu0 %v2131
  %2669 = vmatprep.subr.bf16.mxu0 0
  %2670 = vmatpush1.bf16.msra.mxu0 %v2132
  %2671 = vmatprep.subr.bf16.mxu0 0
  %2672 = vmatpush1.bf16.msra.mxu0 %v2133
  %2673 = vmatprep.subr.bf16.mxu0 0
  %2674 = vmatpush1.bf16.msra.mxu0 %v2134
  %2675 = vmatprep.subr.bf16.mxu0 0
  %2676 = vmatpush1.bf16.msra.mxu0 %v2135
  %2677 = vmatprep.subr.bf16.mxu0 0
  %2678 = vmatpush1.bf16.msra.mxu0 %v2136
  %2679 = vmatprep.subr.bf16.mxu0 0
  %2680 = vmatpush1.bf16.msra.mxu0 %v2137
  %2681 = vmatprep.subr.bf16.mxu0 0
  %2682 = vmatpush1.bf16.msra.mxu0 %v2138
  %2683 = vmatprep.subr.bf16.mxu0 0
  %2684 = vmatpush1.bf16.msra.mxu0 %v2139
  %2685 = vmatprep.mubr.bf16.mxu0 %v1069
  %2686 = vmatmul.mubr.bf16.gmra.mrb[0].mxu0 %v1068
  %v2687 = vpop.f32.mrb[0].mxu0
  %v2688 = vadd.f32 %v2591, %v2687
  %v2689 = vpop.f32.mrb[0].mxu0
  %v2690 = vpop.f32.mrb[0].mxu0
  %v2691 = vadd.f32 %v2594, %v2690
  %v2692 = vpop.f32.mrb[0].mxu0
  %2693 = vmatprep.mubr.bf16.mxu0 %v1091
  %2694 = vmatmul.mubr.bf16.gmra.mrb[0].mxu0 %v1090
  %v2695 = vpop.f32.mrb[0].mxu0
  %v2696 = vadd.f32 %v2599, %v2695
  %v2697 = vpop.f32.mrb[0].mxu0
  %v2698 = vpop.f32.mrb[0].mxu0
  %v2699 = vadd.f32 %v2602, %v2698
  %v2700 = vpop.f32.mrb[0].mxu0
  %2701 = vmatprep.mubr.bf16.mxu0 %v1113
  %2702 = vmatmul.mubr.bf16.gmra.mrb[0].mxu0 %v1112
  %v2703 = vpop.f32.mrb[0].mxu0
  %v2704 = vadd.f32 %v2607, %v2703
  %v2705 = vpop.f32.mrb[0].mxu0
  %v2706 = vpop.f32.mrb[0].mxu0
  %v2707 = vadd.f32 %v2610, %v2706
  %v2708 = vpop.f32.mrb[0].mxu0
  %2709 = vmatprep.mubr.bf16.mxu0 %v1135
  %2710 = vmatmul.mubr.bf16.gmra.mrb[0].mxu0 %v1134
  %v2711 = vpop.f32.mrb[0].mxu0
  %v2712 = vadd.f32 %v2615, %v2711
  %v2713 = vpop.f32.mrb[0].mxu0
  %v2714 = vpop.f32.mrb[0].mxu0
  %v2715 = vadd.f32 %v2618, %v2714
  %v2716 = vpop.f32.mrb[0].mxu0
  %2717 = vmatprep.mubr.bf16.mxu0 %v1157
  %2718 = vmatmul.mubr.bf16.gmra.mrb[0].mxu0 %v1156
  %v2719 = vpop.f32.mrb[0].mxu0
  %v2720 = vadd.f32 %v2623, %v2719
  %v2721 = vpop.f32.mrb[0].mxu0
  %v2722 = vpop.f32.mrb[0].mxu0
  %v2723 = vadd.f32 %v2626, %v2722
  %v2724 = vpop.f32.mrb[0].mxu0
  %2725 = vmatprep.mubr.bf16.mxu0 %v1179
  %2726 = vmatmul.mubr.bf16.gmra.mrb[0].mxu0 %v1178
  %v2727 = vpop.f32.mrb[0].mxu0
  %v2728 = vadd.f32 %v2631, %v2727
  %v2729 = vpop.f32.mrb[0].mxu0
  %v2730 = vpop.f32.mrb[0].mxu0
  %v2731 = vadd.f32 %v2634, %v2730
  %v2732 = vpop.f32.mrb[0].mxu0
  %2733 = vmatprep.mubr.bf16.mxu0 %v1201
  %2734 = vmatmul.mubr.bf16.gmra.mrb[0].mxu0 %v1200
  %v2735 = vpop.f32.mrb[0].mxu0
  %v2736 = vadd.f32 %v2639, %v2735
  %v2737 = vpop.f32.mrb[0].mxu0
  %v2738 = vpop.f32.mrb[0].mxu0
  %v2739 = vadd.f32 %v2642, %v2738
  %v2740 = vpop.f32.mrb[0].mxu0
  %2741 = vmatprep.mubr.bf16.mxu0 %v1223
  %2742 = vmatmul.mubr.bf16.gmra.mrb[0].mxu0 %v1222
  %v2743 = vpop.f32.mrb[0].mxu0
  %v2744 = vadd.f32 %v2647, %v2743
  %v2745 = vpop.f32.mrb[0].mxu0
  %v2746 = vpop.f32.mrb[0].mxu0
  %v2747 = vadd.f32 %v2650, %v2746
  %v2748 = vpop.f32.mrb[0].mxu0
  %2749 = vdwg.mxu0
  %2750 = vmatprep.subr.bf16.mxu0 0
  %2751 = vmatpush1.bf16.msra.mxu0 %v2140
  %2752 = vmatprep.subr.bf16.mxu0 0
  %2753 = vmatpush1.bf16.msra.mxu0 %v2141
  %2754 = vmatprep.subr.bf16.mxu0 0
  %2755 = vmatpush1.bf16.msra.mxu0 %v2142
  %2756 = vmatprep.subr.bf16.mxu0 0
  %2757 = vmatpush1.bf16.msra.mxu0 %v2143
  %2758 = vmatprep.subr.bf16.mxu0 0
  %2759 = vmatpush1.bf16.msra.mxu0 %v2144
  %2760 = vmatprep.subr.bf16.mxu0 0
  %2761 = vmatpush1.bf16.msra.mxu0 %v2145
  %2762 = vmatprep.subr.bf16.mxu0 0
  %2763 = vmatpush1.bf16.msra.mxu0 %v2146
  %2764 = vmatprep.subr.bf16.mxu0 0
  %2765 = vmatpush1.bf16.msra.mxu0 %v2147
  %2766 = vmatprep.subr.bf16.mxu0 0
  %2767 = vmatpush1.bf16.msra.mxu0 %v2148
  %2768 = vmatprep.subr.bf16.mxu0 0
  %2769 = vmatpush1.bf16.msra.mxu0 %v2149
  %2770 = vmatprep.subr.bf16.mxu0 0
  %2771 = vmatpush1.bf16.msra.mxu0 %v2150
  %2772 = vmatprep.subr.bf16.mxu0 0
  %2773 = vmatpush1.bf16.msra.mxu0 %v2151
  %2774 = vmatprep.subr.bf16.mxu0 0
  %2775 = vmatpush1.bf16.msra.mxu0 %v2152
  %2776 = vmatprep.subr.bf16.mxu0 0
  %2777 = vmatpush1.bf16.msra.mxu0 %v2153
  %2778 = vmatprep.subr.bf16.mxu0 0
  %2779 = vmatpush1.bf16.msra.mxu0 %v2154
  %2780 = vmatprep.subr.bf16.mxu0 0
  %2781 = vmatpush1.bf16.msra.mxu0 %v2155
  %2782 = vmatprep.mubr.bf16.mxu0 %v1071
  %2783 = vmatmul.mubr.bf16.gmra.mrb[0].mxu0 %v1070
  %v2784 = vpop.f32.mrb[0].mxu0
  %v2785 = vadd.f32 %v2688, %v2784
  %v2786 = vpop.f32.mrb[0].mxu0
  %v2787 = vpop.f32.mrb[0].mxu0
  %v2788 = vadd.f32 %v2691, %v2787
  %v2789 = vpop.f32.mrb[0].mxu0
  %2790 = vmatprep.mubr.bf16.mxu0 %v1093
  %2791 = vmatmul.mubr.bf16.gmra.mrb[0].mxu0 %v1092
  %v2792 = vpop.f32.mrb[0].mxu0
  %v2793 = vadd.f32 %v2696, %v2792
  %v2794 = vpop.f32.mrb[0].mxu0
  %v2795 = vpop.f32.mrb[0].mxu0
  %v2796 = vadd.f32 %v2699, %v2795
  %v2797 = vpop.f32.mrb[0].mxu0
  %2798 = vmatprep.mubr.bf16.mxu0 %v1115
  %2799 = vmatmul.mubr.bf16.gmra.mrb[0].mxu0 %v1114
  %v2800 = vpop.f32.mrb[0].mxu0
  %v2801 = vadd.f32 %v2704, %v2800
  %v2802 = vpop.f32.mrb[0].mxu0
  %v2803 = vpop.f32.mrb[0].mxu0
  %v2804 = vadd.f32 %v2707, %v2803
  %v2805 = vpop.f32.mrb[0].mxu0
  %2806 = vmatprep.mubr.bf16.mxu0 %v1137
  %2807 = vmatmul.mubr.bf16.gmra.mrb[0].mxu0 %v1136
  %v2808 = vpop.f32.mrb[0].mxu0
  %v2809 = vadd.f32 %v2712, %v2808
  %v2810 = vpop.f32.mrb[0].mxu0
  %v2811 = vpop.f32.mrb[0].mxu0
  %v2812 = vadd.f32 %v2715, %v2811
  %v2813 = vpop.f32.mrb[0].mxu0
  %2814 = vmatprep.mubr.bf16.mxu0 %v1159
  %2815 = vmatmul.mubr.bf16.gmra.mrb[0].mxu0 %v1158
  %v2816 = vpop.f32.mrb[0].mxu0
  %v2817 = vadd.f32 %v2720, %v2816
  %v2818 = vpop.f32.mrb[0].mxu0
  %v2819 = vpop.f32.mrb[0].mxu0
  %v2820 = vadd.f32 %v2723, %v2819
  %v2821 = vpop.f32.mrb[0].mxu0
  %2822 = vmatprep.mubr.bf16.mxu0 %v1181
  %2823 = vmatmul.mubr.bf16.gmra.mrb[0].mxu0 %v1180
  %v2824 = vpop.f32.mrb[0].mxu0
  %v2825 = vadd.f32 %v2728, %v2824
  %v2826 = vpop.f32.mrb[0].mxu0
  %v2827 = vpop.f32.mrb[0].mxu0
  %v2828 = vadd.f32 %v2731, %v2827
  %v2829 = vpop.f32.mrb[0].mxu0
  %2830 = vmatprep.mubr.bf16.mxu0 %v1203
  %2831 = vmatmul.mubr.bf16.gmra.mrb[0].mxu0 %v1202
  %v2832 = vpop.f32.mrb[0].mxu0
  %v2833 = vadd.f32 %v2736, %v2832
  %v2834 = vpop.f32.mrb[0].mxu0
  %v2835 = vpop.f32.mrb[0].mxu0
  %v2836 = vadd.f32 %v2739, %v2835
  %v2837 = vpop.f32.mrb[0].mxu0
  %2838 = vmatprep.mubr.bf16.mxu0 %v1225
  %2839 = vmatmul.mubr.bf16.gmra.mrb[0].mxu0 %v1224
  %v2840 = vpop.f32.mrb[0].mxu0
  %v2841 = vadd.f32 %v2744, %v2840
  %v2842 = vpop.f32.mrb[0].mxu0
  %v2843 = vpop.f32.mrb[0].mxu0
  %v2844 = vadd.f32 %v2747, %v2843
  %v2845 = vpop.f32.mrb[0].mxu0
  %2846 = vdwg.mxu0
  %2847 = vmatprep.subr.bf16.mxu0 0
  %2848 = vmatpush1.bf16.msra.mxu0 %v2156
  %2849 = vmatprep.subr.bf16.mxu0 0
  %2850 = vmatpush1.bf16.msra.mxu0 %v2157
  %2851 = vmatprep.subr.bf16.mxu0 0
  %2852 = vmatpush1.bf16.msra.mxu0 %v2158
  %2853 = vmatprep.subr.bf16.mxu0 0
  %2854 = vmatpush1.bf16.msra.mxu0 %v2159
  %2855 = vmatprep.subr.bf16.mxu0 0
  %2856 = vmatpush1.bf16.msra.mxu0 %v2160
  %2857 = vmatprep.subr.bf16.mxu0 0
  %2858 = vmatpush1.bf16.msra.mxu0 %v2161
  %2859 = vmatprep.subr.bf16.mxu0 0
  %2860 = vmatpush1.bf16.msra.mxu0 %v2162
  %2861 = vmatprep.subr.bf16.mxu0 0
  %2862 = vmatpush1.bf16.msra.mxu0 %v2163
  %2863 = vmatprep.subr.bf16.mxu0 0
  %2864 = vmatpush1.bf16.msra.mxu0 %v2164
  %2865 = vmatprep.subr.bf16.mxu0 0
  %2866 = vmatpush1.bf16.msra.mxu0 %v2165
  %2867 = vmatprep.subr.bf16.mxu0 0
  %2868 = vmatpush1.bf16.msra.mxu0 %v2166
  %2869 = vmatprep.subr.bf16.mxu0 0
  %2870 = vmatpush1.bf16.msra.mxu0 %v2167
  %2871 = vmatprep.subr.bf16.mxu0 0
  %2872 = vmatpush1.bf16.msra.mxu0 %v2168
  %2873 = vmatprep.subr.bf16.mxu0 0
  %2874 = vmatpush1.bf16.msra.mxu0 %v2169
  %2875 = vmatprep.subr.bf16.mxu0 0
  %2876 = vmatpush1.bf16.msra.mxu0 %v2170
  %2877 = vmatprep.subr.bf16.mxu0 0
  %2878 = vmatpush1.bf16.msra.mxu0 %v2171
  %2879 = vmatprep.mubr.bf16.mxu0 %v1073
  %2880 = vmatmul.mubr.bf16.gmra.mrb[0].mxu0 %v1072
  %v2881 = vpop.f32.mrb[0].mxu0
  %v2882 = vadd.f32 %v2785, %v2881
  %v2883 = vpop.f32.mrb[0].mxu0
  %v2884 = vpop.f32.mrb[0].mxu0
  %v2885 = vadd.f32 %v2788, %v2884
  %v2886 = vpop.f32.mrb[0].mxu0
  %2887 = vmatprep.mubr.bf16.mxu0 %v1095
  %2888 = vmatmul.mubr.bf16.gmra.mrb[0].mxu0 %v1094
  %v2889 = vpop.f32.mrb[0].mxu0
  %v2890 = vadd.f32 %v2793, %v2889
  %v2891 = vpop.f32.mrb[0].mxu0
  %v2892 = vpop.f32.mrb[0].mxu0
  %v2893 = vadd.f32 %v2796, %v2892
  %v2894 = vpop.f32.mrb[0].mxu0
  %2895 = vmatprep.mubr.bf16.mxu0 %v1117
  %2896 = vmatmul.mubr.bf16.gmra.mrb[0].mxu0 %v1116
  %v2897 = vpop.f32.mrb[0].mxu0
  %v2898 = vadd.f32 %v2801, %v2897
  %v2899 = vpop.f32.mrb[0].mxu0
  %v2900 = vpop.f32.mrb[0].mxu0
  %v2901 = vadd.f32 %v2804, %v2900
  %v2902 = vpop.f32.mrb[0].mxu0
  %2903 = vmatprep.mubr.bf16.mxu0 %v1139
  %2904 = vmatmul.mubr.bf16.gmra.mrb[0].mxu0 %v1138
  %v2905 = vpop.f32.mrb[0].mxu0
  %v2906 = vadd.f32 %v2809, %v2905
  %v2907 = vpop.f32.mrb[0].mxu0
  %v2908 = vpop.f32.mrb[0].mxu0
  %v2909 = vadd.f32 %v2812, %v2908
  %v2910 = vpop.f32.mrb[0].mxu0
  %2911 = vmatprep.mubr.bf16.mxu0 %v1161
  %2912 = vmatmul.mubr.bf16.gmra.mrb[0].mxu0 %v1160
  %v2913 = vpop.f32.mrb[0].mxu0
  %v2914 = vadd.f32 %v2817, %v2913
  %v2915 = vpop.f32.mrb[0].mxu0
  %v2916 = vpop.f32.mrb[0].mxu0
  %v2917 = vadd.f32 %v2820, %v2916
  %v2918 = vpop.f32.mrb[0].mxu0
  %2919 = vmatprep.mubr.bf16.mxu0 %v1183
  %2920 = vmatmul.mubr.bf16.gmra.mrb[0].mxu0 %v1182
  %v2921 = vpop.f32.mrb[0].mxu0
  %v2922 = vadd.f32 %v2825, %v2921
  %v2923 = vpop.f32.mrb[0].mxu0
  %v2924 = vpop.f32.mrb[0].mxu0
  %v2925 = vadd.f32 %v2828, %v2924
  %v2926 = vpop.f32.mrb[0].mxu0
  %2927 = vmatprep.mubr.bf16.mxu0 %v1205
  %2928 = vmatmul.mubr.bf16.gmra.mrb[0].mxu0 %v1204
  %v2929 = vpop.f32.mrb[0].mxu0
  %v2930 = vadd.f32 %v2833, %v2929
  %v2931 = vpop.f32.mrb[0].mxu0
  %v2932 = vpop.f32.mrb[0].mxu0
  %v2933 = vadd.f32 %v2836, %v2932
  %v2934 = vpop.f32.mrb[0].mxu0
  %2935 = vmatprep.mubr.bf16.mxu0 %v1227
  %2936 = vmatmul.mubr.bf16.gmra.mrb[0].mxu0 %v1226
  %v2937 = vpop.f32.mrb[0].mxu0
  %v2938 = vadd.f32 %v2841, %v2937
  %v2939 = vpop.f32.mrb[0].mxu0
  %v2940 = vpop.f32.mrb[0].mxu0
  %v2941 = vadd.f32 %v2844, %v2940
  %v2942 = vpop.f32.mrb[0].mxu0
  %2943 = vdwg.mxu0
  %2944 = vmatprep.subr.bf16.mxu0 0
  %2945 = vmatpush1.bf16.msra.mxu0 %v2172
  %2946 = vmatprep.subr.bf16.mxu0 0
  %2947 = vmatpush1.bf16.msra.mxu0 %v2173
  %2948 = vmatprep.subr.bf16.mxu0 0
  %2949 = vmatpush1.bf16.msra.mxu0 %v2174
  %2950 = vmatprep.subr.bf16.mxu0 0
  %2951 = vmatpush1.bf16.msra.mxu0 %v2175
  %2952 = vmatprep.subr.bf16.mxu0 0
  %2953 = vmatpush1.bf16.msra.mxu0 %v2176
  %2954 = vmatprep.subr.bf16.mxu0 0
  %2955 = vmatpush1.bf16.msra.mxu0 %v2177
  %2956 = vmatprep.subr.bf16.mxu0 0
  %2957 = vmatpush1.bf16.msra.mxu0 %v2178
  %2958 = vmatprep.subr.bf16.mxu0 0
  %2959 = vmatpush1.bf16.msra.mxu0 %v2179
  %2960 = vmatprep.subr.bf16.mxu0 0
  %2961 = vmatpush1.bf16.msra.mxu0 %v2180
  %2962 = vmatprep.subr.bf16.mxu0 0
  %2963 = vmatpush1.bf16.msra.mxu0 %v2181
  %2964 = vmatprep.subr.bf16.mxu0 0
  %2965 = vmatpush1.bf16.msra.mxu0 %v2182
  %2966 = vmatprep.subr.bf16.mxu0 0
  %2967 = vmatpush1.bf16.msra.mxu0 %v2183
  %2968 = vmatprep.subr.bf16.mxu0 0
  %2969 = vmatpush1.bf16.msra.mxu0 %v2184
  %2970 = vmatprep.subr.bf16.mxu0 0
  %2971 = vmatpush1.bf16.msra.mxu0 %v2185
  %2972 = vmatprep.subr.bf16.mxu0 0
  %2973 = vmatpush1.bf16.msra.mxu0 %v2186
  %2974 = vmatprep.subr.bf16.mxu0 0
  %2975 = vmatpush1.bf16.msra.mxu0 %v2187
  %2976 = vmatprep.mubr.bf16.mxu0 %v1075
  %2977 = vmatmul.mubr.bf16.gmra.mrb[0].mxu0 %v1074
  %v2978 = vpop.f32.mrb[0].mxu0
  %v2979 = vadd.f32 %v2882, %v2978
  %v2980 = vpop.f32.mrb[0].mxu0
  %v2981 = vpop.f32.mrb[0].mxu0
  %v2982 = vadd.f32 %v2885, %v2981
  %v2983 = vpop.f32.mrb[0].mxu0
  %2984 = vmatprep.mubr.bf16.mxu0 %v1097
  %2985 = vmatmul.mubr.bf16.gmra.mrb[0].mxu0 %v1096
  %v2986 = vpop.f32.mrb[0].mxu0
  %v2987 = vadd.f32 %v2890, %v2986
  %v2988 = vpop.f32.mrb[0].mxu0
  %v2989 = vpop.f32.mrb[0].mxu0
  %v2990 = vadd.f32 %v2893, %v2989
  %v2991 = vpop.f32.mrb[0].mxu0
  %2992 = vmatprep.mubr.bf16.mxu0 %v1119
  %2993 = vmatmul.mubr.bf16.gmra.mrb[0].mxu0 %v1118
  %v2994 = vpop.f32.mrb[0].mxu0
  %v2995 = vadd.f32 %v2898, %v2994
  %v2996 = vpop.f32.mrb[0].mxu0
  %v2997 = vpop.f32.mrb[0].mxu0
  %v2998 = vadd.f32 %v2901, %v2997
  %v2999 = vpop.f32.mrb[0].mxu0
  %3000 = vmatprep.mubr.bf16.mxu0 %v1141
  %3001 = vmatmul.mubr.bf16.gmra.mrb[0].mxu0 %v1140
  %v3002 = vpop.f32.mrb[0].mxu0
  %v3003 = vadd.f32 %v2906, %v3002
  %v3004 = vpop.f32.mrb[0].mxu0
  %v3005 = vpop.f32.mrb[0].mxu0
  %v3006 = vadd.f32 %v2909, %v3005
  %v3007 = vpop.f32.mrb[0].mxu0
  %3008 = vmatprep.mubr.bf16.mxu0 %v1163
  %3009 = vmatmul.mubr.bf16.gmra.mrb[0].mxu0 %v1162
  %v3010 = vpop.f32.mrb[0].mxu0
  %v3011 = vadd.f32 %v2914, %v3010
  %v3012 = vpop.f32.mrb[0].mxu0
  %v3013 = vpop.f32.mrb[0].mxu0
  %v3014 = vadd.f32 %v2917, %v3013
  %v3015 = vpop.f32.mrb[0].mxu0
  %3016 = vmatprep.mubr.bf16.mxu0 %v1185
  %3017 = vmatmul.mubr.bf16.gmra.mrb[0].mxu0 %v1184
  %v3018 = vpop.f32.mrb[0].mxu0
  %v3019 = vadd.f32 %v2922, %v3018
  %v3020 = vpop.f32.mrb[0].mxu0
  %v3021 = vpop.f32.mrb[0].mxu0
  %v3022 = vadd.f32 %v2925, %v3021
  %v3023 = vpop.f32.mrb[0].mxu0
  %3024 = vmatprep.mubr.bf16.mxu0 %v1207
  %3025 = vmatmul.mubr.bf16.gmra.mrb[0].mxu0 %v1206
  %v3026 = vpop.f32.mrb[0].mxu0
  %v3027 = vadd.f32 %v2930, %v3026
  %v3028 = vpop.f32.mrb[0].mxu0
  %v3029 = vpop.f32.mrb[0].mxu0
  %v3030 = vadd.f32 %v2933, %v3029
  %v3031 = vpop.f32.mrb[0].mxu0
  %3032 = vmatprep.mubr.bf16.mxu0 %v1229
  %3033 = vmatmul.mubr.bf16.gmra.mrb[0].mxu0 %v1228
  %v3034 = vpop.f32.mrb[0].mxu0
  %v3035 = vadd.f32 %v2938, %v3034
  %v3036 = vpop.f32.mrb[0].mxu0
  %v3037 = vpop.f32.mrb[0].mxu0
  %v3038 = vadd.f32 %v2941, %v3037
  %v3039 = vpop.f32.mrb[0].mxu0
  %3040 = vdwg.mxu0
  %3041 = vmatprep.subr.bf16.mxu0 0
  %3042 = vmatpush1.bf16.msra.mxu0 %v2188
  %3043 = vmatprep.subr.bf16.mxu0 0
  %3044 = vmatpush1.bf16.msra.mxu0 %v2189
  %3045 = vmatprep.subr.bf16.mxu0 0
  %3046 = vmatpush1.bf16.msra.mxu0 %v2190
  %3047 = vmatprep.subr.bf16.mxu0 0
  %3048 = vmatpush1.bf16.msra.mxu0 %v2191
  %3049 = vmatprep.subr.bf16.mxu0 0
  %3050 = vmatpush1.bf16.msra.mxu0 %v2192
  %3051 = vmatprep.subr.bf16.mxu0 0
  %3052 = vmatpush1.bf16.msra.mxu0 %v2193
  %3053 = vmatprep.subr.bf16.mxu0 0
  %3054 = vmatpush1.bf16.msra.mxu0 %v2194
  %3055 = vmatprep.subr.bf16.mxu0 0
  %3056 = vmatpush1.bf16.msra.mxu0 %v2195
  %3057 = vmatprep.subr.bf16.mxu0 0
  %3058 = vmatpush1.bf16.msra.mxu0 %v2196
  %3059 = vmatprep.subr.bf16.mxu0 0
  %3060 = vmatpush1.bf16.msra.mxu0 %v2197
  %3061 = vmatprep.subr.bf16.mxu0 0
  %3062 = vmatpush1.bf16.msra.mxu0 %v2198
  %3063 = vmatprep.subr.bf16.mxu0 0
  %3064 = vmatpush1.bf16.msra.mxu0 %v2199
  %3065 = vmatprep.subr.bf16.mxu0 0
  %3066 = vmatpush1.bf16.msra.mxu0 %v2200
  %3067 = vmatprep.subr.bf16.mxu0 0
  %3068 = vmatpush1.bf16.msra.mxu0 %v2201
  %3069 = vmatprep.subr.bf16.mxu0 0
  %3070 = vmatpush1.bf16.msra.mxu0 %v2202
  %3071 = vmatprep.subr.bf16.mxu0 0
  %3072 = vmatpush1.bf16.msra.mxu0 %v2203
  %3073 = vmatprep.mubr.bf16.mxu0 %v1077
  %3074 = vmatmul.mubr.bf16.gmra.mrb[0].mxu0 %v1076
  %v3075 = vpop.f32.mrb[0].mxu0
  %v3076 = vadd.f32 %v2979, %v3075
  %v3077 = vpop.f32.mrb[0].mxu0
  %v3078 = vpop.f32.mrb[0].mxu0
  %v3079 = vadd.f32 %v2982, %v3078
  %v3080 = vpop.f32.mrb[0].mxu0
  %3081 = vmatprep.mubr.bf16.mxu0 %v1099
  %3082 = vmatmul.mubr.bf16.gmra.mrb[0].mxu0 %v1098
  %v3083 = vpop.f32.mrb[0].mxu0
  %v3084 = vadd.f32 %v2987, %v3083
  %v3085 = vpop.f32.mrb[0].mxu0
  %v3086 = vpop.f32.mrb[0].mxu0
  %v3087 = vadd.f32 %v2990, %v3086
  %v3088 = vpop.f32.mrb[0].mxu0
  %3089 = vmatprep.mubr.bf16.mxu0 %v1121
  %3090 = vmatmul.mubr.bf16.gmra.mrb[0].mxu0 %v1120
  %v3091 = vpop.f32.mrb[0].mxu0
  %v3092 = vadd.f32 %v2995, %v3091
  %v3093 = vpop.f32.mrb[0].mxu0
  %v3094 = vpop.f32.mrb[0].mxu0
  %v3095 = vadd.f32 %v2998, %v3094
  %v3096 = vpop.f32.mrb[0].mxu0
  %3097 = vmatprep.mubr.bf16.mxu0 %v1143
  %3098 = vmatmul.mubr.bf16.gmra.mrb[0].mxu0 %v1142
  %v3099 = vpop.f32.mrb[0].mxu0
  %v3100 = vadd.f32 %v3003, %v3099
  %v3101 = vpop.f32.mrb[0].mxu0
  %v3102 = vpop.f32.mrb[0].mxu0
  %v3103 = vadd.f32 %v3006, %v3102
  %v3104 = vpop.f32.mrb[0].mxu0
  %3105 = vmatprep.mubr.bf16.mxu0 %v1165
  %3106 = vmatmul.mubr.bf16.gmra.mrb[0].mxu0 %v1164
  %v3107 = vpop.f32.mrb[0].mxu0
  %v3108 = vadd.f32 %v3011, %v3107
  %v3109 = vpop.f32.mrb[0].mxu0
  %v3110 = vpop.f32.mrb[0].mxu0
  %v3111 = vadd.f32 %v3014, %v3110
  %v3112 = vpop.f32.mrb[0].mxu0
  %3113 = vmatprep.mubr.bf16.mxu0 %v1187
  %3114 = vmatmul.mubr.bf16.gmra.mrb[0].mxu0 %v1186
  %v3115 = vpop.f32.mrb[0].mxu0
  %v3116 = vadd.f32 %v3019, %v3115
  %v3117 = vpop.f32.mrb[0].mxu0
  %v3118 = vpop.f32.mrb[0].mxu0
  %v3119 = vadd.f32 %v3022, %v3118
  %v3120 = vpop.f32.mrb[0].mxu0
  %3121 = vmatprep.mubr.bf16.mxu0 %v1209
  %3122 = vmatmul.mubr.bf16.gmra.mrb[0].mxu0 %v1208
  %v3123 = vpop.f32.mrb[0].mxu0
  %v3124 = vadd.f32 %v3027, %v3123
  %v3125 = vpop.f32.mrb[0].mxu0
  %v3126 = vpop.f32.mrb[0].mxu0
  %v3127 = vadd.f32 %v3030, %v3126
  %v3128 = vpop.f32.mrb[0].mxu0
  %3129 = vmatprep.mubr.bf16.mxu0 %v1231
  %3130 = vmatmul.mubr.bf16.gmra.mrb[0].mxu0 %v1230
  %v3131 = vpop.f32.mrb[0].mxu0
  %v3132 = vadd.f32 %v3035, %v3131
  %v3133 = vpop.f32.mrb[0].mxu0
  %v3134 = vpop.f32.mrb[0].mxu0
  %v3135 = vadd.f32 %v3038, %v3134
  %v3136 = vpop.f32.mrb[0].mxu0
  %3137 = vdwg.mxu0
  %3138 = vmatprep.subr.bf16.mxu0 0
  %3139 = vmatpush1.bf16.msra.mxu0 %v2204
  %3140 = vmatprep.subr.bf16.mxu0 0
  %3141 = vmatpush1.bf16.msra.mxu0 %v2205
  %3142 = vmatprep.subr.bf16.mxu0 0
  %3143 = vmatpush1.bf16.msra.mxu0 %v2206
  %3144 = vmatprep.subr.bf16.mxu0 0
  %3145 = vmatpush1.bf16.msra.mxu0 %v2207
  %3146 = vmatprep.subr.bf16.mxu0 0
  %3147 = vmatpush1.bf16.msra.mxu0 %v2208
  %3148 = vmatprep.subr.bf16.mxu0 0
  %3149 = vmatpush1.bf16.msra.mxu0 %v2209
  %3150 = vmatprep.subr.bf16.mxu0 0
  %3151 = vmatpush1.bf16.msra.mxu0 %v2210
  %3152 = vmatprep.subr.bf16.mxu0 0
  %3153 = vmatpush1.bf16.msra.mxu0 %v2211
  %3154 = vmatprep.subr.bf16.mxu0 0
  %3155 = vmatpush1.bf16.msra.mxu0 %v2212
  %3156 = vmatprep.subr.bf16.mxu0 0
  %3157 = vmatpush1.bf16.msra.mxu0 %v2213
  %3158 = vmatprep.subr.bf16.mxu0 0
  %3159 = vmatpush1.bf16.msra.mxu0 %v2214
  %3160 = vmatprep.subr.bf16.mxu0 0
  %3161 = vmatpush1.bf16.msra.mxu0 %v2215
  %3162 = vmatprep.subr.bf16.mxu0 0
  %3163 = vmatpush1.bf16.msra.mxu0 %v2216
  %3164 = vmatprep.subr.bf16.mxu0 0
  %3165 = vmatpush1.bf16.msra.mxu0 %v2217
  %3166 = vmatprep.subr.bf16.mxu0 0
  %3167 = vmatpush1.bf16.msra.mxu0 %v2218
  %3168 = vmatprep.subr.bf16.mxu0 0
  %3169 = vmatpush1.bf16.msra.mxu0 %v2219
  %3170 = vmatprep.mubr.bf16.mxu0 %v1079
  %3171 = vmatmul.mubr.bf16.gmra.mrb[0].mxu0 %v1078
  %v3172 = vpop.f32.mrb[0].mxu0
  %v3173 = vadd.f32 %v3076, %v3172
  %v3174 = vpop.f32.mrb[0].mxu0
  %v3175 = vpop.f32.mrb[0].mxu0
  %v3176 = vadd.f32 %v3079, %v3175
  %v3177 = vpop.f32.mrb[0].mxu0
  %3178 = vmatprep.mubr.bf16.mxu0 %v1101
  %3179 = vmatmul.mubr.bf16.gmra.mrb[0].mxu0 %v1100
  %v3180 = vpop.f32.mrb[0].mxu0
  %v3181 = vadd.f32 %v3084, %v3180
  %v3182 = vpop.f32.mrb[0].mxu0
  %v3183 = vpop.f32.mrb[0].mxu0
  %v3184 = vadd.f32 %v3087, %v3183
  %v3185 = vpop.f32.mrb[0].mxu0
  %3186 = vmatprep.mubr.bf16.mxu0 %v1123
  %3187 = vmatmul.mubr.bf16.gmra.mrb[0].mxu0 %v1122
  %v3188 = vpop.f32.mrb[0].mxu0
  %v3189 = vadd.f32 %v3092, %v3188
  %v3190 = vpop.f32.mrb[0].mxu0
  %v3191 = vpop.f32.mrb[0].mxu0
  %v3192 = vadd.f32 %v3095, %v3191
  %v3193 = vpop.f32.mrb[0].mxu0
  %3194 = vmatprep.mubr.bf16.mxu0 %v1145
  %3195 = vmatmul.mubr.bf16.gmra.mrb[0].mxu0 %v1144
  %v3196 = vpop.f32.mrb[0].mxu0
  %v3197 = vadd.f32 %v3100, %v3196
  %v3198 = vpop.f32.mrb[0].mxu0
  %v3199 = vpop.f32.mrb[0].mxu0
  %v3200 = vadd.f32 %v3103, %v3199
  %v3201 = vpop.f32.mrb[0].mxu0
  %3202 = vmatprep.mubr.bf16.mxu0 %v1167
  %3203 = vmatmul.mubr.bf16.gmra.mrb[0].mxu0 %v1166
  %v3204 = vpop.f32.mrb[0].mxu0
  %v3205 = vadd.f32 %v3108, %v3204
  %v3206 = vpop.f32.mrb[0].mxu0
  %v3207 = vpop.f32.mrb[0].mxu0
  %v3208 = vadd.f32 %v3111, %v3207
  %v3209 = vpop.f32.mrb[0].mxu0
  %3210 = vmatprep.mubr.bf16.mxu0 %v1189
  %3211 = vmatmul.mubr.bf16.gmra.mrb[0].mxu0 %v1188
  %v3212 = vpop.f32.mrb[0].mxu0
  %v3213 = vadd.f32 %v3116, %v3212
  %v3214 = vpop.f32.mrb[0].mxu0
  %v3215 = vpop.f32.mrb[0].mxu0
  %v3216 = vadd.f32 %v3119, %v3215
  %v3217 = vpop.f32.mrb[0].mxu0
  %3218 = vmatprep.mubr.bf16.mxu0 %v1211
  %3219 = vmatmul.mubr.bf16.gmra.mrb[0].mxu0 %v1210
  %v3220 = vpop.f32.mrb[0].mxu0
  %v3221 = vadd.f32 %v3124, %v3220
  %v3222 = vpop.f32.mrb[0].mxu0
  %v3223 = vpop.f32.mrb[0].mxu0
  %v3224 = vadd.f32 %v3127, %v3223
  %v3225 = vpop.f32.mrb[0].mxu0
  %3226 = vmatprep.mubr.bf16.mxu0 %v1233
  %3227 = vmatmul.mubr.bf16.gmra.mrb[0].mxu0 %v1232
  %v3228 = vpop.f32.mrb[0].mxu0
  %v3229 = vadd.f32 %v3132, %v3228
  %v3230 = vpop.f32.mrb[0].mxu0
  %v3231 = vpop.f32.mrb[0].mxu0
  %v3232 = vadd.f32 %v3135, %v3231
  %v3233 = vpop.f32.mrb[0].mxu0
  %3234 = vdwg.mxu0
  %3235 = vmatprep.subr.bf16.mxu0 0
  %3236 = vmatpush1.bf16.msra.mxu0 %v2220
  %3237 = vmatprep.subr.bf16.mxu0 0
  %3238 = vmatpush1.bf16.msra.mxu0 %v2221
  %3239 = vmatprep.subr.bf16.mxu0 0
  %3240 = vmatpush1.bf16.msra.mxu0 %v2222
  %3241 = vmatprep.subr.bf16.mxu0 0
  %3242 = vmatpush1.bf16.msra.mxu0 %v2223
  %3243 = vmatprep.subr.bf16.mxu0 0
  %3244 = vmatpush1.bf16.msra.mxu0 %v2224
  %3245 = vmatprep.subr.bf16.mxu0 0
  %3246 = vmatpush1.bf16.msra.mxu0 %v2225
  %3247 = vmatprep.subr.bf16.mxu0 0
  %3248 = vmatpush1.bf16.msra.mxu0 %v2226
  %3249 = vmatprep.subr.bf16.mxu0 0
  %3250 = vmatpush1.bf16.msra.mxu0 %v2227
  %3251 = vmatprep.subr.bf16.mxu0 0
  %3252 = vmatpush1.bf16.msra.mxu0 %v2228
  %3253 = vmatprep.subr.bf16.mxu0 0
  %3254 = vmatpush1.bf16.msra.mxu0 %v2229
  %3255 = vmatprep.subr.bf16.mxu0 0
  %3256 = vmatpush1.bf16.msra.mxu0 %v2230
  %3257 = vmatprep.subr.bf16.mxu0 0
  %3258 = vmatpush1.bf16.msra.mxu0 %v2231
  %3259 = vmatprep.subr.bf16.mxu0 0
  %3260 = vmatpush1.bf16.msra.mxu0 %v2232
  %3261 = vmatprep.subr.bf16.mxu0 0
  %3262 = vmatpush1.bf16.msra.mxu0 %v2233
  %3263 = vmatprep.subr.bf16.mxu0 0
  %3264 = vmatpush1.bf16.msra.mxu0 %v2234
  %3265 = vmatprep.subr.bf16.mxu0 0
  %3266 = vmatpush1.bf16.msra.mxu0 %v2235
  %3267 = vmatprep.mubr.bf16.mxu0 %v1081
  %3268 = vmatmul.mubr.bf16.gmra.mrb[0].mxu0 %v1080
  %v3269 = vpop.f32.mrb[0].mxu0
  %v3270 = vadd.f32 %v3173, %v3269
  %v3271 = vpop.f32.mrb[0].mxu0
  %v3272 = vpop.f32.mrb[0].mxu0
  %v3273 = vadd.f32 %v3176, %v3272
  %v3274 = vpop.f32.mrb[0].mxu0
  %3275 = vmatprep.mubr.bf16.mxu0 %v1103
  %3276 = vmatmul.mubr.bf16.gmra.mrb[0].mxu0 %v1102
  %v3277 = vpop.f32.mrb[0].mxu0
  %v3278 = vadd.f32 %v3181, %v3277
  %v3279 = vpop.f32.mrb[0].mxu0
  %v3280 = vpop.f32.mrb[0].mxu0
  %v3281 = vadd.f32 %v3184, %v3280
  %v3282 = vpop.f32.mrb[0].mxu0
  %3283 = vmatprep.mubr.bf16.mxu0 %v1125
  %3284 = vmatmul.mubr.bf16.gmra.mrb[0].mxu0 %v1124
  %v3285 = vpop.f32.mrb[0].mxu0
  %v3286 = vadd.f32 %v3189, %v3285
  %v3287 = vpop.f32.mrb[0].mxu0
  %v3288 = vpop.f32.mrb[0].mxu0
  %v3289 = vadd.f32 %v3192, %v3288
  %v3290 = vpop.f32.mrb[0].mxu0
  %3291 = vmatprep.mubr.bf16.mxu0 %v1147
  %3292 = vmatmul.mubr.bf16.gmra.mrb[0].mxu0 %v1146
  %v3293 = vpop.f32.mrb[0].mxu0
  %v3294 = vadd.f32 %v3197, %v3293
  %v3295 = vpop.f32.mrb[0].mxu0
  %v3296 = vpop.f32.mrb[0].mxu0
  %v3297 = vadd.f32 %v3200, %v3296
  %v3298 = vpop.f32.mrb[0].mxu0
  %3299 = vmatprep.mubr.bf16.mxu0 %v1169
  %3300 = vmatmul.mubr.bf16.gmra.mrb[0].mxu0 %v1168
  %v3301 = vpop.f32.mrb[0].mxu0
  %v3302 = vadd.f32 %v3205, %v3301
  %v3303 = vpop.f32.mrb[0].mxu0
  %v3304 = vpop.f32.mrb[0].mxu0
  %v3305 = vadd.f32 %v3208, %v3304
  %v3306 = vpop.f32.mrb[0].mxu0
  %3307 = vmatprep.mubr.bf16.mxu0 %v1191
  %3308 = vmatmul.mubr.bf16.gmra.mrb[0].mxu0 %v1190
  %v3309 = vpop.f32.mrb[0].mxu0
  %v3310 = vadd.f32 %v3213, %v3309
  %v3311 = vpop.f32.mrb[0].mxu0
  %v3312 = vpop.f32.mrb[0].mxu0
  %v3313 = vadd.f32 %v3216, %v3312
  %v3314 = vpop.f32.mrb[0].mxu0
  %3315 = vmatprep.mubr.bf16.mxu0 %v1213
  %3316 = vmatmul.mubr.bf16.gmra.mrb[0].mxu0 %v1212
  %v3317 = vpop.f32.mrb[0].mxu0
  %v3318 = vadd.f32 %v3221, %v3317
  %v3319 = vpop.f32.mrb[0].mxu0
  %v3320 = vpop.f32.mrb[0].mxu0
  %v3321 = vadd.f32 %v3224, %v3320
  %v3322 = vpop.f32.mrb[0].mxu0
  %3323 = vmatprep.mubr.bf16.mxu0 %v1235
  %3324 = vmatmul.mubr.bf16.gmra.mrb[0].mxu0 %v1234
  %v3325 = vpop.f32.mrb[0].mxu0
  %v3326 = vadd.f32 %v3229, %v3325
  %v3327 = vpop.f32.mrb[0].mxu0
  %v3328 = vpop.f32.mrb[0].mxu0
  %v3329 = vadd.f32 %v3232, %v3328
  %v3330 = vpop.f32.mrb[0].mxu0
  %3331 = vdwg.mxu0
  %3332 = vmatprep.subr.bf16.mxu0 0
  %3333 = vmatpush1.bf16.msra.mxu0 %v2236
  %3334 = vmatprep.subr.bf16.mxu0 0
  %3335 = vmatpush1.bf16.msra.mxu0 %v2237
  %3336 = vmatprep.subr.bf16.mxu0 0
  %3337 = vmatpush1.bf16.msra.mxu0 %v2238
  %3338 = vmatprep.subr.bf16.mxu0 0
  %3339 = vmatpush1.bf16.msra.mxu0 %v2239
  %3340 = vmatprep.subr.bf16.mxu0 0
  %3341 = vmatpush1.bf16.msra.mxu0 %v2240
  %3342 = vmatprep.subr.bf16.mxu0 0
  %3343 = vmatpush1.bf16.msra.mxu0 %v2241
  %3344 = vmatprep.subr.bf16.mxu0 0
  %3345 = vmatpush1.bf16.msra.mxu0 %v2242
  %3346 = vmatprep.subr.bf16.mxu0 0
  %3347 = vmatpush1.bf16.msra.mxu0 %v2243
  %3348 = vmatprep.subr.bf16.mxu0 0
  %3349 = vmatpush1.bf16.msra.mxu0 %v2244
  %3350 = vmatprep.subr.bf16.mxu0 0
  %3351 = vmatpush1.bf16.msra.mxu0 %v2245
  %3352 = vmatprep.subr.bf16.mxu0 0
  %3353 = vmatpush1.bf16.msra.mxu0 %v2246
  %3354 = vmatprep.subr.bf16.mxu0 0
  %3355 = vmatpush1.bf16.msra.mxu0 %v2247
  %3356 = vmatprep.subr.bf16.mxu0 0
  %3357 = vmatpush1.bf16.msra.mxu0 %v2248
  %3358 = vmatprep.subr.bf16.mxu0 0
  %3359 = vmatpush1.bf16.msra.mxu0 %v2249
  %3360 = vmatprep.subr.bf16.mxu0 0
  %3361 = vmatpush1.bf16.msra.mxu0 %v2250
  %3362 = vmatprep.subr.bf16.mxu0 0
  %3363 = vmatpush1.bf16.msra.mxu0 %v2251
  %3364 = vmatprep.mubr.bf16.mxu0 %v1083
  %3365 = vmatmul.mubr.bf16.gmra.mrb[0].mxu0 %v1082
  %v3366 = vpop.f32.mrb[0].mxu0
  %v3367 = vadd.f32 %v3270, %v3366
  %v3368 = vpop.f32.mrb[0].mxu0
  %v3369 = vpop.f32.mrb[0].mxu0
  %v3370 = vadd.f32 %v3273, %v3369
  %v3371 = vpop.f32.mrb[0].mxu0
  %3372 = vmatprep.mubr.bf16.mxu0 %v1105
  %3373 = vmatmul.mubr.bf16.gmra.mrb[0].mxu0 %v1104
  %v3374 = vpop.f32.mrb[0].mxu0
  %v3375 = vadd.f32 %v3278, %v3374
  %v3376 = vpop.f32.mrb[0].mxu0
  %v3377 = vpop.f32.mrb[0].mxu0
  %v3378 = vadd.f32 %v3281, %v3377
  %v3379 = vpop.f32.mrb[0].mxu0
  %3380 = vmatprep.mubr.bf16.mxu0 %v1127
  %3381 = vmatmul.mubr.bf16.gmra.mrb[0].mxu0 %v1126
  %v3382 = vpop.f32.mrb[0].mxu0
  %v3383 = vadd.f32 %v3286, %v3382
  %v3384 = vpop.f32.mrb[0].mxu0
  %v3385 = vpop.f32.mrb[0].mxu0
  %v3386 = vadd.f32 %v3289, %v3385
  %v3387 = vpop.f32.mrb[0].mxu0
  %3388 = vmatprep.mubr.bf16.mxu0 %v1149
  %3389 = vmatmul.mubr.bf16.gmra.mrb[0].mxu0 %v1148
  %v3390 = vpop.f32.mrb[0].mxu0
  %v3391 = vadd.f32 %v3294, %v3390
  %v3392 = vpop.f32.mrb[0].mxu0
  %v3393 = vpop.f32.mrb[0].mxu0
  %v3394 = vadd.f32 %v3297, %v3393
  %v3395 = vpop.f32.mrb[0].mxu0
  %3396 = vmatprep.mubr.bf16.mxu0 %v1171
  %3397 = vmatmul.mubr.bf16.gmra.mrb[0].mxu0 %v1170
  %v3398 = vpop.f32.mrb[0].mxu0
  %v3399 = vadd.f32 %v3302, %v3398
  %v3400 = vpop.f32.mrb[0].mxu0
  %v3401 = vpop.f32.mrb[0].mxu0
  %v3402 = vadd.f32 %v3305, %v3401
  %v3403 = vpop.f32.mrb[0].mxu0
  %3404 = vmatprep.mubr.bf16.mxu0 %v1193
  %3405 = vmatmul.mubr.bf16.gmra.mrb[0].mxu0 %v1192
  %v3406 = vpop.f32.mrb[0].mxu0
  %v3407 = vadd.f32 %v3310, %v3406
  %v3408 = vpop.f32.mrb[0].mxu0
  %v3409 = vpop.f32.mrb[0].mxu0
  %v3410 = vadd.f32 %v3313, %v3409
  %v3411 = vpop.f32.mrb[0].mxu0
  %3412 = vmatprep.mubr.bf16.mxu0 %v1215
  %3413 = vmatmul.mubr.bf16.gmra.mrb[0].mxu0 %v1214
  %v3414 = vpop.f32.mrb[0].mxu0
  %v3415 = vadd.f32 %v3318, %v3414
  %v3416 = vpop.f32.mrb[0].mxu0
  %v3417 = vpop.f32.mrb[0].mxu0
  %v3418 = vadd.f32 %v3321, %v3417
  %v3419 = vpop.f32.mrb[0].mxu0
  %3420 = vmatprep.mubr.bf16.mxu0 %v1237
  %3421 = vmatmul.mubr.bf16.gmra.mrb[0].mxu0 %v1236
  %v3422 = vpop.f32.mrb[0].mxu0
  %v3423 = vadd.f32 %v3326, %v3422
  %v3424 = vpop.f32.mrb[0].mxu0
  %v3425 = vpop.f32.mrb[0].mxu0
  %v3426 = vadd.f32 %v3329, %v3425
  %v3427 = vpop.f32.mrb[0].mxu0
  %3428 = vdwg.mxu0
  %3429 = vmatprep.subr.bf16.mxu0 0
  %3430 = vmatpush1.bf16.msra.mxu0 %v2252
  %3431 = vmatprep.subr.bf16.mxu0 0
  %3432 = vmatpush1.bf16.msra.mxu0 %v2253
  %3433 = vmatprep.subr.bf16.mxu0 0
  %3434 = vmatpush1.bf16.msra.mxu0 %v2254
  %3435 = vmatprep.subr.bf16.mxu0 0
  %3436 = vmatpush1.bf16.msra.mxu0 %v2255
  %3437 = vmatprep.subr.bf16.mxu0 0
  %3438 = vmatpush1.bf16.msra.mxu0 %v2256
  %3439 = vmatprep.subr.bf16.mxu0 0
  %3440 = vmatpush1.bf16.msra.mxu0 %v2257
  %3441 = vmatprep.subr.bf16.mxu0 0
  %3442 = vmatpush1.bf16.msra.mxu0 %v2258
  %3443 = vmatprep.subr.bf16.mxu0 0
  %3444 = vmatpush1.bf16.msra.mxu0 %v2259
  %3445 = vmatprep.subr.bf16.mxu0 0
  %3446 = vmatpush1.bf16.msra.mxu0 %v2260
  %3447 = vmatprep.subr.bf16.mxu0 0
  %3448 = vmatpush1.bf16.msra.mxu0 %v2261
  %3449 = vmatprep.subr.bf16.mxu0 0
  %3450 = vmatpush1.bf16.msra.mxu0 %v2262
  %3451 = vmatprep.subr.bf16.mxu0 0
  %3452 = vmatpush1.bf16.msra.mxu0 0
  %3453 = vmatprep.subr.bf16.mxu0 0
  %3454 = vmatpush1.bf16.msra.mxu0 0
  %3455 = vmatprep.subr.bf16.mxu0 0
  %3456 = vmatpush1.bf16.msra.mxu0 0
  %3457 = vmatprep.subr.bf16.mxu0 0
  %3458 = vmatpush1.bf16.msra.mxu0 0
  %3459 = vmatprep.subr.bf16.mxu0 0
  %3460 = vmatpush1.bf16.msra.mxu0 0
  %3461 = vmatprep.mubr.bf16.mxu0 %v2436
  %3462 = vmatmul.mubr.bf16.gmra.mrb[0].mxu0 %v1084
  %v3463 = vpop.f32.mrb[0].mxu0
  %v3464 = vadd.f32 %v3367, %v3463
  %v3465 = vpop.f32.mrb[0].mxu0
  %v3466 = vpop.f32.mrb[0].mxu0
  %v3467 = vadd.f32 %v3370, %v3466
  %v3468 = vpop.f32.mrb[0].mxu0
  %3469 = vmatprep.mubr.bf16.mxu0 %v2439
  %3470 = vmatmul.mubr.bf16.gmra.mrb[0].mxu0 %v1106
  %v3471 = vpop.f32.mrb[0].mxu0
  %v3472 = vadd.f32 %v3375, %v3471
  %v3473 = vpop.f32.mrb[0].mxu0
  %v3474 = vpop.f32.mrb[0].mxu0
  %v3475 = vadd.f32 %v3378, %v3474
  %v3476 = vpop.f32.mrb[0].mxu0
  %3477 = vmatprep.mubr.bf16.mxu0 %v2442
  %3478 = vmatmul.mubr.bf16.gmra.mrb[0].mxu0 %v1128
  %v3479 = vpop.f32.mrb[0].mxu0
  %v3480 = vadd.f32 %v3383, %v3479
  %v3481 = vpop.f32.mrb[0].mxu0
  %v3482 = vpop.f32.mrb[0].mxu0
  %v3483 = vadd.f32 %v3386, %v3482
  %v3484 = vpop.f32.mrb[0].mxu0
  %3485 = vmatprep.mubr.bf16.mxu0 %v2445
  %3486 = vmatmul.mubr.bf16.gmra.mrb[0].mxu0 %v1150
  %v3487 = vpop.f32.mrb[0].mxu0
  %v3488 = vadd.f32 %v3391, %v3487
  %v3489 = vpop.f32.mrb[0].mxu0
  %v3490 = vpop.f32.mrb[0].mxu0
  %v3491 = vadd.f32 %v3394, %v3490
  %v3492 = vpop.f32.mrb[0].mxu0
  %3493 = vmatprep.mubr.bf16.mxu0 %v2448
  %3494 = vmatmul.mubr.bf16.gmra.mrb[0].mxu0 %v1172
  %v3495 = vpop.f32.mrb[0].mxu0
  %v3496 = vadd.f32 %v3399, %v3495
  %v3497 = vpop.f32.mrb[0].mxu0
  %v3498 = vpop.f32.mrb[0].mxu0
  %v3499 = vadd.f32 %v3402, %v3498
  %v3500 = vpop.f32.mrb[0].mxu0
  %3501 = vmatprep.mubr.bf16.mxu0 %v2451
  %3502 = vmatmul.mubr.bf16.gmra.mrb[0].mxu0 %v1194
  %v3503 = vpop.f32.mrb[0].mxu0
  %v3504 = vadd.f32 %v3407, %v3503
  %v3505 = vpop.f32.mrb[0].mxu0
  %v3506 = vpop.f32.mrb[0].mxu0
  %v3507 = vadd.f32 %v3410, %v3506
  %v3508 = vpop.f32.mrb[0].mxu0
  %3509 = vmatprep.mubr.bf16.mxu0 %v2454
  %3510 = vmatmul.mubr.bf16.gmra.mrb[0].mxu0 %v1216
  %v3511 = vpop.f32.mrb[0].mxu0
  %v3512 = vadd.f32 %v3415, %v3511
  %v3513 = vpop.f32.mrb[0].mxu0
  %v3514 = vpop.f32.mrb[0].mxu0
  %v3515 = vadd.f32 %v3418, %v3514
  %v3516 = vpop.f32.mrb[0].mxu0
  %3517 = vmatprep.mubr.bf16.mxu0 %v2457
  %3518 = vmatmul.mubr.bf16.gmra.mrb[0].mxu0 %v1238
  %v3519 = vpop.f32.mrb[0].mxu0
  %v3520 = vadd.f32 %v3423, %v3519
  %v3521 = vpop.f32.mrb[0].mxu0
  %v3522 = vpop.f32.mrb[0].mxu0
  %v3523 = vadd.f32 %v3426, %v3522
  %v3524 = vpop.f32.mrb[0].mxu0
  %3525 = vdwg.mxu0
  %v3526 = vld [vmem:[%s2] sm:$0x1]
  %v3528 = vlaneseq
  %v3529 = vshrl.u32 %v3528, 7
  %v3530 = vsub.s32 0, %v3529
  %v3531 = vrot.slane %v3526, %v3530
  %v3533 = vmul.f32 %v3464, %v3531
  %v3534 = vmul.f32 %v3467, %v3531
  %v3535 = vmul.f32 %v3472, %v3531
  %v3536 = vmul.f32 %v3475, %v3531
  %v3537 = vmul.f32 %v3480, %v3531
  %v3538 = vmul.f32 %v3483, %v3531
  %v3539 = vmul.f32 %v3488, %v3531
  %v3540 = vmul.f32 %v3491, %v3531
  %v3541 = vmul.f32 %v3496, %v3531
  %v3542 = vmul.f32 %v3499, %v3531
  %v3543 = vmul.f32 %v3504, %v3531
  %v3544 = vmul.f32 %v3507, %v3531
  %v3545 = vmul.f32 %v3512, %v3531
  %v3546 = vmul.f32 %v3515, %v3531
  %v3547 = vmul.f32 %v3520, %v3531
  %v3548 = vmul.f32 %v3523, %v3531
  %v3549 = vld [vmem:[%s3] sm:$0x1]
  %v3551 = vlaneseq
  %v3552 = vshrl.u32 %v3551, 7
  %v3553 = vsub.s32 0, %v3552
  %v3554 = vrot.slane %v3549, %v3553
  %v3556 = vadd.f32 %v3533, %v3554
  %v3557 = vadd.f32 %v3534, %v3554
  %v3558 = vadd.f32 %v3535, %v3554
  %v3559 = vadd.f32 %v3536, %v3554
  %v3560 = vadd.f32 %v3537, %v3554
  %v3561 = vadd.f32 %v3538, %v3554
  %v3562 = vadd.f32 %v3539, %v3554
  %v3563 = vadd.f32 %v3540, %v3554
  %v3564 = vadd.f32 %v3541, %v3554
  %v3565 = vadd.f32 %v3542, %v3554
  %v3566 = vadd.f32 %v3543, %v3554
  %v3567 = vadd.f32 %v3544, %v3554
  %v3568 = vadd.f32 %v3545, %v3554
  %v3569 = vadd.f32 %v3546, %v3554
  %v3570 = vadd.f32 %v3547, %v3554
  %v3571 = vadd.f32 %v3548, %v3554
  %v3572 = vmax.f32 %v3556, 0.0
  %v3573 = vmax.f32 %v3557, 0.0
  %v3574 = vmax.f32 %v3558, 0.0
  %v3575 = vmax.f32 %v3559, 0.0
  %v3576 = vmax.f32 %v3560, 0.0
  %v3577 = vmax.f32 %v3561, 0.0
  %v3578 = vmax.f32 %v3562, 0.0
  %v3579 = vmax.f32 %v3563, 0.0
  %v3580 = vmax.f32 %v3564, 0.0
  %v3581 = vmax.f32 %v3565, 0.0
  %v3582 = vmax.f32 %v3566, 0.0
  %v3583 = vmax.f32 %v3567, 0.0
  %v3584 = vmax.f32 %v3568, 0.0
  %v3585 = vmax.f32 %v3569, 0.0
  %v3586 = vmax.f32 %v3570, 0.0
  %v3587 = vmax.f32 %v3571, 0.0
  %v3588 = vpack.c.bf16 %v3573, %v3572
  %v3589 = vpack.c.bf16 %v3575, %v3574
  %v3590 = vpack.c.bf16 %v3577, %v3576
  %v3591 = vpack.c.bf16 %v3579, %v3578
  %v3592 = vpack.c.bf16 %v3581, %v3580
  %v3593 = vpack.c.bf16 %v3583, %v3582
  %v3594 = vpack.c.bf16 %v3585, %v3584
  %v3595 = vpack.c.bf16 %v3587, %v3586
  %v3604 = vunpack.c.l.b16 %v3588
  %v3605 = vunpack.c.h.b16 %v3588
  %v3606 = vunpack.c.l.b16 %v3589
  %v3607 = vunpack.c.h.b16 %v3589
  %v3608 = vunpack.c.l.b16 %v3590
  %v3609 = vunpack.c.h.b16 %v3590
  %v3610 = vunpack.c.l.b16 %v3591
  %v3611 = vunpack.c.h.b16 %v3591
  %v3612 = vunpack.c.l.b16 %v3592
  %v3613 = vunpack.c.h.b16 %v3592
  %v3614 = vunpack.c.l.b16 %v3593
  %v3615 = vunpack.c.h.b16 %v3593
  %v3616 = vunpack.c.l.b16 %v3594
  %v3617 = vunpack.c.h.b16 %v3594
  %v3618 = vunpack.c.l.b16 %v3595
  %v3619 = vunpack.c.h.b16 %v3595
  %v3620 = vpack.c.b16 %v3604, %v3604
  %v3621 = vpack.c.b16 %v3605, %v3605
  %v3622 = vpack.c.b16 %v3606, %v3606
  %v3623 = vpack.c.b16 %v3607, %v3607
  %v3624 = vpack.c.b16 %v3608, %v3608
  %v3625 = vpack.c.b16 %v3609, %v3609
  %v3626 = vpack.c.b16 %v3610, %v3610
  %v3627 = vpack.c.b16 %v3611, %v3611
  %v3628 = vpack.c.b16 %v3612, %v3612
  %v3629 = vpack.c.b16 %v3613, %v3613
  %v3630 = vpack.c.b16 %v3614, %v3614
  %v3631 = vpack.c.b16 %v3615, %v3615
  %v3632 = vpack.c.b16 %v3616, %v3616
  %v3633 = vpack.c.b16 %v3617, %v3617
  %v3634 = vpack.c.b16 %v3618, %v3618
  %v3635 = vpack.c.b16 %v3619, %v3619
  %3652 = vst [vmem:[%s4] sm:$0xf] %v3620
  %3653 = vst [vmem:[%s4 + $0x4] sm:$0xf] %v3621
  %3654 = vst [vmem:[%s4 + $0x8] sm:$0xf] %v3622
  %3655 = vst [vmem:[%s4 + $0xc] sm:$0xf] %v3623
  %3656 = vst [vmem:[%s4 + $0x10] sm:$0xf] %v3624
  %3657 = vst [vmem:[%s4 + $0x14] sm:$0xf] %v3625
  %3658 = vst [vmem:[%s4 + $0x18] sm:$0xf] %v3626
  %3659 = vst [vmem:[%s4 + $0x1c] sm:$0xf] %v3627
  %3660 = vst [vmem:[%s4 + $0x20] sm:$0xf] %v3628
  %3661 = vst [vmem:[%s4 + $0x24] sm:$0xf] %v3629
  %3662 = vst [vmem:[%s4 + $0x28] sm:$0xf] %v3630
  %3663 = vst [vmem:[%s4 + $0x2c] sm:$0xf] %v3631
  %3664 = vst [vmem:[%s4 + $0x30] sm:$0xf] %v3632
  %3665 = vst [vmem:[%s4 + $0x34] sm:$0xf] %v3633
  %3666 = vst [vmem:[%s4 + $0x38] sm:$0xf] %v3634
  %3667 = vst [vmem:[%s4 + $0x3c] sm:$0xf] %v3635
  // Predicated region
  $region18: #{encoder_forward.8} parent=0 // pred_check
    _
  $region19: #{encoder_forward.8} parent=0 // pred_check_branch
    %3669 = sbr.rel (0) target = $region21
  $region20: #{encoder_forward.8} parent=0 // pred_region
    _
  $region21: #{encoder_forward.8} parent=0 // pred_fallthru
    _
  // Predicated region
  $region22: #{encoder_forward.8} parent=0 // pred_check
    _
  $region23: #{encoder_forward.8} parent=0 // pred_check_branch
    %3671 = sbr.rel (0) target = $region25
  $region24: #{encoder_forward.8} parent=0 // pred_region
    _
  $region25: #{encoder_forward.8} parent=0 // pred_fallthru
    _

</llo_original>
